<compile_context>
chip_gen: v5e
topology: v5e:2x2
jax: 0.10.0
libtpu: 0.0.40
codegen_flags: <defaults>
</compile_context>

<pallas_src>
import jax
import jax.numpy as jnp
import numpy as np
from jax.experimental import pallas as pl
from jax.experimental.pallas import tpu as pltpu

D = 300   # feature dim (fixed by the module)
H = 4     # config.num_heads (synthetic)
N = 8     # number of nodes (small synthetic graph)


def muti_graph_kernel(adj_g_ref, adj_g1_ref, xg_ref, xg1_ref,
                      w_gat_ref, alp_ref, arp_ref, b_gat_ref,
                      w_sage_ref, b_sage_ref, w_hw_ref, b_hw_ref,
                      out_ref):
    f32 = jnp.float32
    xg = xg_ref[...]            # (N, D)  g.ndata['embeding']  (GAT input, residual base)
    xg1 = xg1_ref[...]          # (N, D)  g1.ndata['embeding'] (SAGE input)
    adj_g = adj_g_ref[...]      # (N, N)  adj[dst, src] for g
    adj_g1 = adj_g1_ref[...]    # (N, N)  adj[dst, src] for g1
    n = xg.shape[0]

    # ------------- GAT: per-head projected features (lane-aligned) -------------
    # w_gat_ref is (H, D, D) bf16; upcast in-VMEM so math stays f32.
    fh_list = []
    for h in range(H):
        w_h = w_gat_ref[h].astype(f32)                               # (D, D)
        fh_list.append(jnp.dot(xg, w_h, preferred_element_type=f32))  # (N, D)

    # ------- attention logits via host-precomputed projections (2 MXU dots) -------
    # el = (xg @ W_h) @ attn_l[h] == xg @ (W_h @ attn_l[h]) = xg @ a_l_proj[:, h]
    el_all = jnp.dot(xg, alp_ref[...], preferred_element_type=f32)   # (N, H) source term
    er_all = jnp.dot(xg, arp_ref[...], preferred_element_type=f32)   # (N, H) dest term

    # Stack all heads' raw scores into one (H*N_dst, N_src) slab.
    e_rows = []
    for h in range(H):
        e_rows.append(er_all[:, h:h + 1] + el_all[:, h][None, :])    # (N_dst, N_src)
    e = jnp.concatenate(e_rows, axis=0)                              # (H*N, N)

    # LeakyReLU(0.2), hoisted edge mask, finite sentinel (no -inf -> no NaNs).
    adj_stack = jnp.concatenate([adj_g] * H, axis=0)                 # (H*N, N)
    edge_mask = adj_stack > 0.0
    e = jnp.where(e > 0, e, 0.2 * e)
    e = jnp.where(edge_mask, e, -1e30)

    # Edge softmax over sources, all heads in one batched pass.
    m = jnp.max(e, axis=1, keepdims=True)
    p = jnp.exp(e - m)
    s = jnp.sum(p, axis=1, keepdims=True)
    inv_s = pl.reciprocal(s, approx=False)        # exact; approx=True also valid
    a = jnp.where(edge_mask, p * inv_s, 0.0)      # zero-in-degree rows -> all-zero row

    # Per-head aggregation A_h @ F_h (+ per-head bias), stacked to (H*N, D).
    b_gat = b_gat_ref[...]                                           # (H, D)
    gat_list = []
    for h in range(H):
        a_h = a[h * n:(h + 1) * n, :]                                # sublane-aligned slice
        o_h = jnp.dot(a_h, fh_list[h], preferred_element_type=f32)   # (N, D)
        gat_list.append(o_h + b_gat[h:h + 1, :])
    gat = jnp.concatenate(gat_list, axis=0)                          # (H*N, D)

    # ----------------- SAGEConv(300 -> 300, aggregator='gcn') on g1 -----------------
    deg = jnp.sum(adj_g1, axis=1, keepdims=True)                     # in-degree (N, 1)
    agg = jnp.dot(adj_g1, xg1, preferred_element_type=f32)
    h_neigh = (agg + xg1) * pl.reciprocal(deg + 1.0, approx=False)
    sage = jnp.dot(h_neigh, w_sage_ref[...].astype(f32),
                   preferred_element_type=f32) + b_sage_ref[...]     # (N, D)

    # --------- head weighting: ONE fused matmul + sigmoid over all H+1 heads ---------
    t_all = jnp.concatenate([gat, sage], axis=0)                     # ((H+1)*N, D)
    b_hw = b_hw_ref[0, 0]                                            # scalar from SMEM
    logits = jnp.dot(t_all, w_hw_ref[...], preferred_element_type=f32) + b_hw
    t_w = t_all * jax.nn.sigmoid(logits)                             # ((H+1)*N, D)

    acc = t_w[0:n, :]
    for k in range(1, H + 1):                                        # sum over the H+1 heads
        acc = acc + t_w[k * n:(k + 1) * n, :]

    out_ref[...] = xg + acc       # embeding = base + end


def muti_graph(adj_g, adj_g1, xg, xg1, params):
    """Host-side prep (weight layout / bf16 cast / attention projections) + kernel call."""
    w_gat = params["w_gat"]                                            # (D, H*D)
    w_gat_hdd = jnp.transpose(w_gat.reshape(D, H, D), (1, 0, 2))       # (H, D_in, D_out)
    w_gat_bf16 = w_gat_hdd.astype(jnp.bfloat16)                        # halves weight DMA
    w_gat_rnd = w_gat_bf16.astype(jnp.float32)                         # values the kernel sees
    # a_l_proj[:, h] = W_h @ attn_l[h]  =>  el = xg @ a_l_proj  (same for attn_r)
    a_l_proj = jnp.einsum("hde,he->dh", w_gat_rnd, params["attn_l"])   # (D, H)
    a_r_proj = jnp.einsum("hde,he->dh", w_gat_rnd, params["attn_r"])   # (D, H)
    b_gat_hd = params["b_gat"].reshape(H, D)
    w_sage_bf16 = params["w_sage"].astype(jnp.bfloat16)

    inputs = (adj_g, adj_g1, xg, xg1,
              w_gat_bf16, a_l_proj, a_r_proj, b_gat_hd,
              w_sage_bf16, params["b_sage"], params["w_hw"], params["b_hw"])
    vmem = pl.BlockSpec(memory_space=pltpu.MemorySpace.VMEM)
    smem = pl.BlockSpec(memory_space=pltpu.MemorySpace.SMEM)
    # Grid-less single invocation: at N=8 everything (weights included, ~1 MB
    # in bf16) is VMEM-resident; a row-tiled grid only pays off for large N.
    return pl.pallas_call(
        muti_graph_kernel,
        out_shape=jax.ShapeDtypeStruct(xg.shape, jnp.float32),
        in_specs=[vmem] * 11 + [smem],     # b_hw scalar lives in SMEM
        out_specs=vmem,
    )(*inputs)


def muti_graph_ref(adj_g, adj_g1, xg, xg1, p):
    """Pure-JAX reference of the same math (weights bf16-rounded like the kernel)."""
    w_gat = p["w_gat"].astype(jnp.bfloat16).astype(jnp.float32)
    w_sage = p["w_sage"].astype(jnp.bfloat16).astype(jnp.float32)
    mask = adj_g > 0.0
    heads = []
    for h in range(H):
        fh = xg @ w_gat[:, h * D:(h + 1) * D]
        el = fh @ p["attn_l"][h]                       # source term
        er = fh @ p["attn_r"][h]                       # destination term
        e = er[:, None] + el[None, :]
        e = jnp.where(e > 0, e, 0.2 * e)
        e = jnp.where(mask, e, -1e30)
        pr = jnp.exp(e - e.max(axis=1, keepdims=True))
        a = jnp.where(mask, pr / pr.sum(axis=1, keepdims=True), 0.0)
        heads.append(a @ fh + p["b_gat"][:, h * D:(h + 1) * D])
    deg = jnp.sum(adj_g1, axis=1, keepdims=True)
    h_neigh = (adj_g1 @ xg1 + xg1) / (deg + 1.0)
    heads.append(h_neigh @ w_sage + p["b_sage"])
    acc = jnp.zeros_like(xg)
    for t in heads:
        w = jax.nn.sigmoid(t @ p["w_hw"] + p["b_hw"])
        acc = acc + t * w
    return xg + acc


if __name__ == "__main__":
    key = jax.random.PRNGKey(0)
    keys = jax.random.split(key, 12)

    # Random graphs with self-loops (every node has >= 1 in-edge).
    eye = jnp.eye(N, dtype=jnp.float32)
    adj_g = (jax.random.bernoulli(keys[0], 0.4, (N, N)).astype(jnp.float32) + eye > 0
             ).astype(jnp.float32)
    adj_g1 = (jax.random.bernoulli(keys[1], 0.4, (N, N)).astype(jnp.float32) + eye > 0
              ).astype(jnp.float32)

    # Node features ('embeding') of both graphs.
    xg = jax.random.normal(keys[2], (N, D), jnp.float32)
    xg1 = jax.random.normal(keys[3], (N, D), jnp.float32)

    # Deterministic synthetic parameters (shapes match the torch module).
    params = {
        # GATConv: fc weight (D, H*D), attn_l/attn_r (H, D), bias (1, H*D)
        "w_gat": 0.05 * jax.random.normal(keys[4], (D, H * D), jnp.float32),
        "attn_l": 0.05 * jax.random.normal(keys[5], (H, D), jnp.float32),
        "attn_r": 0.05 * jax.random.normal(keys[6], (H, D), jnp.float32),
        "b_gat": 0.01 * jax.random.normal(keys[7], (1, H * D), jnp.float32),
        # SAGEConv gcn: fc_neigh weight (D, D) (arranged for x @ W), bias (1, D)
        "w_sage": 0.05 * jax.random.normal(keys[8], (D, D), jnp.float32),
        "b_sage": 0.01 * jax.random.normal(keys[9], (1, D), jnp.float32),
        # head_weighting Linear(300, 1): weight (D, 1), bias (1, 1)
        "w_hw": 0.05 * jax.random.normal(keys[10], (D, 1), jnp.float32),
        "b_hw": 0.01 * jax.random.normal(keys[11], (1, 1), jnp.float32),
    }
    # TODO(synk): feat_drop / attn_drop / sage_drop are eval-mode identities;
    # no stochastic dropout masks are applied.

    out = muti_graph(adj_g, adj_g1, xg, xg1, params)
    out = jax.block_until_ready(out)

    ref = muti_graph_ref(adj_g, adj_g1, xg, xg1, params)
    np.testing.assert_allclose(np.asarray(out), np.asarray(ref),
                               rtol=1e-3, atol=1e-3)
    print("KERNEL_OK")
</pallas_src>

<mosaic_0001>
module attributes {stable_mosaic.version = 11 : i64} {
  func.func @muti_graph_kernel(%arg0: memref<8x8xf32, #tpu.memory_space<vmem>>, %arg1: memref<8x8xf32, #tpu.memory_space<vmem>>, %arg2: memref<8x300xf32, #tpu.memory_space<vmem>>, %arg3: memref<8x300xf32, #tpu.memory_space<vmem>>, %arg4: memref<4x300x300xbf16, #tpu.memory_space<vmem>>, %arg5: memref<300x4xf32, #tpu.memory_space<vmem>>, %arg6: memref<300x4xf32, #tpu.memory_space<vmem>>, %arg7: memref<4x300xf32, #tpu.memory_space<vmem>>, %arg8: memref<300x300xbf16, #tpu.memory_space<vmem>>, %arg9: memref<1x300xf32, #tpu.memory_space<vmem>>, %arg10: memref<300x1xf32, #tpu.memory_space<vmem>>, %arg11: memref<1x1xf32, #tpu.memory_space<smem>>, %arg12: memref<8x300xf32, #tpu.memory_space<vmem>>) attributes {dimension_semantics = [], scalar_prefetch = 0 : i64, scratch_operands = 0 : i64, tpu.core_type = #tpu.core_type<tc>} {
    %c0 = arith.constant 0 : index
    %c0_0 = arith.constant 0 : index
    %0 = vector.load %arg2[%c0, %c0_0] : memref<8x300xf32, #tpu.memory_space<vmem>>, vector<8x300xf32>
    %c0_1 = arith.constant 0 : index
    %c0_2 = arith.constant 0 : index
    %1 = vector.load %arg3[%c0_1, %c0_2] : memref<8x300xf32, #tpu.memory_space<vmem>>, vector<8x300xf32>
    %c0_3 = arith.constant 0 : index
    %c0_4 = arith.constant 0 : index
    %2 = vector.load %arg0[%c0_3, %c0_4] : memref<8x8xf32, #tpu.memory_space<vmem>>, vector<8x8xf32>
    %c0_5 = arith.constant 0 : index
    %c0_6 = arith.constant 0 : index
    %3 = vector.load %arg1[%c0_5, %c0_6] : memref<8x8xf32, #tpu.memory_space<vmem>>, vector<8x8xf32>
    %c0_7 = arith.constant 0 : index
    %c0_8 = arith.constant 0 : index
    %c0_9 = arith.constant 0 : index
    %4 = vector.load %arg4[%c0_7, %c0_8, %c0_9] : memref<4x300x300xbf16, #tpu.memory_space<vmem>>, vector<1x300x300xbf16>
    %5 = vector.shape_cast %4 : vector<1x300x300xbf16> to vector<300x300xbf16>
    %6 = arith.extf %5 : vector<300x300xbf16> to vector<300x300xf32>
    %cst = arith.constant dense<0.000000e+00> : vector<8x300xf32>
    %7 = tpu.matmul %0, %6, %cst {dimension_numbers = #tpu.dot_dimension_numbers<[1], [0], [0], [1], [0, 0, 1, 1], [], []>} : vector<8x300xf32>, vector<300x300xf32>, vector<8x300xf32> -> vector<8x300xf32>
    %c1 = arith.constant 1 : index
    %c0_10 = arith.constant 0 : index
    %c0_11 = arith.constant 0 : index
    %8 = vector.load %arg4[%c1, %c0_10, %c0_11] : memref<4x300x300xbf16, #tpu.memory_space<vmem>>, vector<1x300x300xbf16>
    %9 = vector.shape_cast %8 : vector<1x300x300xbf16> to vector<300x300xbf16>
    %10 = arith.extf %9 : vector<300x300xbf16> to vector<300x300xf32>
    %cst_12 = arith.constant dense<0.000000e+00> : vector<8x300xf32>
    %11 = tpu.matmul %0, %10, %cst_12 {dimension_numbers = #tpu.dot_dimension_numbers<[1], [0], [0], [1], [0, 0, 1, 1], [], []>} : vector<8x300xf32>, vector<300x300xf32>, vector<8x300xf32> -> vector<8x300xf32>
    %c2 = arith.constant 2 : index
    %c0_13 = arith.constant 0 : index
    %c0_14 = arith.constant 0 : index
    %12 = vector.load %arg4[%c2, %c0_13, %c0_14] : memref<4x300x300xbf16, #tpu.memory_space<vmem>>, vector<1x300x300xbf16>
    %13 = vector.shape_cast %12 : vector<1x300x300xbf16> to vector<300x300xbf16>
    %14 = arith.extf %13 : vector<300x300xbf16> to vector<300x300xf32>
    %cst_15 = arith.constant dense<0.000000e+00> : vector<8x300xf32>
    %15 = tpu.matmul %0, %14, %cst_15 {dimension_numbers = #tpu.dot_dimension_numbers<[1], [0], [0], [1], [0, 0, 1, 1], [], []>} : vector<8x300xf32>, vector<300x300xf32>, vector<8x300xf32> -> vector<8x300xf32>
    %c3 = arith.constant 3 : index
    %c0_16 = arith.constant 0 : index
    %c0_17 = arith.constant 0 : index
    %16 = vector.load %arg4[%c3, %c0_16, %c0_17] : memref<4x300x300xbf16, #tpu.memory_space<vmem>>, vector<1x300x300xbf16>
    %17 = vector.shape_cast %16 : vector<1x300x300xbf16> to vector<300x300xbf16>
    %18 = arith.extf %17 : vector<300x300xbf16> to vector<300x300xf32>
    %cst_18 = arith.constant dense<0.000000e+00> : vector<8x300xf32>
    %19 = tpu.matmul %0, %18, %cst_18 {dimension_numbers = #tpu.dot_dimension_numbers<[1], [0], [0], [1], [0, 0, 1, 1], [], []>} : vector<8x300xf32>, vector<300x300xf32>, vector<8x300xf32> -> vector<8x300xf32>
    %c0_19 = arith.constant 0 : index
    %c0_20 = arith.constant 0 : index
    %20 = vector.load %arg5[%c0_19, %c0_20] : memref<300x4xf32, #tpu.memory_space<vmem>>, vector<300x4xf32>
    %cst_21 = arith.constant dense<0.000000e+00> : vector<8x4xf32>
    %21 = tpu.matmul %0, %20, %cst_21 {dimension_numbers = #tpu.dot_dimension_numbers<[1], [0], [0], [1], [0, 0, 1, 1], [], []>} : vector<8x300xf32>, vector<300x4xf32>, vector<8x4xf32> -> vector<8x4xf32>
    %c0_22 = arith.constant 0 : index
    %c0_23 = arith.constant 0 : index
    %22 = vector.load %arg6[%c0_22, %c0_23] : memref<300x4xf32, #tpu.memory_space<vmem>>, vector<300x4xf32>
    %cst_24 = arith.constant dense<0.000000e+00> : vector<8x4xf32>
    %23 = tpu.matmul %0, %22, %cst_24 {dimension_numbers = #tpu.dot_dimension_numbers<[1], [0], [0], [1], [0, 0, 1, 1], [], []>} : vector<8x300xf32>, vector<300x4xf32>, vector<8x4xf32> -> vector<8x4xf32>
    %24 = vector.extract_strided_slice %23 {offsets = [0, 0], sizes = [8, 1], strides = [1, 1]} : vector<8x4xf32> to vector<8x1xf32>
    %25 = vector.extract_strided_slice %21 {offsets = [0, 0], sizes = [8, 1], strides = [1, 1]} : vector<8x4xf32> to vector<8x1xf32>
    %26 = vector.shape_cast %25 : vector<8x1xf32> to vector<8xf32>
    %27 = vector.shape_cast %26 : vector<8xf32> to vector<1x8xf32>
    %28 = vector.broadcast %24 : vector<8x1xf32> to vector<8x8xf32>
    %29 = vector.broadcast %27 : vector<1x8xf32> to vector<8x8xf32>
    %30 = arith.addf %28, %29 : vector<8x8xf32>
    %31 = vector.extract_strided_slice %23 {offsets = [0, 1], sizes = [8, 1], strides = [1, 1]} : vector<8x4xf32> to vector<8x1xf32>
    %32 = vector.extract_strided_slice %21 {offsets = [0, 1], sizes = [8, 1], strides = [1, 1]} : vector<8x4xf32> to vector<8x1xf32>
    %33 = vector.shape_cast %32 : vector<8x1xf32> to vector<8xf32>
    %34 = vector.shape_cast %33 : vector<8xf32> to vector<1x8xf32>
    %35 = vector.broadcast %31 : vector<8x1xf32> to vector<8x8xf32>
    %36 = vector.broadcast %34 : vector<1x8xf32> to vector<8x8xf32>
    %37 = arith.addf %35, %36 : vector<8x8xf32>
    %38 = vector.extract_strided_slice %23 {offsets = [0, 2], sizes = [8, 1], strides = [1, 1]} : vector<8x4xf32> to vector<8x1xf32>
    %39 = vector.extract_strided_slice %21 {offsets = [0, 2], sizes = [8, 1], strides = [1, 1]} : vector<8x4xf32> to vector<8x1xf32>
    %40 = vector.shape_cast %39 : vector<8x1xf32> to vector<8xf32>
    %41 = vector.shape_cast %40 : vector<8xf32> to vector<1x8xf32>
    %42 = vector.broadcast %38 : vector<8x1xf32> to vector<8x8xf32>
    %43 = vector.broadcast %41 : vector<1x8xf32> to vector<8x8xf32>
    %44 = arith.addf %42, %43 : vector<8x8xf32>
    %45 = vector.extract_strided_slice %23 {offsets = [0, 3], sizes = [8, 1], strides = [1, 1]} : vector<8x4xf32> to vector<8x1xf32>
    %46 = vector.extract_strided_slice %21 {offsets = [0, 3], sizes = [8, 1], strides = [1, 1]} : vector<8x4xf32> to vector<8x1xf32>
    %47 = vector.shape_cast %46 : vector<8x1xf32> to vector<8xf32>
    %48 = vector.shape_cast %47 : vector<8xf32> to vector<1x8xf32>
    %49 = vector.broadcast %45 : vector<8x1xf32> to vector<8x8xf32>
    %50 = vector.broadcast %48 : vector<1x8xf32> to vector<8x8xf32>
    %51 = arith.addf %49, %50 : vector<8x8xf32>
    %52 = tpu.concatenate %30, %37, %44, %51 in 0 : vector<8x8xf32>, vector<8x8xf32>, vector<8x8xf32>, vector<8x8xf32> -> vector<32x8xf32>
    %53 = tpu.concatenate %2, %2, %2, %2 in 0 : vector<8x8xf32>, vector<8x8xf32>, vector<8x8xf32>, vector<8x8xf32> -> vector<32x8xf32>
    %cst_25 = arith.constant 0.000000e+00 : f32
    %54 = vector.broadcast %cst_25 : f32 to vector<32x8xf32>
    %55 = arith.cmpf ogt, %53, %54 : vector<32x8xf32>
    %cst_26 = arith.constant 0.000000e+00 : f32
    %56 = vector.broadcast %cst_26 : f32 to vector<32x8xf32>
    %57 = arith.cmpf ogt, %52, %56 : vector<32x8xf32>
    %cst_27 = arith.constant 2.000000e-01 : f32
    %58 = vector.broadcast %cst_27 : f32 to vector<32x8xf32>
    %59 = arith.mulf %58, %52 : vector<32x8xf32>
    %60 = arith.select %57, %52, %59 : vector<32x8xi1>, vector<32x8xf32>
    %cst_28 = arith.constant -1.000000e+30 : f32
    %61 = vector.broadcast %cst_28 : f32 to vector<32x8xf32>
    %62 = arith.select %55, %60, %61 : vector<32x8xi1>, vector<32x8xf32>
    %cst_29 = arith.constant dense<0xFF800000> : vector<32xf32>
    %63 = vector.multi_reduction <maximumf>, %62, %cst_29 [1] : vector<32x8xf32> to vector<32xf32>
    %64 = vector.shape_cast %63 : vector<32xf32> to vector<32x1xf32>
    %65 = vector.broadcast %64 : vector<32x1xf32> to vector<32x8xf32>
    %66 = arith.subf %62, %65 : vector<32x8xf32>
    %67 = math.exp %66 : vector<32x8xf32>
    %cst_30 = arith.constant dense<0.000000e+00> : vector<32xf32>
    %68 = vector.multi_reduction <add>, %67, %cst_30 [1] : vector<32x8xf32> to vector<32xf32>
    %69 = vector.shape_cast %68 : vector<32xf32> to vector<32x1xf32>
    %70 = tpu.reciprocal %69 : vector<32x1xf32> -> vector<32x1xf32>
    %71 = vector.broadcast %70 : vector<32x1xf32> to vector<32x8xf32>
    %72 = arith.mulf %67, %71 : vector<32x8xf32>
    %cst_31 = arith.constant 0.000000e+00 : f32
    %73 = vector.broadcast %cst_31 : f32 to vector<32x8xf32>
    %74 = arith.select %55, %72, %73 : vector<32x8xi1>, vector<32x8xf32>
    %c0_32 = arith.constant 0 : index
    %c0_33 = arith.constant 0 : index
    %75 = vector.load %arg7[%c0_32, %c0_33] : memref<4x300xf32, #tpu.memory_space<vmem>>, vector<4x300xf32>
    %76 = vector.extract_strided_slice %74 {offsets = [0, 0], sizes = [8, 8], strides = [1, 1]} : vector<32x8xf32> to vector<8x8xf32>
    %cst_34 = arith.constant dense<0.000000e+00> : vector<8x300xf32>
    %77 = tpu.matmul %76, %7, %cst_34 {dimension_numbers = #tpu.dot_dimension_numbers<[1], [0], [0], [1], [0, 0, 1, 1], [], []>} : vector<8x8xf32>, vector<8x300xf32>, vector<8x300xf32> -> vector<8x300xf32>
    %78 = vector.extract_strided_slice %75 {offsets = [0, 0], sizes = [1, 300], strides = [1, 1]} : vector<4x300xf32> to vector<1x300xf32>
    %79 = vector.broadcast %78 : vector<1x300xf32> to vector<8x300xf32>
    %80 = arith.addf %77, %79 : vector<8x300xf32>
    %81 = vector.extract_strided_slice %74 {offsets = [8, 0], sizes = [8, 8], strides = [1, 1]} : vector<32x8xf32> to vector<8x8xf32>
    %cst_35 = arith.constant dense<0.000000e+00> : vector<8x300xf32>
    %82 = tpu.matmul %81, %11, %cst_35 {dimension_numbers = #tpu.dot_dimension_numbers<[1], [0], [0], [1], [0, 0, 1, 1], [], []>} : vector<8x8xf32>, vector<8x300xf32>, vector<8x300xf32> -> vector<8x300xf32>
    %83 = vector.extract_strided_slice %75 {offsets = [1, 0], sizes = [1, 300], strides = [1, 1]} : vector<4x300xf32> to vector<1x300xf32>
    %84 = vector.broadcast %83 : vector<1x300xf32> to vector<8x300xf32>
    %85 = arith.addf %82, %84 : vector<8x300xf32>
    %86 = vector.extract_strided_slice %74 {offsets = [16, 0], sizes = [8, 8], strides = [1, 1]} : vector<32x8xf32> to vector<8x8xf32>
    %cst_36 = arith.constant dense<0.000000e+00> : vector<8x300xf32>
    %87 = tpu.matmul %86, %15, %cst_36 {dimension_numbers = #tpu.dot_dimension_numbers<[1], [0], [0], [1], [0, 0, 1, 1], [], []>} : vector<8x8xf32>, vector<8x300xf32>, vector<8x300xf32> -> vector<8x300xf32>
    %88 = vector.extract_strided_slice %75 {offsets = [2, 0], sizes = [1, 300], strides = [1, 1]} : vector<4x300xf32> to vector<1x300xf32>
    %89 = vector.broadcast %88 : vector<1x300xf32> to vector<8x300xf32>
    %90 = arith.addf %87, %89 : vector<8x300xf32>
    %91 = vector.extract_strided_slice %74 {offsets = [24, 0], sizes = [8, 8], strides = [1, 1]} : vector<32x8xf32> to vector<8x8xf32>
    %cst_37 = arith.constant dense<0.000000e+00> : vector<8x300xf32>
    %92 = tpu.matmul %91, %19, %cst_37 {dimension_numbers = #tpu.dot_dimension_numbers<[1], [0], [0], [1], [0, 0, 1, 1], [], []>} : vector<8x8xf32>, vector<8x300xf32>, vector<8x300xf32> -> vector<8x300xf32>
    %93 = vector.extract_strided_slice %75 {offsets = [3, 0], sizes = [1, 300], strides = [1, 1]} : vector<4x300xf32> to vector<1x300xf32>
    %94 = vector.broadcast %93 : vector<1x300xf32> to vector<8x300xf32>
    %95 = arith.addf %92, %94 : vector<8x300xf32>
    %96 = tpu.concatenate %80, %85, %90, %95 in 0 : vector<8x300xf32>, vector<8x300xf32>, vector<8x300xf32>, vector<8x300xf32> -> vector<32x300xf32>
    %cst_38 = arith.constant dense<0.000000e+00> : vector<8xf32>
    %97 = vector.multi_reduction <add>, %3, %cst_38 [1] : vector<8x8xf32> to vector<8xf32>
    %98 = vector.shape_cast %97 : vector<8xf32> to vector<8x1xf32>
    %cst_39 = arith.constant dense<0.000000e+00> : vector<8x300xf32>
    %99 = tpu.matmul %3, %1, %cst_39 {dimension_numbers = #tpu.dot_dimension_numbers<[1], [0], [0], [1], [0, 0, 1, 1], [], []>} : vector<8x8xf32>, vector<8x300xf32>, vector<8x300xf32> -> vector<8x300xf32>
    %100 = arith.addf %99, %1 : vector<8x300xf32>
    %cst_40 = arith.constant 1.000000e+00 : f32
    %101 = vector.broadcast %cst_40 : f32 to vector<8x1xf32>
    %102 = arith.addf %98, %101 : vector<8x1xf32>
    %103 = tpu.reciprocal %102 : vector<8x1xf32> -> vector<8x1xf32>
    %104 = vector.broadcast %103 : vector<8x1xf32> to vector<8x300xf32>
    %105 = arith.mulf %100, %104 : vector<8x300xf32>
    %c0_41 = arith.constant 0 : index
    %c0_42 = arith.constant 0 : index
    %106 = vector.load %arg8[%c0_41, %c0_42] : memref<300x300xbf16, #tpu.memory_space<vmem>>, vector<300x300xbf16>
    %107 = arith.extf %106 : vector<300x300xbf16> to vector<300x300xf32>
    %cst_43 = arith.constant dense<0.000000e+00> : vector<8x300xf32>
    %108 = tpu.matmul %105, %107, %cst_43 {dimension_numbers = #tpu.dot_dimension_numbers<[1], [0], [0], [1], [0, 0, 1, 1], [], []>} : vector<8x300xf32>, vector<300x300xf32>, vector<8x300xf32> -> vector<8x300xf32>
    %c0_44 = arith.constant 0 : index
    %c0_45 = arith.constant 0 : index
    %109 = vector.load %arg9[%c0_44, %c0_45] : memref<1x300xf32, #tpu.memory_space<vmem>>, vector<1x300xf32>
    %110 = vector.broadcast %109 : vector<1x300xf32> to vector<8x300xf32>
    %111 = arith.addf %108, %110 : vector<8x300xf32>
    %112 = tpu.concatenate %96, %111 in 0 : vector<32x300xf32>, vector<8x300xf32> -> vector<40x300xf32>
    %c0_46 = arith.constant 0 : index
    %c0_47 = arith.constant 0 : index
    %113 = memref.load %arg11[%c0_46, %c0_47] : memref<1x1xf32, #tpu.memory_space<smem>>
    %c0_48 = arith.constant 0 : index
    %c0_49 = arith.constant 0 : index
    %114 = vector.load %arg10[%c0_48, %c0_49] : memref<300x1xf32, #tpu.memory_space<vmem>>, vector<300x1xf32>
    %cst_50 = arith.constant dense<0.000000e+00> : vector<40x1xf32>
    %115 = tpu.matmul %112, %114, %cst_50 {dimension_numbers = #tpu.dot_dimension_numbers<[1], [0], [0], [1], [0, 0, 1, 1], [], []>} : vector<40x300xf32>, vector<300x1xf32>, vector<40x1xf32> -> vector<40x1xf32>
    %116 = vector.broadcast %113 : f32 to vector<40x1xf32>
    %117 = arith.addf %115, %116 : vector<40x1xf32>
    %118 = arith.negf %117 : vector<40x1xf32>
    %119 = math.exp %118 : vector<40x1xf32>
    %cst_51 = arith.constant 1.000000e+00 : f32
    %120 = vector.broadcast %cst_51 : f32 to vector<40x1xf32>
    %121 = arith.addf %120, %119 : vector<40x1xf32>
    %122 = arith.divf %120, %121 : vector<40x1xf32>
    %123 = vector.broadcast %122 : vector<40x1xf32> to vector<40x300xf32>
    %124 = arith.mulf %112, %123 : vector<40x300xf32>
    %125 = vector.extract_strided_slice %124 {offsets = [0, 0], sizes = [8, 300], strides = [1, 1]} : vector<40x300xf32> to vector<8x300xf32>
    %126 = vector.extract_strided_slice %124 {offsets = [8, 0], sizes = [8, 300], strides = [1, 1]} : vector<40x300xf32> to vector<8x300xf32>
    %127 = arith.addf %125, %126 : vector<8x300xf32>
    %128 = vector.extract_strided_slice %124 {offsets = [16, 0], sizes = [8, 300], strides = [1, 1]} : vector<40x300xf32> to vector<8x300xf32>
    %129 = arith.addf %127, %128 : vector<8x300xf32>
    %130 = vector.extract_strided_slice %124 {offsets = [24, 0], sizes = [8, 300], strides = [1, 1]} : vector<40x300xf32> to vector<8x300xf32>
    %131 = arith.addf %129, %130 : vector<8x300xf32>
    %132 = vector.extract_strided_slice %124 {offsets = [32, 0], sizes = [8, 300], strides = [1, 1]} : vector<40x300xf32> to vector<8x300xf32>
    %133 = arith.addf %131, %132 : vector<8x300xf32>
    %134 = arith.addf %0, %133 : vector<8x300xf32>
    %c0_52 = arith.constant 0 : index
    %c0_53 = arith.constant 0 : index
    %135 = vector.load %arg12[%c0_52, %c0_53] : memref<8x300xf32, #tpu.memory_space<vmem>>, vector<8x300xf32>
    tpu.vector_store %arg12[%c0_52, %c0_53], %134 {strides = array<i32>} : memref<8x300xf32, #tpu.memory_space<vmem>>, vector<8x300xf32>,
    return
  }
}

</mosaic_0001>

<llo_original>
// kernel: tpu_custom_call.1
$region0: #{tpu_custom_call.1}
  #allocation0 [shape = 'u32[]', space=smem, size = 0x4, offset = 0x4, fixed_abs, tag = 'smem constant byte address 0x4 - core index']
  #allocation1 [shape = 'u32[72,128]{1,0:T(1,128)}', space=vmem, size = 0x9000, scoped, tag = 'internal scratch']
  #allocation2 [shape = 'f32[1,1]{1,0:T(1,128)S(6)}', space=smem, size = 0x200, scoped, tag = 'scoped memory for tpu_custom_call.1']
  %s0 = inlined_call_operand.vmem [shape: f32[8,8], index: 0, kind: input, shape index: {}]
  %s1 = inlined_call_operand.vmem [shape: f32[8,8], index: 1, kind: input, shape index: {}]
  %s2 = inlined_call_operand.vmem [shape: f32[8,300], index: 2, kind: input, shape index: {}]
  %s3 = inlined_call_operand.vmem [shape: f32[8,300], index: 3, kind: input, shape index: {}]
  %s4 = inlined_call_operand.vmem [shape: bf16[4,300,300], index: 4, kind: input, shape index: {}]
  %s5 = inlined_call_operand.vmem [shape: f32[300,4], index: 5, kind: input, shape index: {}]
  %s6 = inlined_call_operand.vmem [shape: f32[300,4], index: 6, kind: input, shape index: {}]
  %s7 = inlined_call_operand.vmem [shape: f32[4,300], index: 7, kind: input, shape index: {}]
  %s8 = inlined_call_operand.vmem [shape: bf16[300,300], index: 8, kind: input, shape index: {}]
  %s9 = inlined_call_operand.vmem [shape: f32[1,300], index: 9, kind: input, shape index: {}]
  %s10 = inlined_call_operand.vmem [shape: f32[300,1], index: 10, kind: input, shape index: {}]
  %s11 = inlined_call_operand.<no memory space> [shape: f32[1,1], index: 11, kind: input, shape index: {}]
  %s12 = inlined_call_operand.hbm [shape: f32[8,300], index: 12, kind: output, shape index: {}]
  %s13 = sld [smem:[#allocation0]]
  $region58: #{tpu_custom_call.1} parent=0
    _
  %s15 = ssub.s32 1, %s13
  %s16 = scalar_select 0, %s15, %s13
  %17 = sst [smem:[#allocation2]] %s11
  $region1: #{tpu_custom_call.1} parent=0
    #allocation3 [shape = 'u8[12288]{0}', space=vmem, size = 0x3000, scoped, tag = 'output window, operand 0, single buffered']
    #allocation4 [shape = 's32[1]{0}', space=sflag, size = 0x4, scoped, tag = 'scoped memory for tpu_custom_call.1']
    %18 = vsyncpa [#allocation4], 0
    // Predicated region
    $region2: #{tpu_custom_call.1} parent=1 // pred_check
      _
    $region3: #{tpu_custom_call.1} parent=1 // pred_check_branch
      %20 = sbr.rel (0) target = $region5
    $region4: #{tpu_custom_call.1} parent=1 // pred_region
      _
    $region5: #{tpu_custom_call.1} parent=1 // pred_fallthru
      _
    // Predicated region
    $region6: #{tpu_custom_call.1} parent=1 // pred_check
      _
    $region7: #{tpu_custom_call.1} parent=1 // pred_check_branch
      %22 = sbr.rel (0) target = $region9
    $region8: #{tpu_custom_call.1} parent=1 // pred_region
      _
    $region9: #{tpu_custom_call.1} parent=1 // pred_fallthru
      _
    // Predicated region
    $region10: #{tpu_custom_call.1} parent=1 // pred_check
      _
    $region11: #{tpu_custom_call.1} parent=1 // pred_check_branch
      %24 = sbr.rel (0) target = $region13
    $region12: #{tpu_custom_call.1} parent=1 // pred_region
      _
    $region13: #{tpu_custom_call.1} parent=1 // pred_fallthru
      _
    // Predicated region
    $region14: #{tpu_custom_call.1} parent=1 // pred_check
      _
    $region15: #{tpu_custom_call.1} parent=1 // pred_check_branch
      %26 = sbr.rel (0) target = $region17
    $region16: #{tpu_custom_call.1} parent=1 // pred_region
      _
    $region17: #{tpu_custom_call.1} parent=1 // pred_fallthru
      _
    // Predicated region
    $region18: #{tpu_custom_call.1} parent=1 // pred_check
      _
    $region19: #{tpu_custom_call.1} parent=1 // pred_check_branch
      %28 = sbr.rel (0) target = $region21
    $region20: #{tpu_custom_call.1} parent=1 // pred_region
      _
    $region21: #{tpu_custom_call.1} parent=1 // pred_fallthru
      _
    // Predicated region
    $region22: #{tpu_custom_call.1} parent=1 // pred_check
      _
    $region23: #{tpu_custom_call.1} parent=1 // pred_check_branch
      %30 = sbr.rel (0) target = $region25
    $region24: #{tpu_custom_call.1} parent=1 // pred_region
      _
    $region25: #{tpu_custom_call.1} parent=1 // pred_fallthru
      _
    // Predicated region
    $region26: #{tpu_custom_call.1} parent=1 // pred_check
      _
    $region27: #{tpu_custom_call.1} parent=1 // pred_check_branch
      %32 = sbr.rel (0) target = $region29
    $region28: #{tpu_custom_call.1} parent=1 // pred_region
      _
    $region29: #{tpu_custom_call.1} parent=1 // pred_fallthru
      _
    // Predicated region
    $region30: #{tpu_custom_call.1} parent=1 // pred_check
      _
    $region31: #{tpu_custom_call.1} parent=1 // pred_check_branch
      %34 = sbr.rel (0) target = $region33
    $region32: #{tpu_custom_call.1} parent=1 // pred_region
      _
    $region33: #{tpu_custom_call.1} parent=1 // pred_fallthru
      _
    // Predicated region
    $region34: #{tpu_custom_call.1} parent=1 // pred_check
      _
    $region35: #{tpu_custom_call.1} parent=1 // pred_check_branch
      %36 = sbr.rel (0) target = $region37
    $region36: #{tpu_custom_call.1} parent=1 // pred_region
      _
    $region37: #{tpu_custom_call.1} parent=1 // pred_fallthru
      _
    // Predicated region
    $region38: #{tpu_custom_call.1} parent=1 // pred_check
      _
    $region39: #{tpu_custom_call.1} parent=1 // pred_check_branch
      %38 = sbr.rel (0) target = $region41
    $region40: #{tpu_custom_call.1} parent=1 // pred_region
      _
    $region41: #{tpu_custom_call.1} parent=1 // pred_fallthru
      _
    // Predicated region
    $region42: #{tpu_custom_call.1} parent=1 // pred_check
      _
    $region43: #{tpu_custom_call.1} parent=1 // pred_check_branch
      %40 = sbr.rel (0) target = $region45
    $region44: #{tpu_custom_call.1} parent=1 // pred_region
      _
    $region45: #{tpu_custom_call.1} parent=1 // pred_fallthru
      _
    // Predicated region
    $region46: #{tpu_custom_call.1} parent=1 // pred_check
      _
    $region47: #{tpu_custom_call.1} parent=1 // pred_check_branch
      %42 = sbr.rel (0) target = $region49
    $region48: #{tpu_custom_call.1} parent=1 // pred_region
      _
    $region49: #{tpu_custom_call.1} parent=1 // pred_fallthru
      _
    %v43 = vld [vmem:[%s2] sm:$0xff]
    %v44 = vld [vmem:[%s2 + $0x8] sm:$0xff]
    %v45 = vld [vmem:[%s2 + $0x10] sm:$0xff]
    %v46 = vld [vmem:[%s3] sm:$0xff]
    %v47 = vld [vmem:[%s3 + $0x8] sm:$0xff]
    %v48 = vld [vmem:[%s3 + $0x10] sm:$0xff]
    %v49 = vld [vmem:[%s0] sm:$0xff]
    %v50 = vld [vmem:[%s1] sm:$0xff]
    %v51 = vld [vmem:[%s4] sm:$0xff]
    %v52 = vld [vmem:[%s4 + $0x8] sm:$0xf]
    %v53 = vld [vmem:[%s4 + $0xc] sm:$0xff]
    %v54 = vld [vmem:[%s4 + $0x14] sm:$0xf]
    %v55 = vld [vmem:[%s4 + $0x18] sm:$0xff]
    %v56 = vld [vmem:[%s4 + $0x20] sm:$0xf]
    %v57 = vld [vmem:[%s4 + $0x24] sm:$0xff]
    %v58 = vld [vmem:[%s4 + $0x2c] sm:$0xf]
    %v59 = vld [vmem:[%s4 + $0x30] sm:$0xff]
    %v60 = vld [vmem:[%s4 + $0x38] sm:$0xf]
    %v61 = vld [vmem:[%s4 + $0x3c] sm:$0xff]
    %v62 = vld [vmem:[%s4 + $0x44] sm:$0xf]
    %v63 = vld [vmem:[%s4 + $0x48] sm:$0xff]
    %v64 = vld [vmem:[%s4 + $0x50] sm:$0xf]
    %v65 = vld [vmem:[%s4 + $0x54] sm:$0xff]
    %v66 = vld [vmem:[%s4 + $0x5c] sm:$0xf]
    %v67 = vld [vmem:[%s4 + $0x60] sm:$0xff]
    %v68 = vld [vmem:[%s4 + $0x68] sm:$0xf]
    %v69 = vld [vmem:[%s4 + $0x6c] sm:$0xff]
    %v70 = vld [vmem:[%s4 + $0x74] sm:$0xf]
    %v71 = vld [vmem:[%s4 + $0x78] sm:$0xff]
    %v72 = vld [vmem:[%s4 + $0x80] sm:$0xf]
    %v73 = vld [vmem:[%s4 + $0x84] sm:$0xff]
    %v74 = vld [vmem:[%s4 + $0x8c] sm:$0xf]
    %v75 = vld [vmem:[%s4 + $0x90] sm:$0xff]
    %v76 = vld [vmem:[%s4 + $0x98] sm:$0xf]
    %v77 = vld [vmem:[%s4 + $0x9c] sm:$0xff]
    %v78 = vld [vmem:[%s4 + $0xa4] sm:$0xf]
    %v79 = vld [vmem:[%s4 + $0xa8] sm:$0xff]
    %v80 = vld [vmem:[%s4 + $0xb0] sm:$0xf]
    %v81 = vld [vmem:[%s4 + $0xb4] sm:$0xff]
    %v82 = vld [vmem:[%s4 + $0xbc] sm:$0xf]
    %v83 = vld [vmem:[%s4 + $0xc0] sm:$0xff]
    %v84 = vld [vmem:[%s4 + $0xc8] sm:$0xf]
    %v85 = vld [vmem:[%s4 + $0xcc] sm:$0xff]
    %v86 = vld [vmem:[%s4 + $0xd4] sm:$0xf]
    %v87 = vld [vmem:[%s4 + $0xd8] sm:$0xff]
    %v88 = vld [vmem:[%s4 + $0xe0] sm:$0xf]
    %v89 = vld [vmem:[%s4 + $0xe4] sm:$0xff]
    %v90 = vld [vmem:[%s4 + $0xec] sm:$0xf]
    %v91 = vld [vmem:[%s4 + $0xf0] sm:$0xff]
    %v92 = vld [vmem:[%s4 + $0xf8] sm:$0xf]
    %v93 = vld [vmem:[%s4 + $0xfc] sm:$0xff]
    %v94 = vld [vmem:[%s4 + $0x104] sm:$0xf]
    %v95 = vld [vmem:[%s4 + $0x108] sm:$0xff]
    %v96 = vld [vmem:[%s4 + $0x110] sm:$0xf]
    %v97 = vld [vmem:[%s4 + $0x114] sm:$0xff]
    %v98 = vld [vmem:[%s4 + $0x11c] sm:$0xf]
    %v99 = vld [vmem:[%s4 + $0x120] sm:$0xff]
    %v100 = vld [vmem:[%s4 + $0x128] sm:$0xf]
    %v101 = vld [vmem:[%s4 + $0x12c] sm:$0xff]
    %v102 = vld [vmem:[%s4 + $0x134] sm:$0xf]
    %v103 = vld [vmem:[%s4 + $0x138] sm:$0xff]
    %v104 = vld [vmem:[%s4 + $0x140] sm:$0xf]
    %v105 = vld [vmem:[%s4 + $0x144] sm:$0xff]
    %v106 = vld [vmem:[%s4 + $0x14c] sm:$0xf]
    %v107 = vld [vmem:[%s4 + $0x150] sm:$0xff]
    %v108 = vld [vmem:[%s4 + $0x158] sm:$0xf]
    %v109 = vld [vmem:[%s4 + $0x15c] sm:$0xff]
    %v110 = vld [vmem:[%s4 + $0x164] sm:$0xf]
    %v111 = vld [vmem:[%s4 + $0x168] sm:$0xff]
    %v112 = vld [vmem:[%s4 + $0x170] sm:$0xf]
    %v113 = vld [vmem:[%s4 + $0x174] sm:$0xff]
    %v114 = vld [vmem:[%s4 + $0x17c] sm:$0xf]
    %v115 = vld [vmem:[%s4 + $0x180] sm:$0xff]
    %v116 = vld [vmem:[%s4 + $0x188] sm:$0xf]
    %v117 = vld [vmem:[%s4 + $0x18c] sm:$0xff]
    %v118 = vld [vmem:[%s4 + $0x194] sm:$0xf]
    %v119 = vld [vmem:[%s4 + $0x198] sm:$0xff]
    %v120 = vld [vmem:[%s4 + $0x1a0] sm:$0xf]
    %v121 = vld [vmem:[%s4 + $0x1a4] sm:$0xff]
    %v122 = vld [vmem:[%s4 + $0x1ac] sm:$0xf]
    %v123 = vld [vmem:[%s4 + $0x1b0] sm:$0xff]
    %v124 = vld [vmem:[%s4 + $0x1b8] sm:$0xf]
    %v125 = vld [vmem:[%s4 + $0x1bc] sm:$0x33]
    %v126 = vld [vmem:[%s4 + $0x1c4] sm:$0x3]
    %v127 = vunpack.c.l.bf16 %v51
    %v128 = vunpack.c.h.bf16 %v51
    %v129 = vunpack.c.l.bf16 %v52
    %v130 = vunpack.c.l.bf16 %v53
    %v131 = vunpack.c.h.bf16 %v53
    %v132 = vunpack.c.l.bf16 %v54
    %v133 = vunpack.c.l.bf16 %v55
    %v134 = vunpack.c.h.bf16 %v55
    %v135 = vunpack.c.l.bf16 %v56
    %v136 = vunpack.c.l.bf16 %v57
    %v137 = vunpack.c.h.bf16 %v57
    %v138 = vunpack.c.l.bf16 %v58
    %v139 = vunpack.c.l.bf16 %v59
    %v140 = vunpack.c.h.bf16 %v59
    %v141 = vunpack.c.l.bf16 %v60
    %v142 = vunpack.c.l.bf16 %v61
    %v143 = vunpack.c.h.bf16 %v61
    %v144 = vunpack.c.l.bf16 %v62
    %v145 = vunpack.c.l.bf16 %v63
    %v146 = vunpack.c.h.bf16 %v63
    %v147 = vunpack.c.l.bf16 %v64
    %v148 = vunpack.c.l.bf16 %v65
    %v149 = vunpack.c.h.bf16 %v65
    %v150 = vunpack.c.l.bf16 %v66
    %v151 = vunpack.c.l.bf16 %v67
    %v152 = vunpack.c.h.bf16 %v67
    %v153 = vunpack.c.l.bf16 %v68
    %v154 = vunpack.c.l.bf16 %v69
    %v155 = vunpack.c.h.bf16 %v69
    %v156 = vunpack.c.l.bf16 %v70
    %v157 = vunpack.c.l.bf16 %v71
    %v158 = vunpack.c.h.bf16 %v71
    %v159 = vunpack.c.l.bf16 %v72
    %v160 = vunpack.c.l.bf16 %v73
    %v161 = vunpack.c.h.bf16 %v73
    %v162 = vunpack.c.l.bf16 %v74
    %v163 = vunpack.c.l.bf16 %v75
    %v164 = vunpack.c.h.bf16 %v75
    %v165 = vunpack.c.l.bf16 %v76
    %v166 = vunpack.c.l.bf16 %v77
    %v167 = vunpack.c.h.bf16 %v77
    %v168 = vunpack.c.l.bf16 %v78
    %v169 = vunpack.c.l.bf16 %v79
    %v170 = vunpack.c.h.bf16 %v79
    %v171 = vunpack.c.l.bf16 %v80
    %v172 = vunpack.c.l.bf16 %v81
    %v173 = vunpack.c.h.bf16 %v81
    %v174 = vunpack.c.l.bf16 %v82
    %v175 = vunpack.c.l.bf16 %v83
    %v176 = vunpack.c.h.bf16 %v83
    %v177 = vunpack.c.l.bf16 %v84
    %v178 = vunpack.c.l.bf16 %v85
    %v179 = vunpack.c.h.bf16 %v85
    %v180 = vunpack.c.l.bf16 %v86
    %v181 = vunpack.c.l.bf16 %v87
    %v182 = vunpack.c.h.bf16 %v87
    %v183 = vunpack.c.l.bf16 %v88
    %v184 = vunpack.c.l.bf16 %v89
    %v185 = vunpack.c.h.bf16 %v89
    %v186 = vunpack.c.l.bf16 %v90
    %v187 = vunpack.c.l.bf16 %v91
    %v188 = vunpack.c.h.bf16 %v91
    %v189 = vunpack.c.l.bf16 %v92
    %v190 = vunpack.c.l.bf16 %v93
    %v191 = vunpack.c.h.bf16 %v93
    %v192 = vunpack.c.l.bf16 %v94
    %v193 = vunpack.c.l.bf16 %v95
    %v194 = vunpack.c.h.bf16 %v95
    %v195 = vunpack.c.l.bf16 %v96
    %v196 = vunpack.c.l.bf16 %v97
    %v197 = vunpack.c.h.bf16 %v97
    %v198 = vunpack.c.l.bf16 %v98
    %v199 = vunpack.c.l.bf16 %v99
    %v200 = vunpack.c.h.bf16 %v99
    %v201 = vunpack.c.l.bf16 %v100
    %v202 = vunpack.c.l.bf16 %v101
    %v203 = vunpack.c.h.bf16 %v101
    %v204 = vunpack.c.l.bf16 %v102
    %v205 = vunpack.c.l.bf16 %v103
    %v206 = vunpack.c.h.bf16 %v103
    %v207 = vunpack.c.l.bf16 %v104
    %v208 = vunpack.c.l.bf16 %v105
    %v209 = vunpack.c.h.bf16 %v105
    %v210 = vunpack.c.l.bf16 %v106
    %v211 = vunpack.c.l.bf16 %v107
    %v212 = vunpack.c.h.bf16 %v107
    %v213 = vunpack.c.l.bf16 %v108
    %v214 = vunpack.c.l.bf16 %v109
    %v215 = vunpack.c.h.bf16 %v109
    %v216 = vunpack.c.l.bf16 %v110
    %v217 = vunpack.c.l.bf16 %v111
    %v218 = vunpack.c.h.bf16 %v111
    %v219 = vunpack.c.l.bf16 %v112
    %v220 = vunpack.c.l.bf16 %v113
    %v221 = vunpack.c.h.bf16 %v113
    %v222 = vunpack.c.l.bf16 %v114
    %v223 = vunpack.c.l.bf16 %v115
    %v224 = vunpack.c.h.bf16 %v115
    %v225 = vunpack.c.l.bf16 %v116
    %v226 = vunpack.c.l.bf16 %v117
    %v227 = vunpack.c.h.bf16 %v117
    %v228 = vunpack.c.l.bf16 %v118
    %v229 = vunpack.c.l.bf16 %v119
    %v230 = vunpack.c.h.bf16 %v119
    %v231 = vunpack.c.l.bf16 %v120
    %v232 = vunpack.c.l.bf16 %v121
    %v233 = vunpack.c.h.bf16 %v121
    %v234 = vunpack.c.l.bf16 %v122
    %v235 = vunpack.c.l.bf16 %v123
    %v236 = vunpack.c.h.bf16 %v123
    %v237 = vunpack.c.l.bf16 %v124
    %v238 = vunpack.c.l.bf16 %v125
    %v239 = vunpack.c.h.bf16 %v125
    %v240 = vunpack.c.l.bf16 %v126
    %vm241 = vcmask 359424
    %v243 = vsel %vm241, %v45, 0
    %vm245 = vcmask 1043456
    %v247 = vsel %vm245, %v238, 0
    %v250 = vsel %vm245, %v239, 0
    %v253 = vsel %vm245, %v240, 0
    %255 = vmatpush.msra.mxu0 %v172
    %256 = vmatpush.msra.mxu0 %v169
    %257 = vmatpush.msra.mxu0 %v166
    %258 = vmatpush.msra.mxu0 %v163
    %259 = vmatpush.msra.mxu0 %v160
    %260 = vmatpush.msra.mxu0 %v157
    %261 = vmatpush.msra.mxu0 %v154
    %262 = vmatpush.msra.mxu0 %v151
    %263 = vmatpush.msra.mxu0 %v148
    %264 = vmatpush.msra.mxu0 %v145
    %265 = vmatpush.msra.mxu0 %v142
    %266 = vmatpush.msra.mxu0 %v139
    %267 = vmatpush.msra.mxu0 %v136
    %268 = vmatpush.msra.mxu0 %v133
    %269 = vmatpush.msra.mxu0 %v130
    %270 = vmatpush.msra.mxu0 %v127
    %271 = vmatmul.f32.gmra.mxu0 %v43
    %v272 = vpop.f32.mrf.mxu0
    %v273 = vadd.f32 0.0, %v272
    %274 = vdwg.mxu0
    %275 = vmatpush.msra.mxu0 %v220
    %276 = vmatpush.msra.mxu0 %v217
    %277 = vmatpush.msra.mxu0 %v214
    %278 = vmatpush.msra.mxu0 %v211
    %279 = vmatpush.msra.mxu0 %v208
    %280 = vmatpush.msra.mxu0 %v205
    %281 = vmatpush.msra.mxu0 %v202
    %282 = vmatpush.msra.mxu0 %v199
    %283 = vmatpush.msra.mxu0 %v196
    %284 = vmatpush.msra.mxu0 %v193
    %285 = vmatpush.msra.mxu0 %v190
    %286 = vmatpush.msra.mxu0 %v187
    %287 = vmatpush.msra.mxu0 %v184
    %288 = vmatpush.msra.mxu0 %v181
    %289 = vmatpush.msra.mxu0 %v178
    %290 = vmatpush.msra.mxu0 %v175
    %291 = vmatmul.f32.gmra.mxu0 %v44
    %v292 = vpop.f32.mrf.mxu0
    %v293 = vadd.f32 %v273, %v292
    %294 = vdwg.mxu0
    %295 = vmatpush.msra.mxu0 0.0
    %296 = vmatpush.msra.mxu0 0.0
    %297 = vmatpush.msra.mxu0 0.0
    %298 = vmatpush.msra.mxu0 0.0
    %299 = vmatpush.msra.mxu0 0.0
    %300 = vmatpush.msra.mxu0 0.0
    %301 = vmatpush.msra.mxu0 0.0
    %302 = vmatpush.msra.mxu0 0.0
    %303 = vmatpush.msra.mxu0 0.0
    %304 = vmatpush.msra.mxu0 0.0
    %305 = vmatpush.msra.mxu0 %v247
    %306 = vmatpush.msra.mxu0 %v235
    %307 = vmatpush.msra.mxu0 %v232
    %308 = vmatpush.msra.mxu0 %v229
    %309 = vmatpush.msra.mxu0 %v226
    %310 = vmatpush.msra.mxu0 %v223
    %311 = vmatmul.f32.gmra.mxu0 %v243
    %v312 = vpop.f32.mrf.mxu0
    %v313 = vadd.f32 %v293, %v312
    %314 = vdwg.mxu0
    %315 = vmatpush.msra.mxu0 %v173
    %316 = vmatpush.msra.mxu0 %v170
    %317 = vmatpush.msra.mxu0 %v167
    %318 = vmatpush.msra.mxu0 %v164
    %319 = vmatpush.msra.mxu0 %v161
    %320 = vmatpush.msra.mxu0 %v158
    %321 = vmatpush.msra.mxu0 %v155
    %322 = vmatpush.msra.mxu0 %v152
    %323 = vmatpush.msra.mxu0 %v149
    %324 = vmatpush.msra.mxu0 %v146
    %325 = vmatpush.msra.mxu0 %v143
    %326 = vmatpush.msra.mxu0 %v140
    %327 = vmatpush.msra.mxu0 %v137
    %328 = vmatpush.msra.mxu0 %v134
    %329 = vmatpush.msra.mxu0 %v131
    %330 = vmatpush.msra.mxu0 %v128
    %331 = vmatmul.f32.gmra.mxu0 %v43
    %v332 = vpop.f32.mrf.mxu0
    %v333 = vadd.f32 0.0, %v332
    %334 = vdwg.mxu0
    %335 = vmatpush.msra.mxu0 %v221
    %336 = vmatpush.msra.mxu0 %v218
    %337 = vmatpush.msra.mxu0 %v215
    %338 = vmatpush.msra.mxu0 %v212
    %339 = vmatpush.msra.mxu0 %v209
    %340 = vmatpush.msra.mxu0 %v206
    %341 = vmatpush.msra.mxu0 %v203
    %342 = vmatpush.msra.mxu0 %v200
    %343 = vmatpush.msra.mxu0 %v197
    %344 = vmatpush.msra.mxu0 %v194
    %345 = vmatpush.msra.mxu0 %v191
    %346 = vmatpush.msra.mxu0 %v188
    %347 = vmatpush.msra.mxu0 %v185
    %348 = vmatpush.msra.mxu0 %v182
    %349 = vmatpush.msra.mxu0 %v179
    %350 = vmatpush.msra.mxu0 %v176
    %351 = vmatmul.f32.gmra.mxu0 %v44
    %v352 = vpop.f32.mrf.mxu0
    %v353 = vadd.f32 %v333, %v352
    %354 = vdwg.mxu0
    %355 = vmatpush.msra.mxu0 0.0
    %356 = vmatpush.msra.mxu0 0.0
    %357 = vmatpush.msra.mxu0 0.0
    %358 = vmatpush.msra.mxu0 0.0
    %359 = vmatpush.msra.mxu0 0.0
    %360 = vmatpush.msra.mxu0 0.0
    %361 = vmatpush.msra.mxu0 0.0
    %362 = vmatpush.msra.mxu0 0.0
    %363 = vmatpush.msra.mxu0 0.0
    %364 = vmatpush.msra.mxu0 0.0
    %365 = vmatpush.msra.mxu0 %v250
    %366 = vmatpush.msra.mxu0 %v236
    %367 = vmatpush.msra.mxu0 %v233
    %368 = vmatpush.msra.mxu0 %v230
    %369 = vmatpush.msra.mxu0 %v227
    %370 = vmatpush.msra.mxu0 %v224
    %371 = vmatmul.f32.gmra.mxu0 %v243
    %v372 = vpop.f32.mrf.mxu0
    %v373 = vadd.f32 %v353, %v372
    %374 = vdwg.mxu0
    %375 = vmatpush.msra.mxu0 %v174
    %376 = vmatpush.msra.mxu0 %v171
    %377 = vmatpush.msra.mxu0 %v168
    %378 = vmatpush.msra.mxu0 %v165
    %379 = vmatpush.msra.mxu0 %v162
    %380 = vmatpush.msra.mxu0 %v159
    %381 = vmatpush.msra.mxu0 %v156
    %382 = vmatpush.msra.mxu0 %v153
    %383 = vmatpush.msra.mxu0 %v150
    %384 = vmatpush.msra.mxu0 %v147
    %385 = vmatpush.msra.mxu0 %v144
    %386 = vmatpush.msra.mxu0 %v141
    %387 = vmatpush.msra.mxu0 %v138
    %388 = vmatpush.msra.mxu0 %v135
    %389 = vmatpush.msra.mxu0 %v132
    %390 = vmatpush.msra.mxu0 %v129
    %391 = vmatmul.f32.gmra.mxu0 %v43
    %v392 = vpop.f32.mrf.mxu0
    %v393 = vadd.f32 0.0, %v392
    %394 = vdwg.mxu0
    %395 = vmatpush.msra.mxu0 %v222
    %396 = vmatpush.msra.mxu0 %v219
    %397 = vmatpush.msra.mxu0 %v216
    %398 = vmatpush.msra.mxu0 %v213
    %399 = vmatpush.msra.mxu0 %v210
    %400 = vmatpush.msra.mxu0 %v207
    %401 = vmatpush.msra.mxu0 %v204
    %402 = vmatpush.msra.mxu0 %v201
    %403 = vmatpush.msra.mxu0 %v198
    %404 = vmatpush.msra.mxu0 %v195
    %405 = vmatpush.msra.mxu0 %v192
    %406 = vmatpush.msra.mxu0 %v189
    %407 = vmatpush.msra.mxu0 %v186
    %408 = vmatpush.msra.mxu0 %v183
    %409 = vmatpush.msra.mxu0 %v180
    %410 = vmatpush.msra.mxu0 %v177
    %411 = vmatmul.f32.gmra.mxu0 %v44
    %v412 = vpop.f32.mrf.mxu0
    %v413 = vadd.f32 %v393, %v412
    %414 = vdwg.mxu0
    %415 = vmatpush.msra.mxu0 0.0
    %416 = vmatpush.msra.mxu0 0.0
    %417 = vmatpush.msra.mxu0 0.0
    %418 = vmatpush.msra.mxu0 0.0
    %419 = vmatpush.msra.mxu0 0.0
    %420 = vmatpush.msra.mxu0 0.0
    %421 = vmatpush.msra.mxu0 0.0
    %422 = vmatpush.msra.mxu0 0.0
    %423 = vmatpush.msra.mxu0 0.0
    %424 = vmatpush.msra.mxu0 0.0
    %425 = vmatpush.msra.mxu0 %v253
    %426 = vmatpush.msra.mxu0 %v237
    %427 = vmatpush.msra.mxu0 %v234
    %428 = vmatpush.msra.mxu0 %v231
    %429 = vmatpush.msra.mxu0 %v228
    %430 = vmatpush.msra.mxu0 %v225
    %431 = vmatmul.f32.gmra.mxu0 %v243
    %v432 = vpop.f32.mrf.mxu0
    %v433 = vadd.f32 %v413, %v432
    %434 = vdwg.mxu0
    %s435 = scalar_lea.vmem %s4, 456
    %v436 = vld [vmem:[%s435] sm:$0xff]
    %v437 = vld [vmem:[%s435 + $0x8] sm:$0xf]
    %v438 = vld [vmem:[%s435 + $0xc] sm:$0xff]
    %v439 = vld [vmem:[%s435 + $0x14] sm:$0xf]
    %v440 = vld [vmem:[%s435 + $0x18] sm:$0xff]
    %v441 = vld [vmem:[%s435 + $0x20] sm:$0xf]
    %v442 = vld [vmem:[%s435 + $0x24] sm:$0xff]
    %v443 = vld [vmem:[%s435 + $0x2c] sm:$0xf]
    %v444 = vld [vmem:[%s435 + $0x30] sm:$0xff]
    %v445 = vld [vmem:[%s435 + $0x38] sm:$0xf]
    %v446 = vld [vmem:[%s435 + $0x3c] sm:$0xff]
    %v447 = vld [vmem:[%s435 + $0x44] sm:$0xf]
    %v448 = vld [vmem:[%s435 + $0x48] sm:$0xff]
    %v449 = vld [vmem:[%s435 + $0x50] sm:$0xf]
    %v450 = vld [vmem:[%s435 + $0x54] sm:$0xff]
    %v451 = vld [vmem:[%s435 + $0x5c] sm:$0xf]
    %v452 = vld [vmem:[%s435 + $0x60] sm:$0xff]
    %v453 = vld [vmem:[%s435 + $0x68] sm:$0xf]
    %v454 = vld [vmem:[%s435 + $0x6c] sm:$0xff]
    %v455 = vld [vmem:[%s435 + $0x74] sm:$0xf]
    %v456 = vld [vmem:[%s435 + $0x78] sm:$0xff]
    %v457 = vld [vmem:[%s435 + $0x80] sm:$0xf]
    %v458 = vld [vmem:[%s435 + $0x84] sm:$0xff]
    %v459 = vld [vmem:[%s435 + $0x8c] sm:$0xf]
    %v460 = vld [vmem:[%s435 + $0x90] sm:$0xff]
    %v461 = vld [vmem:[%s435 + $0x98] sm:$0xf]
    %v462 = vld [vmem:[%s435 + $0x9c] sm:$0xff]
    %v463 = vld [vmem:[%s435 + $0xa4] sm:$0xf]
    %v464 = vld [vmem:[%s435 + $0xa8] sm:$0xff]
    %v465 = vld [vmem:[%s435 + $0xb0] sm:$0xf]
    %v466 = vld [vmem:[%s435 + $0xb4] sm:$0xff]
    %v467 = vld [vmem:[%s435 + $0xbc] sm:$0xf]
    %v468 = vld [vmem:[%s435 + $0xc0] sm:$0xff]
    %v469 = vld [vmem:[%s435 + $0xc8] sm:$0xf]
    %v470 = vld [vmem:[%s435 + $0xcc] sm:$0xff]
    %v471 = vld [vmem:[%s435 + $0xd4] sm:$0xf]
    %v472 = vld [vmem:[%s435 + $0xd8] sm:$0xff]
    %v473 = vld [vmem:[%s435 + $0xe0] sm:$0xf]
    %v474 = vld [vmem:[%s435 + $0xe4] sm:$0xff]
    %v475 = vld [vmem:[%s435 + $0xec] sm:$0xf]
    %v476 = vld [vmem:[%s435 + $0xf0] sm:$0xff]
    %v477 = vld [vmem:[%s435 + $0xf8] sm:$0xf]
    %v478 = vld [vmem:[%s435 + $0xfc] sm:$0xff]
    %v479 = vld [vmem:[%s435 + $0x104] sm:$0xf]
    %v480 = vld [vmem:[%s435 + $0x108] sm:$0xff]
    %v481 = vld [vmem:[%s435 + $0x110] sm:$0xf]
    %v482 = vld [vmem:[%s435 + $0x114] sm:$0xff]
    %v483 = vld [vmem:[%s435 + $0x11c] sm:$0xf]
    %v484 = vld [vmem:[%s435 + $0x120] sm:$0xff]
    %v485 = vld [vmem:[%s435 + $0x128] sm:$0xf]
    %v486 = vld [vmem:[%s435 + $0x12c] sm:$0xff]
    %v487 = vld [vmem:[%s435 + $0x134] sm:$0xf]
    %v488 = vld [vmem:[%s435 + $0x138] sm:$0xff]
    %v489 = vld [vmem:[%s435 + $0x140] sm:$0xf]
    %v490 = vld [vmem:[%s435 + $0x144] sm:$0xff]
    %v491 = vld [vmem:[%s435 + $0x14c] sm:$0xf]
    %v492 = vld [vmem:[%s435 + $0x150] sm:$0xff]
    %v493 = vld [vmem:[%s435 + $0x158] sm:$0xf]
    %v494 = vld [vmem:[%s435 + $0x15c] sm:$0xff]
    %v495 = vld [vmem:[%s435 + $0x164] sm:$0xf]
    %v496 = vld [vmem:[%s435 + $0x168] sm:$0xff]
    %v497 = vld [vmem:[%s435 + $0x170] sm:$0xf]
    %v498 = vld [vmem:[%s435 + $0x174] sm:$0xff]
    %v499 = vld [vmem:[%s435 + $0x17c] sm:$0xf]
    %v500 = vld [vmem:[%s435 + $0x180] sm:$0xff]
    %v501 = vld [vmem:[%s435 + $0x188] sm:$0xf]
    %v502 = vld [vmem:[%s435 + $0x18c] sm:$0xff]
    %v503 = vld [vmem:[%s435 + $0x194] sm:$0xf]
    %v504 = vld [vmem:[%s435 + $0x198] sm:$0xff]
    %v505 = vld [vmem:[%s435 + $0x1a0] sm:$0xf]
    %v506 = vld [vmem:[%s435 + $0x1a4] sm:$0xff]
    %v507 = vld [vmem:[%s435 + $0x1ac] sm:$0xf]
    %v508 = vld [vmem:[%s435 + $0x1b0] sm:$0xff]
    %v509 = vld [vmem:[%s435 + $0x1b8] sm:$0xf]
    %v510 = vld [vmem:[%s435 + $0x1bc] sm:$0x33]
    %v511 = vld [vmem:[%s435 + $0x1c4] sm:$0x3]
    %v512 = vunpack.c.l.bf16 %v436
    %v513 = vunpack.c.h.bf16 %v436
    %v514 = vunpack.c.l.bf16 %v437
    %v515 = vunpack.c.l.bf16 %v438
    %v516 = vunpack.c.h.bf16 %v438
    %v517 = vunpack.c.l.bf16 %v439
    %v518 = vunpack.c.l.bf16 %v440
    %v519 = vunpack.c.h.bf16 %v440
    %v520 = vunpack.c.l.bf16 %v441
    %v521 = vunpack.c.l.bf16 %v442
    %v522 = vunpack.c.h.bf16 %v442
    %v523 = vunpack.c.l.bf16 %v443
    %v524 = vunpack.c.l.bf16 %v444
    %v525 = vunpack.c.h.bf16 %v444
    %v526 = vunpack.c.l.bf16 %v445
    %v527 = vunpack.c.l.bf16 %v446
    %v528 = vunpack.c.h.bf16 %v446
    %v529 = vunpack.c.l.bf16 %v447
    %v530 = vunpack.c.l.bf16 %v448
    %v531 = vunpack.c.h.bf16 %v448
    %v532 = vunpack.c.l.bf16 %v449
    %v533 = vunpack.c.l.bf16 %v450
    %v534 = vunpack.c.h.bf16 %v450
    %v535 = vunpack.c.l.bf16 %v451
    %v536 = vunpack.c.l.bf16 %v452
    %v537 = vunpack.c.h.bf16 %v452
    %v538 = vunpack.c.l.bf16 %v453
    %v539 = vunpack.c.l.bf16 %v454
    %v540 = vunpack.c.h.bf16 %v454
    %v541 = vunpack.c.l.bf16 %v455
    %v542 = vunpack.c.l.bf16 %v456
    %v543 = vunpack.c.h.bf16 %v456
    %v544 = vunpack.c.l.bf16 %v457
    %v545 = vunpack.c.l.bf16 %v458
    %v546 = vunpack.c.h.bf16 %v458
    %v547 = vunpack.c.l.bf16 %v459
    %v548 = vunpack.c.l.bf16 %v460
    %v549 = vunpack.c.h.bf16 %v460
    %v550 = vunpack.c.l.bf16 %v461
    %v551 = vunpack.c.l.bf16 %v462
    %v552 = vunpack.c.h.bf16 %v462
    %v553 = vunpack.c.l.bf16 %v463
    %v554 = vunpack.c.l.bf16 %v464
    %v555 = vunpack.c.h.bf16 %v464
    %v556 = vunpack.c.l.bf16 %v465
    %v557 = vunpack.c.l.bf16 %v466
    %v558 = vunpack.c.h.bf16 %v466
    %v559 = vunpack.c.l.bf16 %v467
    %v560 = vunpack.c.l.bf16 %v468
    %v561 = vunpack.c.h.bf16 %v468
    %v562 = vunpack.c.l.bf16 %v469
    %v563 = vunpack.c.l.bf16 %v470
    %v564 = vunpack.c.h.bf16 %v470
    %v565 = vunpack.c.l.bf16 %v471
    %v566 = vunpack.c.l.bf16 %v472
    %v567 = vunpack.c.h.bf16 %v472
    %v568 = vunpack.c.l.bf16 %v473
    %v569 = vunpack.c.l.bf16 %v474
    %v570 = vunpack.c.h.bf16 %v474
    %v571 = vunpack.c.l.bf16 %v475
    %v572 = vunpack.c.l.bf16 %v476
    %v573 = vunpack.c.h.bf16 %v476
    %v574 = vunpack.c.l.bf16 %v477
    %v575 = vunpack.c.l.bf16 %v478
    %v576 = vunpack.c.h.bf16 %v478
    %v577 = vunpack.c.l.bf16 %v479
    %v578 = vunpack.c.l.bf16 %v480
    %v579 = vunpack.c.h.bf16 %v480
    %v580 = vunpack.c.l.bf16 %v481
    %v581 = vunpack.c.l.bf16 %v482
    %v582 = vunpack.c.h.bf16 %v482
    %v583 = vunpack.c.l.bf16 %v483
    %v584 = vunpack.c.l.bf16 %v484
    %v585 = vunpack.c.h.bf16 %v484
    %v586 = vunpack.c.l.bf16 %v485
    %v587 = vunpack.c.l.bf16 %v486
    %v588 = vunpack.c.h.bf16 %v486
    %v589 = vunpack.c.l.bf16 %v487
    %v590 = vunpack.c.l.bf16 %v488
    %v591 = vunpack.c.h.bf16 %v488
    %v592 = vunpack.c.l.bf16 %v489
    %v593 = vunpack.c.l.bf16 %v490
    %v594 = vunpack.c.h.bf16 %v490
    %v595 = vunpack.c.l.bf16 %v491
    %v596 = vunpack.c.l.bf16 %v492
    %v597 = vunpack.c.h.bf16 %v492
    %v598 = vunpack.c.l.bf16 %v493
    %v599 = vunpack.c.l.bf16 %v494
    %v600 = vunpack.c.h.bf16 %v494
    %v601 = vunpack.c.l.bf16 %v495
    %v602 = vunpack.c.l.bf16 %v496
    %v603 = vunpack.c.h.bf16 %v496
    %v604 = vunpack.c.l.bf16 %v497
    %v605 = vunpack.c.l.bf16 %v498
    %v606 = vunpack.c.h.bf16 %v498
    %v607 = vunpack.c.l.bf16 %v499
    %v608 = vunpack.c.l.bf16 %v500
    %v609 = vunpack.c.h.bf16 %v500
    %v610 = vunpack.c.l.bf16 %v501
    %v611 = vunpack.c.l.bf16 %v502
    %v612 = vunpack.c.h.bf16 %v502
    %v613 = vunpack.c.l.bf16 %v503
    %v614 = vunpack.c.l.bf16 %v504
    %v615 = vunpack.c.h.bf16 %v504
    %v616 = vunpack.c.l.bf16 %v505
    %v617 = vunpack.c.l.bf16 %v506
    %v618 = vunpack.c.h.bf16 %v506
    %v619 = vunpack.c.l.bf16 %v507
    %v620 = vunpack.c.l.bf16 %v508
    %v621 = vunpack.c.h.bf16 %v508
    %v622 = vunpack.c.l.bf16 %v509
    %v623 = vunpack.c.l.bf16 %v510
    %v624 = vunpack.c.h.bf16 %v510
    %v625 = vunpack.c.l.bf16 %v511
    %v627 = vsel %vm245, %v623, 0
    %v630 = vsel %vm245, %v624, 0
    %v633 = vsel %vm245, %v625, 0
    %635 = vmatpush.msra.mxu0 %v557
    %636 = vmatpush.msra.mxu0 %v554
    %637 = vmatpush.msra.mxu0 %v551
    %638 = vmatpush.msra.mxu0 %v548
    %639 = vmatpush.msra.mxu0 %v545
    %640 = vmatpush.msra.mxu0 %v542
    %641 = vmatpush.msra.mxu0 %v539
    %642 = vmatpush.msra.mxu0 %v536
    %643 = vmatpush.msra.mxu0 %v533
    %644 = vmatpush.msra.mxu0 %v530
    %645 = vmatpush.msra.mxu0 %v527
    %646 = vmatpush.msra.mxu0 %v524
    %647 = vmatpush.msra.mxu0 %v521
    %648 = vmatpush.msra.mxu0 %v518
    %649 = vmatpush.msra.mxu0 %v515
    %650 = vmatpush.msra.mxu0 %v512
    %651 = vmatmul.f32.gmra.mxu0 %v43
    %v652 = vpop.f32.mrf.mxu0
    %v653 = vadd.f32 0.0, %v652
    %654 = vdwg.mxu0
    %655 = vmatpush.msra.mxu0 %v605
    %656 = vmatpush.msra.mxu0 %v602
    %657 = vmatpush.msra.mxu0 %v599
    %658 = vmatpush.msra.mxu0 %v596
    %659 = vmatpush.msra.mxu0 %v593
    %660 = vmatpush.msra.mxu0 %v590
    %661 = vmatpush.msra.mxu0 %v587
    %662 = vmatpush.msra.mxu0 %v584
    %663 = vmatpush.msra.mxu0 %v581
    %664 = vmatpush.msra.mxu0 %v578
    %665 = vmatpush.msra.mxu0 %v575
    %666 = vmatpush.msra.mxu0 %v572
    %667 = vmatpush.msra.mxu0 %v569
    %668 = vmatpush.msra.mxu0 %v566
    %669 = vmatpush.msra.mxu0 %v563
    %670 = vmatpush.msra.mxu0 %v560
    %671 = vmatmul.f32.gmra.mxu0 %v44
    %v672 = vpop.f32.mrf.mxu0
    %v673 = vadd.f32 %v653, %v672
    %674 = vdwg.mxu0
    %675 = vmatpush.msra.mxu0 0.0
    %676 = vmatpush.msra.mxu0 0.0
    %677 = vmatpush.msra.mxu0 0.0
    %678 = vmatpush.msra.mxu0 0.0
    %679 = vmatpush.msra.mxu0 0.0
    %680 = vmatpush.msra.mxu0 0.0
    %681 = vmatpush.msra.mxu0 0.0
    %682 = vmatpush.msra.mxu0 0.0
    %683 = vmatpush.msra.mxu0 0.0
    %684 = vmatpush.msra.mxu0 0.0
    %685 = vmatpush.msra.mxu0 %v627
    %686 = vmatpush.msra.mxu0 %v620
    %687 = vmatpush.msra.mxu0 %v617
    %688 = vmatpush.msra.mxu0 %v614
    %689 = vmatpush.msra.mxu0 %v611
    %690 = vmatpush.msra.mxu0 %v608
    %691 = vmatmul.f32.gmra.mxu0 %v243
    %v692 = vpop.f32.mrf.mxu0
    %v693 = vadd.f32 %v673, %v692
    %694 = vdwg.mxu0
    %695 = vmatpush.msra.mxu0 %v558
    %696 = vmatpush.msra.mxu0 %v555
    %697 = vmatpush.msra.mxu0 %v552
    %698 = vmatpush.msra.mxu0 %v549
    %699 = vmatpush.msra.mxu0 %v546
    %700 = vmatpush.msra.mxu0 %v543
    %701 = vmatpush.msra.mxu0 %v540
    %702 = vmatpush.msra.mxu0 %v537
    %703 = vmatpush.msra.mxu0 %v534
    %704 = vmatpush.msra.mxu0 %v531
    %705 = vmatpush.msra.mxu0 %v528
    %706 = vmatpush.msra.mxu0 %v525
    %707 = vmatpush.msra.mxu0 %v522
    %708 = vmatpush.msra.mxu0 %v519
    %709 = vmatpush.msra.mxu0 %v516
    %710 = vmatpush.msra.mxu0 %v513
    %711 = vmatmul.f32.gmra.mxu0 %v43
    %v712 = vpop.f32.mrf.mxu0
    %v713 = vadd.f32 0.0, %v712
    %714 = vdwg.mxu0
    %715 = vmatpush.msra.mxu0 %v606
    %716 = vmatpush.msra.mxu0 %v603
    %717 = vmatpush.msra.mxu0 %v600
    %718 = vmatpush.msra.mxu0 %v597
    %719 = vmatpush.msra.mxu0 %v594
    %720 = vmatpush.msra.mxu0 %v591
    %721 = vmatpush.msra.mxu0 %v588
    %722 = vmatpush.msra.mxu0 %v585
    %723 = vmatpush.msra.mxu0 %v582
    %724 = vmatpush.msra.mxu0 %v579
    %725 = vmatpush.msra.mxu0 %v576
    %726 = vmatpush.msra.mxu0 %v573
    %727 = vmatpush.msra.mxu0 %v570
    %728 = vmatpush.msra.mxu0 %v567
    %729 = vmatpush.msra.mxu0 %v564
    %730 = vmatpush.msra.mxu0 %v561
    %731 = vmatmul.f32.gmra.mxu0 %v44
    %v732 = vpop.f32.mrf.mxu0
    %v733 = vadd.f32 %v713, %v732
    %734 = vdwg.mxu0
    %735 = vmatpush.msra.mxu0 0.0
    %736 = vmatpush.msra.mxu0 0.0
    %737 = vmatpush.msra.mxu0 0.0
    %738 = vmatpush.msra.mxu0 0.0
    %739 = vmatpush.msra.mxu0 0.0
    %740 = vmatpush.msra.mxu0 0.0
    %741 = vmatpush.msra.mxu0 0.0
    %742 = vmatpush.msra.mxu0 0.0
    %743 = vmatpush.msra.mxu0 0.0
    %744 = vmatpush.msra.mxu0 0.0
    %745 = vmatpush.msra.mxu0 %v630
    %746 = vmatpush.msra.mxu0 %v621
    %747 = vmatpush.msra.mxu0 %v618
    %748 = vmatpush.msra.mxu0 %v615
    %749 = vmatpush.msra.mxu0 %v612
    %750 = vmatpush.msra.mxu0 %v609
    %751 = vmatmul.f32.gmra.mxu0 %v243
    %v752 = vpop.f32.mrf.mxu0
    %v753 = vadd.f32 %v733, %v752
    %754 = vdwg.mxu0
    %755 = vmatpush.msra.mxu0 %v559
    %756 = vmatpush.msra.mxu0 %v556
    %757 = vmatpush.msra.mxu0 %v553
    %758 = vmatpush.msra.mxu0 %v550
    %759 = vmatpush.msra.mxu0 %v547
    %760 = vmatpush.msra.mxu0 %v544
    %761 = vmatpush.msra.mxu0 %v541
    %762 = vmatpush.msra.mxu0 %v538
    %763 = vmatpush.msra.mxu0 %v535
    %764 = vmatpush.msra.mxu0 %v532
    %765 = vmatpush.msra.mxu0 %v529
    %766 = vmatpush.msra.mxu0 %v526
    %767 = vmatpush.msra.mxu0 %v523
    %768 = vmatpush.msra.mxu0 %v520
    %769 = vmatpush.msra.mxu0 %v517
    %770 = vmatpush.msra.mxu0 %v514
    %771 = vmatmul.f32.gmra.mxu0 %v43
    %v772 = vpop.f32.mrf.mxu0
    %v773 = vadd.f32 0.0, %v772
    %774 = vdwg.mxu0
    %775 = vmatpush.msra.mxu0 %v607
    %776 = vmatpush.msra.mxu0 %v604
    %777 = vmatpush.msra.mxu0 %v601
    %778 = vmatpush.msra.mxu0 %v598
    %779 = vmatpush.msra.mxu0 %v595
    %780 = vmatpush.msra.mxu0 %v592
    %781 = vmatpush.msra.mxu0 %v589
    %782 = vmatpush.msra.mxu0 %v586
    %783 = vmatpush.msra.mxu0 %v583
    %784 = vmatpush.msra.mxu0 %v580
    %785 = vmatpush.msra.mxu0 %v577
    %786 = vmatpush.msra.mxu0 %v574
    %787 = vmatpush.msra.mxu0 %v571
    %788 = vmatpush.msra.mxu0 %v568
    %789 = vmatpush.msra.mxu0 %v565
    %790 = vmatpush.msra.mxu0 %v562
    %791 = vmatmul.f32.gmra.mxu0 %v44
    %v792 = vpop.f32.mrf.mxu0
    %v793 = vadd.f32 %v773, %v792
    %794 = vdwg.mxu0
    %795 = vmatpush.msra.mxu0 0.0
    %796 = vmatpush.msra.mxu0 0.0
    %797 = vmatpush.msra.mxu0 0.0
    %798 = vmatpush.msra.mxu0 0.0
    %799 = vmatpush.msra.mxu0 0.0
    %800 = vmatpush.msra.mxu0 0.0
    %801 = vmatpush.msra.mxu0 0.0
    %802 = vmatpush.msra.mxu0 0.0
    %803 = vmatpush.msra.mxu0 0.0
    %804 = vmatpush.msra.mxu0 0.0
    %805 = vmatpush.msra.mxu0 %v633
    %806 = vmatpush.msra.mxu0 %v622
    %807 = vmatpush.msra.mxu0 %v619
    %808 = vmatpush.msra.mxu0 %v616
    %809 = vmatpush.msra.mxu0 %v613
    %810 = vmatpush.msra.mxu0 %v610
    %811 = vmatmul.f32.gmra.mxu0 %v243
    %v812 = vpop.f32.mrf.mxu0
    %v813 = vadd.f32 %v793, %v812
    %814 = vdwg.mxu0
    %s815 = scalar_lea.vmem %s4, 912
    %v816 = vld [vmem:[%s815] sm:$0xff]
    %v817 = vld [vmem:[%s815 + $0x8] sm:$0xf]
    %v818 = vld [vmem:[%s815 + $0xc] sm:$0xff]
    %v819 = vld [vmem:[%s815 + $0x14] sm:$0xf]
    %v820 = vld [vmem:[%s815 + $0x18] sm:$0xff]
    %v821 = vld [vmem:[%s815 + $0x20] sm:$0xf]
    %v822 = vld [vmem:[%s815 + $0x24] sm:$0xff]
    %v823 = vld [vmem:[%s815 + $0x2c] sm:$0xf]
    %v824 = vld [vmem:[%s815 + $0x30] sm:$0xff]
    %v825 = vld [vmem:[%s815 + $0x38] sm:$0xf]
    %v826 = vld [vmem:[%s815 + $0x3c] sm:$0xff]
    %v827 = vld [vmem:[%s815 + $0x44] sm:$0xf]
    %v828 = vld [vmem:[%s815 + $0x48] sm:$0xff]
    %v829 = vld [vmem:[%s815 + $0x50] sm:$0xf]
    %v830 = vld [vmem:[%s815 + $0x54] sm:$0xff]
    %v831 = vld [vmem:[%s815 + $0x5c] sm:$0xf]
    %v832 = vld [vmem:[%s815 + $0x60] sm:$0xff]
    %v833 = vld [vmem:[%s815 + $0x68] sm:$0xf]
    %v834 = vld [vmem:[%s815 + $0x6c] sm:$0xff]
    %v835 = vld [vmem:[%s815 + $0x74] sm:$0xf]
    %v836 = vld [vmem:[%s815 + $0x78] sm:$0xff]
    %v837 = vld [vmem:[%s815 + $0x80] sm:$0xf]
    %v838 = vld [vmem:[%s815 + $0x84] sm:$0xff]
    %v839 = vld [vmem:[%s815 + $0x8c] sm:$0xf]
    %v840 = vld [vmem:[%s815 + $0x90] sm:$0xff]
    %v841 = vld [vmem:[%s815 + $0x98] sm:$0xf]
    %v842 = vld [vmem:[%s815 + $0x9c] sm:$0xff]
    %v843 = vld [vmem:[%s815 + $0xa4] sm:$0xf]
    %v844 = vld [vmem:[%s815 + $0xa8] sm:$0xff]
    %v845 = vld [vmem:[%s815 + $0xb0] sm:$0xf]
    %v846 = vld [vmem:[%s815 + $0xb4] sm:$0xff]
    %v847 = vld [vmem:[%s815 + $0xbc] sm:$0xf]
    %v848 = vld [vmem:[%s815 + $0xc0] sm:$0xff]
    %v849 = vld [vmem:[%s815 + $0xc8] sm:$0xf]
    %v850 = vld [vmem:[%s815 + $0xcc] sm:$0xff]
    %v851 = vld [vmem:[%s815 + $0xd4] sm:$0xf]
    %v852 = vld [vmem:[%s815 + $0xd8] sm:$0xff]
    %v853 = vld [vmem:[%s815 + $0xe0] sm:$0xf]
    %v854 = vld [vmem:[%s815 + $0xe4] sm:$0xff]
    %v855 = vld [vmem:[%s815 + $0xec] sm:$0xf]
    %v856 = vld [vmem:[%s815 + $0xf0] sm:$0xff]
    %v857 = vld [vmem:[%s815 + $0xf8] sm:$0xf]
    %v858 = vld [vmem:[%s815 + $0xfc] sm:$0xff]
    %v859 = vld [vmem:[%s815 + $0x104] sm:$0xf]
    %v860 = vld [vmem:[%s815 + $0x108] sm:$0xff]
    %v861 = vld [vmem:[%s815 + $0x110] sm:$0xf]
    %v862 = vld [vmem:[%s815 + $0x114] sm:$0xff]
    %v863 = vld [vmem:[%s815 + $0x11c] sm:$0xf]
    %v864 = vld [vmem:[%s815 + $0x120] sm:$0xff]
    %v865 = vld [vmem:[%s815 + $0x128] sm:$0xf]
    %v866 = vld [vmem:[%s815 + $0x12c] sm:$0xff]
    %v867 = vld [vmem:[%s815 + $0x134] sm:$0xf]
    %v868 = vld [vmem:[%s815 + $0x138] sm:$0xff]
    %v869 = vld [vmem:[%s815 + $0x140] sm:$0xf]
    %v870 = vld [vmem:[%s815 + $0x144] sm:$0xff]
    %v871 = vld [vmem:[%s815 + $0x14c] sm:$0xf]
    %v872 = vld [vmem:[%s815 + $0x150] sm:$0xff]
    %v873 = vld [vmem:[%s815 + $0x158] sm:$0xf]
    %v874 = vld [vmem:[%s815 + $0x15c] sm:$0xff]
    %v875 = vld [vmem:[%s815 + $0x164] sm:$0xf]
    %v876 = vld [vmem:[%s815 + $0x168] sm:$0xff]
    %v877 = vld [vmem:[%s815 + $0x170] sm:$0xf]
    %v878 = vld [vmem:[%s815 + $0x174] sm:$0xff]
    %v879 = vld [vmem:[%s815 + $0x17c] sm:$0xf]
    %v880 = vld [vmem:[%s815 + $0x180] sm:$0xff]
    %v881 = vld [vmem:[%s815 + $0x188] sm:$0xf]
    %v882 = vld [vmem:[%s815 + $0x18c] sm:$0xff]
    %v883 = vld [vmem:[%s815 + $0x194] sm:$0xf]
    %v884 = vld [vmem:[%s815 + $0x198] sm:$0xff]
    %v885 = vld [vmem:[%s815 + $0x1a0] sm:$0xf]
    %v886 = vld [vmem:[%s815 + $0x1a4] sm:$0xff]
    %v887 = vld [vmem:[%s815 + $0x1ac] sm:$0xf]
    %v888 = vld [vmem:[%s815 + $0x1b0] sm:$0xff]
    %v889 = vld [vmem:[%s815 + $0x1b8] sm:$0xf]
    %v890 = vld [vmem:[%s815 + $0x1bc] sm:$0x33]
    %v891 = vld [vmem:[%s815 + $0x1c4] sm:$0x3]
    %v892 = vunpack.c.l.bf16 %v816
    %v893 = vunpack.c.h.bf16 %v816
    %v894 = vunpack.c.l.bf16 %v817
    %v895 = vunpack.c.l.bf16 %v818
    %v896 = vunpack.c.h.bf16 %v818
    %v897 = vunpack.c.l.bf16 %v819
    %v898 = vunpack.c.l.bf16 %v820
    %v899 = vunpack.c.h.bf16 %v820
    %v900 = vunpack.c.l.bf16 %v821
    %v901 = vunpack.c.l.bf16 %v822
    %v902 = vunpack.c.h.bf16 %v822
    %v903 = vunpack.c.l.bf16 %v823
    %v904 = vunpack.c.l.bf16 %v824
    %v905 = vunpack.c.h.bf16 %v824
    %v906 = vunpack.c.l.bf16 %v825
    %v907 = vunpack.c.l.bf16 %v826
    %v908 = vunpack.c.h.bf16 %v826
    %v909 = vunpack.c.l.bf16 %v827
    %v910 = vunpack.c.l.bf16 %v828
    %v911 = vunpack.c.h.bf16 %v828
    %v912 = vunpack.c.l.bf16 %v829
    %v913 = vunpack.c.l.bf16 %v830
    %v914 = vunpack.c.h.bf16 %v830
    %v915 = vunpack.c.l.bf16 %v831
    %v916 = vunpack.c.l.bf16 %v832
    %v917 = vunpack.c.h.bf16 %v832
    %v918 = vunpack.c.l.bf16 %v833
    %v919 = vunpack.c.l.bf16 %v834
    %v920 = vunpack.c.h.bf16 %v834
    %v921 = vunpack.c.l.bf16 %v835
    %v922 = vunpack.c.l.bf16 %v836
    %v923 = vunpack.c.h.bf16 %v836
    %v924 = vunpack.c.l.bf16 %v837
    %v925 = vunpack.c.l.bf16 %v838
    %v926 = vunpack.c.h.bf16 %v838
    %v927 = vunpack.c.l.bf16 %v839
    %v928 = vunpack.c.l.bf16 %v840
    %v929 = vunpack.c.h.bf16 %v840
    %v930 = vunpack.c.l.bf16 %v841
    %v931 = vunpack.c.l.bf16 %v842
    %v932 = vunpack.c.h.bf16 %v842
    %v933 = vunpack.c.l.bf16 %v843
    %v934 = vunpack.c.l.bf16 %v844
    %v935 = vunpack.c.h.bf16 %v844
    %v936 = vunpack.c.l.bf16 %v845
    %v937 = vunpack.c.l.bf16 %v846
    %v938 = vunpack.c.h.bf16 %v846
    %v939 = vunpack.c.l.bf16 %v847
    %v940 = vunpack.c.l.bf16 %v848
    %v941 = vunpack.c.h.bf16 %v848
    %v942 = vunpack.c.l.bf16 %v849
    %v943 = vunpack.c.l.bf16 %v850
    %v944 = vunpack.c.h.bf16 %v850
    %v945 = vunpack.c.l.bf16 %v851
    %v946 = vunpack.c.l.bf16 %v852
    %v947 = vunpack.c.h.bf16 %v852
    %v948 = vunpack.c.l.bf16 %v853
    %v949 = vunpack.c.l.bf16 %v854
    %v950 = vunpack.c.h.bf16 %v854
    %v951 = vunpack.c.l.bf16 %v855
    %v952 = vunpack.c.l.bf16 %v856
    %v953 = vunpack.c.h.bf16 %v856
    %v954 = vunpack.c.l.bf16 %v857
    %v955 = vunpack.c.l.bf16 %v858
    %v956 = vunpack.c.h.bf16 %v858
    %v957 = vunpack.c.l.bf16 %v859
    %v958 = vunpack.c.l.bf16 %v860
    %v959 = vunpack.c.h.bf16 %v860
    %v960 = vunpack.c.l.bf16 %v861
    %v961 = vunpack.c.l.bf16 %v862
    %v962 = vunpack.c.h.bf16 %v862
    %v963 = vunpack.c.l.bf16 %v863
    %v964 = vunpack.c.l.bf16 %v864
    %v965 = vunpack.c.h.bf16 %v864
    %v966 = vunpack.c.l.bf16 %v865
    %v967 = vunpack.c.l.bf16 %v866
    %v968 = vunpack.c.h.bf16 %v866
    %v969 = vunpack.c.l.bf16 %v867
    %v970 = vunpack.c.l.bf16 %v868
    %v971 = vunpack.c.h.bf16 %v868
    %v972 = vunpack.c.l.bf16 %v869
    %v973 = vunpack.c.l.bf16 %v870
    %v974 = vunpack.c.h.bf16 %v870
    %v975 = vunpack.c.l.bf16 %v871
    %v976 = vunpack.c.l.bf16 %v872
    %v977 = vunpack.c.h.bf16 %v872
    %v978 = vunpack.c.l.bf16 %v873
    %v979 = vunpack.c.l.bf16 %v874
    %v980 = vunpack.c.h.bf16 %v874
    %v981 = vunpack.c.l.bf16 %v875
    %v982 = vunpack.c.l.bf16 %v876
    %v983 = vunpack.c.h.bf16 %v876
    %v984 = vunpack.c.l.bf16 %v877
    %v985 = vunpack.c.l.bf16 %v878
    %v986 = vunpack.c.h.bf16 %v878
    %v987 = vunpack.c.l.bf16 %v879
    %v988 = vunpack.c.l.bf16 %v880
    %v989 = vunpack.c.h.bf16 %v880
    %v990 = vunpack.c.l.bf16 %v881
    %v991 = vunpack.c.l.bf16 %v882
    %v992 = vunpack.c.h.bf16 %v882
    %v993 = vunpack.c.l.bf16 %v883
    %v994 = vunpack.c.l.bf16 %v884
    %v995 = vunpack.c.h.bf16 %v884
    %v996 = vunpack.c.l.bf16 %v885
    %v997 = vunpack.c.l.bf16 %v886
    %v998 = vunpack.c.h.bf16 %v886
    %v999 = vunpack.c.l.bf16 %v887
    %v1000 = vunpack.c.l.bf16 %v888
    %v1001 = vunpack.c.h.bf16 %v888
    %v1002 = vunpack.c.l.bf16 %v889
    %v1003 = vunpack.c.l.bf16 %v890
    %v1004 = vunpack.c.h.bf16 %v890
    %v1005 = vunpack.c.l.bf16 %v891
    %v1007 = vsel %vm245, %v1003, 0
    %v1010 = vsel %vm245, %v1004, 0
    %v1013 = vsel %vm245, %v1005, 0
    %1015 = vmatpush.msra.mxu0 %v937
    %1016 = vmatpush.msra.mxu0 %v934
    %1017 = vmatpush.msra.mxu0 %v931
    %1018 = vmatpush.msra.mxu0 %v928
    %1019 = vmatpush.msra.mxu0 %v925
    %1020 = vmatpush.msra.mxu0 %v922
    %1021 = vmatpush.msra.mxu0 %v919
    %1022 = vmatpush.msra.mxu0 %v916
    %1023 = vmatpush.msra.mxu0 %v913
    %1024 = vmatpush.msra.mxu0 %v910
    %1025 = vmatpush.msra.mxu0 %v907
    %1026 = vmatpush.msra.mxu0 %v904
    %1027 = vmatpush.msra.mxu0 %v901
    %1028 = vmatpush.msra.mxu0 %v898
    %1029 = vmatpush.msra.mxu0 %v895
    %1030 = vmatpush.msra.mxu0 %v892
    %1031 = vmatmul.f32.gmra.mxu0 %v43
    %v1032 = vpop.f32.mrf.mxu0
    %v1033 = vadd.f32 0.0, %v1032
    %1034 = vdwg.mxu0
    %1035 = vmatpush.msra.mxu0 %v985
    %1036 = vmatpush.msra.mxu0 %v982
    %1037 = vmatpush.msra.mxu0 %v979
    %1038 = vmatpush.msra.mxu0 %v976
    %1039 = vmatpush.msra.mxu0 %v973
    %1040 = vmatpush.msra.mxu0 %v970
    %1041 = vmatpush.msra.mxu0 %v967
    %1042 = vmatpush.msra.mxu0 %v964
    %1043 = vmatpush.msra.mxu0 %v961
    %1044 = vmatpush.msra.mxu0 %v958
    %1045 = vmatpush.msra.mxu0 %v955
    %1046 = vmatpush.msra.mxu0 %v952
    %1047 = vmatpush.msra.mxu0 %v949
    %1048 = vmatpush.msra.mxu0 %v946
    %1049 = vmatpush.msra.mxu0 %v943
    %1050 = vmatpush.msra.mxu0 %v940
    %1051 = vmatmul.f32.gmra.mxu0 %v44
    %v1052 = vpop.f32.mrf.mxu0
    %v1053 = vadd.f32 %v1033, %v1052
    %1054 = vdwg.mxu0
    %1055 = vmatpush.msra.mxu0 0.0
    %1056 = vmatpush.msra.mxu0 0.0
    %1057 = vmatpush.msra.mxu0 0.0
    %1058 = vmatpush.msra.mxu0 0.0
    %1059 = vmatpush.msra.mxu0 0.0
    %1060 = vmatpush.msra.mxu0 0.0
    %1061 = vmatpush.msra.mxu0 0.0
    %1062 = vmatpush.msra.mxu0 0.0
    %1063 = vmatpush.msra.mxu0 0.0
    %1064 = vmatpush.msra.mxu0 0.0
    %1065 = vmatpush.msra.mxu0 %v1007
    %1066 = vmatpush.msra.mxu0 %v1000
    %1067 = vmatpush.msra.mxu0 %v997
    %1068 = vmatpush.msra.mxu0 %v994
    %1069 = vmatpush.msra.mxu0 %v991
    %1070 = vmatpush.msra.mxu0 %v988
    %1071 = vmatmul.f32.gmra.mxu0 %v243
    %v1072 = vpop.f32.mrf.mxu0
    %v1073 = vadd.f32 %v1053, %v1072
    %1074 = vdwg.mxu0
    %1075 = vmatpush.msra.mxu0 %v938
    %1076 = vmatpush.msra.mxu0 %v935
    %1077 = vmatpush.msra.mxu0 %v932
    %1078 = vmatpush.msra.mxu0 %v929
    %1079 = vmatpush.msra.mxu0 %v926
    %1080 = vmatpush.msra.mxu0 %v923
    %1081 = vmatpush.msra.mxu0 %v920
    %1082 = vmatpush.msra.mxu0 %v917
    %1083 = vmatpush.msra.mxu0 %v914
    %1084 = vmatpush.msra.mxu0 %v911
    %1085 = vmatpush.msra.mxu0 %v908
    %1086 = vmatpush.msra.mxu0 %v905
    %1087 = vmatpush.msra.mxu0 %v902
    %1088 = vmatpush.msra.mxu0 %v899
    %1089 = vmatpush.msra.mxu0 %v896
    %1090 = vmatpush.msra.mxu0 %v893
    %1091 = vmatmul.f32.gmra.mxu0 %v43
    %v1092 = vpop.f32.mrf.mxu0
    %v1093 = vadd.f32 0.0, %v1092
    %1094 = vdwg.mxu0
    %1095 = vmatpush.msra.mxu0 %v986
    %1096 = vmatpush.msra.mxu0 %v983
    %1097 = vmatpush.msra.mxu0 %v980
    %1098 = vmatpush.msra.mxu0 %v977
    %1099 = vmatpush.msra.mxu0 %v974
    %1100 = vmatpush.msra.mxu0 %v971
    %1101 = vmatpush.msra.mxu0 %v968
    %1102 = vmatpush.msra.mxu0 %v965
    %1103 = vmatpush.msra.mxu0 %v962
    %1104 = vmatpush.msra.mxu0 %v959
    %1105 = vmatpush.msra.mxu0 %v956
    %1106 = vmatpush.msra.mxu0 %v953
    %1107 = vmatpush.msra.mxu0 %v950
    %1108 = vmatpush.msra.mxu0 %v947
    %1109 = vmatpush.msra.mxu0 %v944
    %1110 = vmatpush.msra.mxu0 %v941
    %1111 = vmatmul.f32.gmra.mxu0 %v44
    %v1112 = vpop.f32.mrf.mxu0
    %v1113 = vadd.f32 %v1093, %v1112
    %1114 = vdwg.mxu0
    %1115 = vmatpush.msra.mxu0 0.0
    %1116 = vmatpush.msra.mxu0 0.0
    %1117 = vmatpush.msra.mxu0 0.0
    %1118 = vmatpush.msra.mxu0 0.0
    %1119 = vmatpush.msra.mxu0 0.0
    %1120 = vmatpush.msra.mxu0 0.0
    %1121 = vmatpush.msra.mxu0 0.0
    %1122 = vmatpush.msra.mxu0 0.0
    %1123 = vmatpush.msra.mxu0 0.0
    %1124 = vmatpush.msra.mxu0 0.0
    %1125 = vmatpush.msra.mxu0 %v1010
    %1126 = vmatpush.msra.mxu0 %v1001
    %1127 = vmatpush.msra.mxu0 %v998
    %1128 = vmatpush.msra.mxu0 %v995
    %1129 = vmatpush.msra.mxu0 %v992
    %1130 = vmatpush.msra.mxu0 %v989
    %1131 = vmatmul.f32.gmra.mxu0 %v243
    %v1132 = vpop.f32.mrf.mxu0
    %v1133 = vadd.f32 %v1113, %v1132
    %1134 = vdwg.mxu0
    %1135 = vmatpush.msra.mxu0 %v939
    %1136 = vmatpush.msra.mxu0 %v936
    %1137 = vmatpush.msra.mxu0 %v933
    %1138 = vmatpush.msra.mxu0 %v930
    %1139 = vmatpush.msra.mxu0 %v927
    %1140 = vmatpush.msra.mxu0 %v924
    %1141 = vmatpush.msra.mxu0 %v921
    %1142 = vmatpush.msra.mxu0 %v918
    %1143 = vmatpush.msra.mxu0 %v915
    %1144 = vmatpush.msra.mxu0 %v912
    %1145 = vmatpush.msra.mxu0 %v909
    %1146 = vmatpush.msra.mxu0 %v906
    %1147 = vmatpush.msra.mxu0 %v903
    %1148 = vmatpush.msra.mxu0 %v900
    %1149 = vmatpush.msra.mxu0 %v897
    %1150 = vmatpush.msra.mxu0 %v894
    %1151 = vmatmul.f32.gmra.mxu0 %v43
    %v1152 = vpop.f32.mrf.mxu0
    %v1153 = vadd.f32 0.0, %v1152
    %1154 = vdwg.mxu0
    %1155 = vmatpush.msra.mxu0 %v987
    %1156 = vmatpush.msra.mxu0 %v984
    %1157 = vmatpush.msra.mxu0 %v981
    %1158 = vmatpush.msra.mxu0 %v978
    %1159 = vmatpush.msra.mxu0 %v975
    %1160 = vmatpush.msra.mxu0 %v972
    %1161 = vmatpush.msra.mxu0 %v969
    %1162 = vmatpush.msra.mxu0 %v966
    %1163 = vmatpush.msra.mxu0 %v963
    %1164 = vmatpush.msra.mxu0 %v960
    %1165 = vmatpush.msra.mxu0 %v957
    %1166 = vmatpush.msra.mxu0 %v954
    %1167 = vmatpush.msra.mxu0 %v951
    %1168 = vmatpush.msra.mxu0 %v948
    %1169 = vmatpush.msra.mxu0 %v945
    %1170 = vmatpush.msra.mxu0 %v942
    %1171 = vmatmul.f32.gmra.mxu0 %v44
    %v1172 = vpop.f32.mrf.mxu0
    %v1173 = vadd.f32 %v1153, %v1172
    %1174 = vdwg.mxu0
    %1175 = vmatpush.msra.mxu0 0.0
    %1176 = vmatpush.msra.mxu0 0.0
    %1177 = vmatpush.msra.mxu0 0.0
    %1178 = vmatpush.msra.mxu0 0.0
    %1179 = vmatpush.msra.mxu0 0.0
    %1180 = vmatpush.msra.mxu0 0.0
    %1181 = vmatpush.msra.mxu0 0.0
    %1182 = vmatpush.msra.mxu0 0.0
    %1183 = vmatpush.msra.mxu0 0.0
    %1184 = vmatpush.msra.mxu0 0.0
    %1185 = vmatpush.msra.mxu0 %v1013
    %1186 = vmatpush.msra.mxu0 %v1002
    %1187 = vmatpush.msra.mxu0 %v999
    %1188 = vmatpush.msra.mxu0 %v996
    %1189 = vmatpush.msra.mxu0 %v993
    %1190 = vmatpush.msra.mxu0 %v990
    %1191 = vmatmul.f32.gmra.mxu0 %v243
    %v1192 = vpop.f32.mrf.mxu0
    %v1193 = vadd.f32 %v1173, %v1192
    %1194 = vdwg.mxu0
    %s1195 = scalar_lea.vmem %s4, 1368
    %v1196 = vld [vmem:[%s1195] sm:$0xff]
    %v1197 = vld [vmem:[%s1195 + $0x8] sm:$0xf]
    %v1198 = vld [vmem:[%s1195 + $0xc] sm:$0xff]
    %v1199 = vld [vmem:[%s1195 + $0x14] sm:$0xf]
    %v1200 = vld [vmem:[%s1195 + $0x18] sm:$0xff]
    %v1201 = vld [vmem:[%s1195 + $0x20] sm:$0xf]
    %v1202 = vld [vmem:[%s1195 + $0x24] sm:$0xff]
    %v1203 = vld [vmem:[%s1195 + $0x2c] sm:$0xf]
    %v1204 = vld [vmem:[%s1195 + $0x30] sm:$0xff]
    %v1205 = vld [vmem:[%s1195 + $0x38] sm:$0xf]
    %v1206 = vld [vmem:[%s1195 + $0x3c] sm:$0xff]
    %v1207 = vld [vmem:[%s1195 + $0x44] sm:$0xf]
    %v1208 = vld [vmem:[%s1195 + $0x48] sm:$0xff]
    %v1209 = vld [vmem:[%s1195 + $0x50] sm:$0xf]
    %v1210 = vld [vmem:[%s1195 + $0x54] sm:$0xff]
    %v1211 = vld [vmem:[%s1195 + $0x5c] sm:$0xf]
    %v1212 = vld [vmem:[%s1195 + $0x60] sm:$0xff]
    %v1213 = vld [vmem:[%s1195 + $0x68] sm:$0xf]
    %v1214 = vld [vmem:[%s1195 + $0x6c] sm:$0xff]
    %v1215 = vld [vmem:[%s1195 + $0x74] sm:$0xf]
    %v1216 = vld [vmem:[%s1195 + $0x78] sm:$0xff]
    %v1217 = vld [vmem:[%s1195 + $0x80] sm:$0xf]
    %v1218 = vld [vmem:[%s1195 + $0x84] sm:$0xff]
    %v1219 = vld [vmem:[%s1195 + $0x8c] sm:$0xf]
    %v1220 = vld [vmem:[%s1195 + $0x90] sm:$0xff]
    %v1221 = vld [vmem:[%s1195 + $0x98] sm:$0xf]
    %v1222 = vld [vmem:[%s1195 + $0x9c] sm:$0xff]
    %v1223 = vld [vmem:[%s1195 + $0xa4] sm:$0xf]
    %v1224 = vld [vmem:[%s1195 + $0xa8] sm:$0xff]
    %v1225 = vld [vmem:[%s1195 + $0xb0] sm:$0xf]
    %v1226 = vld [vmem:[%s1195 + $0xb4] sm:$0xff]
    %v1227 = vld [vmem:[%s1195 + $0xbc] sm:$0xf]
    %v1228 = vld [vmem:[%s1195 + $0xc0] sm:$0xff]
    %v1229 = vld [vmem:[%s1195 + $0xc8] sm:$0xf]
    %v1230 = vld [vmem:[%s1195 + $0xcc] sm:$0xff]
    %v1231 = vld [vmem:[%s1195 + $0xd4] sm:$0xf]
    %v1232 = vld [vmem:[%s1195 + $0xd8] sm:$0xff]
    %v1233 = vld [vmem:[%s1195 + $0xe0] sm:$0xf]
    %v1234 = vld [vmem:[%s1195 + $0xe4] sm:$0xff]
    %v1235 = vld [vmem:[%s1195 + $0xec] sm:$0xf]
    %v1236 = vld [vmem:[%s1195 + $0xf0] sm:$0xff]
    %v1237 = vld [vmem:[%s1195 + $0xf8] sm:$0xf]
    %v1238 = vld [vmem:[%s1195 + $0xfc] sm:$0xff]
    %v1239 = vld [vmem:[%s1195 + $0x104] sm:$0xf]
    %v1240 = vld [vmem:[%s1195 + $0x108] sm:$0xff]
    %v1241 = vld [vmem:[%s1195 + $0x110] sm:$0xf]
    %v1242 = vld [vmem:[%s1195 + $0x114] sm:$0xff]
    %v1243 = vld [vmem:[%s1195 + $0x11c] sm:$0xf]
    %v1244 = vld [vmem:[%s1195 + $0x120] sm:$0xff]
    %v1245 = vld [vmem:[%s1195 + $0x128] sm:$0xf]
    %v1246 = vld [vmem:[%s1195 + $0x12c] sm:$0xff]
    %v1247 = vld [vmem:[%s1195 + $0x134] sm:$0xf]
    %v1248 = vld [vmem:[%s1195 + $0x138] sm:$0xff]
    %v1249 = vld [vmem:[%s1195 + $0x140] sm:$0xf]
    %v1250 = vld [vmem:[%s1195 + $0x144] sm:$0xff]
    %v1251 = vld [vmem:[%s1195 + $0x14c] sm:$0xf]
    %v1252 = vld [vmem:[%s1195 + $0x150] sm:$0xff]
    %v1253 = vld [vmem:[%s1195 + $0x158] sm:$0xf]
    %v1254 = vld [vmem:[%s1195 + $0x15c] sm:$0xff]
    %v1255 = vld [vmem:[%s1195 + $0x164] sm:$0xf]
    %v1256 = vld [vmem:[%s1195 + $0x168] sm:$0xff]
    %v1257 = vld [vmem:[%s1195 + $0x170] sm:$0xf]
    %v1258 = vld [vmem:[%s1195 + $0x174] sm:$0xff]
    %v1259 = vld [vmem:[%s1195 + $0x17c] sm:$0xf]
    %v1260 = vld [vmem:[%s1195 + $0x180] sm:$0xff]
    %v1261 = vld [vmem:[%s1195 + $0x188] sm:$0xf]
    %v1262 = vld [vmem:[%s1195 + $0x18c] sm:$0xff]
    %v1263 = vld [vmem:[%s1195 + $0x194] sm:$0xf]
    %v1264 = vld [vmem:[%s1195 + $0x198] sm:$0xff]
    %v1265 = vld [vmem:[%s1195 + $0x1a0] sm:$0xf]
    %v1266 = vld [vmem:[%s1195 + $0x1a4] sm:$0xff]
    %v1267 = vld [vmem:[%s1195 + $0x1ac] sm:$0xf]
    %v1268 = vld [vmem:[%s1195 + $0x1b0] sm:$0xff]
    %v1269 = vld [vmem:[%s1195 + $0x1b8] sm:$0xf]
    %v1270 = vld [vmem:[%s1195 + $0x1bc] sm:$0x33]
    %v1271 = vld [vmem:[%s1195 + $0x1c4] sm:$0x3]
    %v1272 = vunpack.c.l.bf16 %v1196
    %v1273 = vunpack.c.h.bf16 %v1196
    %v1274 = vunpack.c.l.bf16 %v1197
    %v1275 = vunpack.c.l.bf16 %v1198
    %v1276 = vunpack.c.h.bf16 %v1198
    %v1277 = vunpack.c.l.bf16 %v1199
    %v1278 = vunpack.c.l.bf16 %v1200
    %v1279 = vunpack.c.h.bf16 %v1200
    %v1280 = vunpack.c.l.bf16 %v1201
    %v1281 = vunpack.c.l.bf16 %v1202
    %v1282 = vunpack.c.h.bf16 %v1202
    %v1283 = vunpack.c.l.bf16 %v1203
    %v1284 = vunpack.c.l.bf16 %v1204
    %v1285 = vunpack.c.h.bf16 %v1204
    %v1286 = vunpack.c.l.bf16 %v1205
    %v1287 = vunpack.c.l.bf16 %v1206
    %v1288 = vunpack.c.h.bf16 %v1206
    %v1289 = vunpack.c.l.bf16 %v1207
    %v1290 = vunpack.c.l.bf16 %v1208
    %v1291 = vunpack.c.h.bf16 %v1208
    %v1292 = vunpack.c.l.bf16 %v1209
    %v1293 = vunpack.c.l.bf16 %v1210
    %v1294 = vunpack.c.h.bf16 %v1210
    %v1295 = vunpack.c.l.bf16 %v1211
    %v1296 = vunpack.c.l.bf16 %v1212
    %v1297 = vunpack.c.h.bf16 %v1212
    %v1298 = vunpack.c.l.bf16 %v1213
    %v1299 = vunpack.c.l.bf16 %v1214
    %v1300 = vunpack.c.h.bf16 %v1214
    %v1301 = vunpack.c.l.bf16 %v1215
    %v1302 = vunpack.c.l.bf16 %v1216
    %v1303 = vunpack.c.h.bf16 %v1216
    %v1304 = vunpack.c.l.bf16 %v1217
    %v1305 = vunpack.c.l.bf16 %v1218
    %v1306 = vunpack.c.h.bf16 %v1218
    %v1307 = vunpack.c.l.bf16 %v1219
    %v1308 = vunpack.c.l.bf16 %v1220
    %v1309 = vunpack.c.h.bf16 %v1220
    %v1310 = vunpack.c.l.bf16 %v1221
    %v1311 = vunpack.c.l.bf16 %v1222
    %v1312 = vunpack.c.h.bf16 %v1222
    %v1313 = vunpack.c.l.bf16 %v1223
    %v1314 = vunpack.c.l.bf16 %v1224
    %v1315 = vunpack.c.h.bf16 %v1224
    %v1316 = vunpack.c.l.bf16 %v1225
    %v1317 = vunpack.c.l.bf16 %v1226
    %v1318 = vunpack.c.h.bf16 %v1226
    %v1319 = vunpack.c.l.bf16 %v1227
    %v1320 = vunpack.c.l.bf16 %v1228
    %v1321 = vunpack.c.h.bf16 %v1228
    %v1322 = vunpack.c.l.bf16 %v1229
    %v1323 = vunpack.c.l.bf16 %v1230
    %v1324 = vunpack.c.h.bf16 %v1230
    %v1325 = vunpack.c.l.bf16 %v1231
    %v1326 = vunpack.c.l.bf16 %v1232
    %v1327 = vunpack.c.h.bf16 %v1232
    %v1328 = vunpack.c.l.bf16 %v1233
    %v1329 = vunpack.c.l.bf16 %v1234
    %v1330 = vunpack.c.h.bf16 %v1234
    %v1331 = vunpack.c.l.bf16 %v1235
    %v1332 = vunpack.c.l.bf16 %v1236
    %v1333 = vunpack.c.h.bf16 %v1236
    %v1334 = vunpack.c.l.bf16 %v1237
    %v1335 = vunpack.c.l.bf16 %v1238
    %v1336 = vunpack.c.h.bf16 %v1238
    %v1337 = vunpack.c.l.bf16 %v1239
    %v1338 = vunpack.c.l.bf16 %v1240
    %v1339 = vunpack.c.h.bf16 %v1240
    %v1340 = vunpack.c.l.bf16 %v1241
    %v1341 = vunpack.c.l.bf16 %v1242
    %v1342 = vunpack.c.h.bf16 %v1242
    %v1343 = vunpack.c.l.bf16 %v1243
    %v1344 = vunpack.c.l.bf16 %v1244
    %v1345 = vunpack.c.h.bf16 %v1244
    %v1346 = vunpack.c.l.bf16 %v1245
    %v1347 = vunpack.c.l.bf16 %v1246
    %v1348 = vunpack.c.h.bf16 %v1246
    %v1349 = vunpack.c.l.bf16 %v1247
    %v1350 = vunpack.c.l.bf16 %v1248
    %v1351 = vunpack.c.h.bf16 %v1248
    %v1352 = vunpack.c.l.bf16 %v1249
    %v1353 = vunpack.c.l.bf16 %v1250
    %v1354 = vunpack.c.h.bf16 %v1250
    %v1355 = vunpack.c.l.bf16 %v1251
    %v1356 = vunpack.c.l.bf16 %v1252
    %v1357 = vunpack.c.h.bf16 %v1252
    %v1358 = vunpack.c.l.bf16 %v1253
    %v1359 = vunpack.c.l.bf16 %v1254
    %v1360 = vunpack.c.h.bf16 %v1254
    %v1361 = vunpack.c.l.bf16 %v1255
    %v1362 = vunpack.c.l.bf16 %v1256
    %v1363 = vunpack.c.h.bf16 %v1256
    %v1364 = vunpack.c.l.bf16 %v1257
    %v1365 = vunpack.c.l.bf16 %v1258
    %v1366 = vunpack.c.h.bf16 %v1258
    %v1367 = vunpack.c.l.bf16 %v1259
    %v1368 = vunpack.c.l.bf16 %v1260
    %v1369 = vunpack.c.h.bf16 %v1260
    %v1370 = vunpack.c.l.bf16 %v1261
    %v1371 = vunpack.c.l.bf16 %v1262
    %v1372 = vunpack.c.h.bf16 %v1262
    %v1373 = vunpack.c.l.bf16 %v1263
    %v1374 = vunpack.c.l.bf16 %v1264
    %v1375 = vunpack.c.h.bf16 %v1264
    %v1376 = vunpack.c.l.bf16 %v1265
    %v1377 = vunpack.c.l.bf16 %v1266
    %v1378 = vunpack.c.h.bf16 %v1266
    %v1379 = vunpack.c.l.bf16 %v1267
    %v1380 = vunpack.c.l.bf16 %v1268
    %v1381 = vunpack.c.h.bf16 %v1268
    %v1382 = vunpack.c.l.bf16 %v1269
    %v1383 = vunpack.c.l.bf16 %v1270
    %v1384 = vunpack.c.h.bf16 %v1270
    %v1385 = vunpack.c.l.bf16 %v1271
    %v1387 = vsel %vm245, %v1383, 0
    %v1390 = vsel %vm245, %v1384, 0
    %v1393 = vsel %vm245, %v1385, 0
    %1395 = vmatpush.msra.mxu0 %v1317
    %1396 = vmatpush.msra.mxu0 %v1314
    %1397 = vmatpush.msra.mxu0 %v1311
    %1398 = vmatpush.msra.mxu0 %v1308
    %1399 = vmatpush.msra.mxu0 %v1305
    %1400 = vmatpush.msra.mxu0 %v1302
    %1401 = vmatpush.msra.mxu0 %v1299
    %1402 = vmatpush.msra.mxu0 %v1296
    %1403 = vmatpush.msra.mxu0 %v1293
    %1404 = vmatpush.msra.mxu0 %v1290
    %1405 = vmatpush.msra.mxu0 %v1287
    %1406 = vmatpush.msra.mxu0 %v1284
    %1407 = vmatpush.msra.mxu0 %v1281
    %1408 = vmatpush.msra.mxu0 %v1278
    %1409 = vmatpush.msra.mxu0 %v1275
    %1410 = vmatpush.msra.mxu0 %v1272
    %1411 = vmatmul.f32.gmra.mxu0 %v43
    %v1412 = vpop.f32.mrf.mxu0
    %v1413 = vadd.f32 0.0, %v1412
    %1414 = vdwg.mxu0
    %1415 = vmatpush.msra.mxu0 %v1365
    %1416 = vmatpush.msra.mxu0 %v1362
    %1417 = vmatpush.msra.mxu0 %v1359
    %1418 = vmatpush.msra.mxu0 %v1356
    %1419 = vmatpush.msra.mxu0 %v1353
    %1420 = vmatpush.msra.mxu0 %v1350
    %1421 = vmatpush.msra.mxu0 %v1347
    %1422 = vmatpush.msra.mxu0 %v1344
    %1423 = vmatpush.msra.mxu0 %v1341
    %1424 = vmatpush.msra.mxu0 %v1338
    %1425 = vmatpush.msra.mxu0 %v1335
    %1426 = vmatpush.msra.mxu0 %v1332
    %1427 = vmatpush.msra.mxu0 %v1329
    %1428 = vmatpush.msra.mxu0 %v1326
    %1429 = vmatpush.msra.mxu0 %v1323
    %1430 = vmatpush.msra.mxu0 %v1320
    %1431 = vmatmul.f32.gmra.mxu0 %v44
    %v1432 = vpop.f32.mrf.mxu0
    %v1433 = vadd.f32 %v1413, %v1432
    %1434 = vdwg.mxu0
    %1435 = vmatpush.msra.mxu0 0.0
    %1436 = vmatpush.msra.mxu0 0.0
    %1437 = vmatpush.msra.mxu0 0.0
    %1438 = vmatpush.msra.mxu0 0.0
    %1439 = vmatpush.msra.mxu0 0.0
    %1440 = vmatpush.msra.mxu0 0.0
    %1441 = vmatpush.msra.mxu0 0.0
    %1442 = vmatpush.msra.mxu0 0.0
    %1443 = vmatpush.msra.mxu0 0.0
    %1444 = vmatpush.msra.mxu0 0.0
    %1445 = vmatpush.msra.mxu0 %v1387
    %1446 = vmatpush.msra.mxu0 %v1380
    %1447 = vmatpush.msra.mxu0 %v1377
    %1448 = vmatpush.msra.mxu0 %v1374
    %1449 = vmatpush.msra.mxu0 %v1371
    %1450 = vmatpush.msra.mxu0 %v1368
    %1451 = vmatmul.f32.gmra.mxu0 %v243
    %v1452 = vpop.f32.mrf.mxu0
    %v1453 = vadd.f32 %v1433, %v1452
    %1454 = vdwg.mxu0
    %1455 = vmatpush.msra.mxu0 %v1318
    %1456 = vmatpush.msra.mxu0 %v1315
    %1457 = vmatpush.msra.mxu0 %v1312
    %1458 = vmatpush.msra.mxu0 %v1309
    %1459 = vmatpush.msra.mxu0 %v1306
    %1460 = vmatpush.msra.mxu0 %v1303
    %1461 = vmatpush.msra.mxu0 %v1300
    %1462 = vmatpush.msra.mxu0 %v1297
    %1463 = vmatpush.msra.mxu0 %v1294
    %1464 = vmatpush.msra.mxu0 %v1291
    %1465 = vmatpush.msra.mxu0 %v1288
    %1466 = vmatpush.msra.mxu0 %v1285
    %1467 = vmatpush.msra.mxu0 %v1282
    %1468 = vmatpush.msra.mxu0 %v1279
    %1469 = vmatpush.msra.mxu0 %v1276
    %1470 = vmatpush.msra.mxu0 %v1273
    %1471 = vmatmul.f32.gmra.mxu0 %v43
    %v1472 = vpop.f32.mrf.mxu0
    %v1473 = vadd.f32 0.0, %v1472
    %1474 = vdwg.mxu0
    %1475 = vmatpush.msra.mxu0 %v1366
    %1476 = vmatpush.msra.mxu0 %v1363
    %1477 = vmatpush.msra.mxu0 %v1360
    %1478 = vmatpush.msra.mxu0 %v1357
    %1479 = vmatpush.msra.mxu0 %v1354
    %1480 = vmatpush.msra.mxu0 %v1351
    %1481 = vmatpush.msra.mxu0 %v1348
    %1482 = vmatpush.msra.mxu0 %v1345
    %1483 = vmatpush.msra.mxu0 %v1342
    %1484 = vmatpush.msra.mxu0 %v1339
    %1485 = vmatpush.msra.mxu0 %v1336
    %1486 = vmatpush.msra.mxu0 %v1333
    %1487 = vmatpush.msra.mxu0 %v1330
    %1488 = vmatpush.msra.mxu0 %v1327
    %1489 = vmatpush.msra.mxu0 %v1324
    %1490 = vmatpush.msra.mxu0 %v1321
    %1491 = vmatmul.f32.gmra.mxu0 %v44
    %v1492 = vpop.f32.mrf.mxu0
    %v1493 = vadd.f32 %v1473, %v1492
    %1494 = vdwg.mxu0
    %1495 = vmatpush.msra.mxu0 0.0
    %1496 = vmatpush.msra.mxu0 0.0
    %1497 = vmatpush.msra.mxu0 0.0
    %1498 = vmatpush.msra.mxu0 0.0
    %1499 = vmatpush.msra.mxu0 0.0
    %1500 = vmatpush.msra.mxu0 0.0
    %1501 = vmatpush.msra.mxu0 0.0
    %1502 = vmatpush.msra.mxu0 0.0
    %1503 = vmatpush.msra.mxu0 0.0
    %1504 = vmatpush.msra.mxu0 0.0
    %1505 = vmatpush.msra.mxu0 %v1390
    %1506 = vmatpush.msra.mxu0 %v1381
    %1507 = vmatpush.msra.mxu0 %v1378
    %1508 = vmatpush.msra.mxu0 %v1375
    %1509 = vmatpush.msra.mxu0 %v1372
    %1510 = vmatpush.msra.mxu0 %v1369
    %1511 = vmatmul.f32.gmra.mxu0 %v243
    %v1512 = vpop.f32.mrf.mxu0
    %v1513 = vadd.f32 %v1493, %v1512
    %1514 = vdwg.mxu0
    %1515 = vmatpush.msra.mxu0 %v1319
    %1516 = vmatpush.msra.mxu0 %v1316
    %1517 = vmatpush.msra.mxu0 %v1313
    %1518 = vmatpush.msra.mxu0 %v1310
    %1519 = vmatpush.msra.mxu0 %v1307
    %1520 = vmatpush.msra.mxu0 %v1304
    %1521 = vmatpush.msra.mxu0 %v1301
    %1522 = vmatpush.msra.mxu0 %v1298
    %1523 = vmatpush.msra.mxu0 %v1295
    %1524 = vmatpush.msra.mxu0 %v1292
    %1525 = vmatpush.msra.mxu0 %v1289
    %1526 = vmatpush.msra.mxu0 %v1286
    %1527 = vmatpush.msra.mxu0 %v1283
    %1528 = vmatpush.msra.mxu0 %v1280
    %1529 = vmatpush.msra.mxu0 %v1277
    %1530 = vmatpush.msra.mxu0 %v1274
    %1531 = vmatmul.f32.gmra.mxu0 %v43
    %v1532 = vpop.f32.mrf.mxu0
    %v1533 = vadd.f32 0.0, %v1532
    %1534 = vdwg.mxu0
    %1535 = vmatpush.msra.mxu0 %v1367
    %1536 = vmatpush.msra.mxu0 %v1364
    %1537 = vmatpush.msra.mxu0 %v1361
    %1538 = vmatpush.msra.mxu0 %v1358
    %1539 = vmatpush.msra.mxu0 %v1355
    %1540 = vmatpush.msra.mxu0 %v1352
    %1541 = vmatpush.msra.mxu0 %v1349
    %1542 = vmatpush.msra.mxu0 %v1346
    %1543 = vmatpush.msra.mxu0 %v1343
    %1544 = vmatpush.msra.mxu0 %v1340
    %1545 = vmatpush.msra.mxu0 %v1337
    %1546 = vmatpush.msra.mxu0 %v1334
    %1547 = vmatpush.msra.mxu0 %v1331
    %1548 = vmatpush.msra.mxu0 %v1328
    %1549 = vmatpush.msra.mxu0 %v1325
    %1550 = vmatpush.msra.mxu0 %v1322
    %1551 = vmatmul.f32.gmra.mxu0 %v44
    %v1552 = vpop.f32.mrf.mxu0
    %v1553 = vadd.f32 %v1533, %v1552
    %1554 = vdwg.mxu0
    %1555 = vmatpush.msra.mxu0 0.0
    %1556 = vmatpush.msra.mxu0 0.0
    %1557 = vmatpush.msra.mxu0 0.0
    %1558 = vmatpush.msra.mxu0 0.0
    %1559 = vmatpush.msra.mxu0 0.0
    %1560 = vmatpush.msra.mxu0 0.0
    %1561 = vmatpush.msra.mxu0 0.0
    %1562 = vmatpush.msra.mxu0 0.0
    %1563 = vmatpush.msra.mxu0 0.0
    %1564 = vmatpush.msra.mxu0 0.0
    %1565 = vmatpush.msra.mxu0 %v1393
    %1566 = vmatpush.msra.mxu0 %v1382
    %1567 = vmatpush.msra.mxu0 %v1379
    %1568 = vmatpush.msra.mxu0 %v1376
    %1569 = vmatpush.msra.mxu0 %v1373
    %1570 = vmatpush.msra.mxu0 %v1370
    %1571 = vmatmul.f32.gmra.mxu0 %v243
    %v1572 = vpop.f32.mrf.mxu0
    %v1573 = vadd.f32 %v1553, %v1572
    %1574 = vdwg.mxu0
    %v1575 = vld [vmem:[%s5] sm:$0xff]
    %v1576 = vld [vmem:[%s5 + $0x8] sm:$0xff]
    %v1577 = vld [vmem:[%s5 + $0x10] sm:$0xff]
    %v1578 = vld [vmem:[%s5 + $0x18] sm:$0xff]
    %v1579 = vld [vmem:[%s5 + $0x20] sm:$0xff]
    %v1580 = vld [vmem:[%s5 + $0x28] sm:$0xff]
    %v1581 = vld [vmem:[%s5 + $0x30] sm:$0xff]
    %v1582 = vld [vmem:[%s5 + $0x38] sm:$0xff]
    %v1583 = vld [vmem:[%s5 + $0x40] sm:$0xff]
    %v1584 = vld [vmem:[%s5 + $0x48] sm:$0xff]
    %v1585 = vld [vmem:[%s5 + $0x50] sm:$0xff]
    %v1586 = vld [vmem:[%s5 + $0x58] sm:$0xff]
    %v1587 = vld [vmem:[%s5 + $0x60] sm:$0xff]
    %v1588 = vld [vmem:[%s5 + $0x68] sm:$0xff]
    %v1589 = vld [vmem:[%s5 + $0x70] sm:$0xff]
    %v1590 = vld [vmem:[%s5 + $0x78] sm:$0xff]
    %v1591 = vld [vmem:[%s5 + $0x80] sm:$0xff]
    %v1592 = vld [vmem:[%s5 + $0x88] sm:$0xff]
    %v1593 = vld [vmem:[%s5 + $0x90] sm:$0xff]
    %v1594 = vld [vmem:[%s5 + $0x98] sm:$0xff]
    %v1595 = vld [vmem:[%s5 + $0xa0] sm:$0xff]
    %v1596 = vld [vmem:[%s5 + $0xa8] sm:$0xff]
    %v1597 = vld [vmem:[%s5 + $0xb0] sm:$0xff]
    %v1598 = vld [vmem:[%s5 + $0xb8] sm:$0xff]
    %v1599 = vld [vmem:[%s5 + $0xc0] sm:$0xff]
    %v1600 = vld [vmem:[%s5 + $0xc8] sm:$0xff]
    %v1601 = vld [vmem:[%s5 + $0xd0] sm:$0xff]
    %v1602 = vld [vmem:[%s5 + $0xd8] sm:$0xff]
    %v1603 = vld [vmem:[%s5 + $0xe0] sm:$0xff]
    %v1604 = vld [vmem:[%s5 + $0xe8] sm:$0xff]
    %v1605 = vld [vmem:[%s5 + $0xf0] sm:$0xff]
    %v1606 = vld [vmem:[%s5 + $0xf8] sm:$0xff]
    %v1607 = vld [vmem:[%s5 + $0x100] sm:$0xff]
    %v1608 = vld [vmem:[%s5 + $0x108] sm:$0xff]
    %v1609 = vld [vmem:[%s5 + $0x110] sm:$0xff]
    %v1610 = vld [vmem:[%s5 + $0x118] sm:$0xff]
    %v1611 = vld [vmem:[%s5 + $0x120] sm:$0xff]
    %v1612 = vld [vmem:[%s5 + $0x128] sm:$0xf]
    %v1614 = vsel %vm245, %v1612, 0
    %1616 = vmatpush.msra.mxu0 %v1590
    %1617 = vmatpush.msra.mxu0 %v1589
    %1618 = vmatpush.msra.mxu0 %v1588
    %1619 = vmatpush.msra.mxu0 %v1587
    %1620 = vmatpush.msra.mxu0 %v1586
    %1621 = vmatpush.msra.mxu0 %v1585
    %1622 = vmatpush.msra.mxu0 %v1584
    %1623 = vmatpush.msra.mxu0 %v1583
    %1624 = vmatpush.msra.mxu0 %v1582
    %1625 = vmatpush.msra.mxu0 %v1581
    %1626 = vmatpush.msra.mxu0 %v1580
    %1627 = vmatpush.msra.mxu0 %v1579
    %1628 = vmatpush.msra.mxu0 %v1578
    %1629 = vmatpush.msra.mxu0 %v1577
    %1630 = vmatpush.msra.mxu0 %v1576
    %1631 = vmatpush.msra.mxu0 %v1575
    %1632 = vmatmul.f32.gmra.mxu0 %v43
    %v1633 = vpop.f32.mrf.mxu0
    %v1634 = vadd.f32 0.0, %v1633
    %1635 = vdwg.mxu0
    %1636 = vmatpush.msra.mxu0 %v1606
    %1637 = vmatpush.msra.mxu0 %v1605
    %1638 = vmatpush.msra.mxu0 %v1604
    %1639 = vmatpush.msra.mxu0 %v1603
    %1640 = vmatpush.msra.mxu0 %v1602
    %1641 = vmatpush.msra.mxu0 %v1601
    %1642 = vmatpush.msra.mxu0 %v1600
    %1643 = vmatpush.msra.mxu0 %v1599
    %1644 = vmatpush.msra.mxu0 %v1598
    %1645 = vmatpush.msra.mxu0 %v1597
    %1646 = vmatpush.msra.mxu0 %v1596
    %1647 = vmatpush.msra.mxu0 %v1595
    %1648 = vmatpush.msra.mxu0 %v1594
    %1649 = vmatpush.msra.mxu0 %v1593
    %1650 = vmatpush.msra.mxu0 %v1592
    %1651 = vmatpush.msra.mxu0 %v1591
    %1652 = vmatmul.f32.gmra.mxu0 %v44
    %v1653 = vpop.f32.mrf.mxu0
    %v1654 = vadd.f32 %v1634, %v1653
    %1655 = vdwg.mxu0
    %1656 = vmatpush.msra.mxu0 0.0
    %1657 = vmatpush.msra.mxu0 0.0
    %1658 = vmatpush.msra.mxu0 0.0
    %1659 = vmatpush.msra.mxu0 0.0
    %1660 = vmatpush.msra.mxu0 0.0
    %1661 = vmatpush.msra.mxu0 0.0
    %1662 = vmatpush.msra.mxu0 0.0
    %1663 = vmatpush.msra.mxu0 0.0
    %1664 = vmatpush.msra.mxu0 0.0
    %1665 = vmatpush.msra.mxu0 0.0
    %1666 = vmatpush.msra.mxu0 %v1614
    %1667 = vmatpush.msra.mxu0 %v1611
    %1668 = vmatpush.msra.mxu0 %v1610
    %1669 = vmatpush.msra.mxu0 %v1609
    %1670 = vmatpush.msra.mxu0 %v1608
    %1671 = vmatpush.msra.mxu0 %v1607
    %1672 = vmatmul.f32.gmra.mxu0 %v243
    %v1673 = vpop.f32.mrf.mxu0
    %v1674 = vadd.f32 %v1654, %v1673
    %1675 = vdwg.mxu0
    %v1676 = vld [vmem:[%s6] sm:$0xff]
    %v1677 = vld [vmem:[%s6 + $0x8] sm:$0xff]
    %v1678 = vld [vmem:[%s6 + $0x10] sm:$0xff]
    %v1679 = vld [vmem:[%s6 + $0x18] sm:$0xff]
    %v1680 = vld [vmem:[%s6 + $0x20] sm:$0xff]
    %v1681 = vld [vmem:[%s6 + $0x28] sm:$0xff]
    %v1682 = vld [vmem:[%s6 + $0x30] sm:$0xff]
    %v1683 = vld [vmem:[%s6 + $0x38] sm:$0xff]
    %v1684 = vld [vmem:[%s6 + $0x40] sm:$0xff]
    %v1685 = vld [vmem:[%s6 + $0x48] sm:$0xff]
    %v1686 = vld [vmem:[%s6 + $0x50] sm:$0xff]
    %v1687 = vld [vmem:[%s6 + $0x58] sm:$0xff]
    %v1688 = vld [vmem:[%s6 + $0x60] sm:$0xff]
    %v1689 = vld [vmem:[%s6 + $0x68] sm:$0xff]
    %v1690 = vld [vmem:[%s6 + $0x70] sm:$0xff]
    %v1691 = vld [vmem:[%s6 + $0x78] sm:$0xff]
    %v1692 = vld [vmem:[%s6 + $0x80] sm:$0xff]
    %v1693 = vld [vmem:[%s6 + $0x88] sm:$0xff]
    %v1694 = vld [vmem:[%s6 + $0x90] sm:$0xff]
    %v1695 = vld [vmem:[%s6 + $0x98] sm:$0xff]
    %v1696 = vld [vmem:[%s6 + $0xa0] sm:$0xff]
    %v1697 = vld [vmem:[%s6 + $0xa8] sm:$0xff]
    %v1698 = vld [vmem:[%s6 + $0xb0] sm:$0xff]
    %v1699 = vld [vmem:[%s6 + $0xb8] sm:$0xff]
    %v1700 = vld [vmem:[%s6 + $0xc0] sm:$0xff]
    %v1701 = vld [vmem:[%s6 + $0xc8] sm:$0xff]
    %v1702 = vld [vmem:[%s6 + $0xd0] sm:$0xff]
    %v1703 = vld [vmem:[%s6 + $0xd8] sm:$0xff]
    %v1704 = vld [vmem:[%s6 + $0xe0] sm:$0xff]
    %v1705 = vld [vmem:[%s6 + $0xe8] sm:$0xff]
    %v1706 = vld [vmem:[%s6 + $0xf0] sm:$0xff]
    %v1707 = vld [vmem:[%s6 + $0xf8] sm:$0xff]
    %v1708 = vld [vmem:[%s6 + $0x100] sm:$0xff]
    %v1709 = vld [vmem:[%s6 + $0x108] sm:$0xff]
    %v1710 = vld [vmem:[%s6 + $0x110] sm:$0xff]
    %v1711 = vld [vmem:[%s6 + $0x118] sm:$0xff]
    %v1712 = vld [vmem:[%s6 + $0x120] sm:$0xff]
    %v1713 = vld [vmem:[%s6 + $0x128] sm:$0xf]
    %v1715 = vsel %vm245, %v1713, 0
    %1717 = vmatpush.msra.mxu0 %v1691
    %1718 = vmatpush.msra.mxu0 %v1690
    %1719 = vmatpush.msra.mxu0 %v1689
    %1720 = vmatpush.msra.mxu0 %v1688
    %1721 = vmatpush.msra.mxu0 %v1687
    %1722 = vmatpush.msra.mxu0 %v1686
    %1723 = vmatpush.msra.mxu0 %v1685
    %1724 = vmatpush.msra.mxu0 %v1684
    %1725 = vmatpush.msra.mxu0 %v1683
    %1726 = vmatpush.msra.mxu0 %v1682
    %1727 = vmatpush.msra.mxu0 %v1681
    %1728 = vmatpush.msra.mxu0 %v1680
    %1729 = vmatpush.msra.mxu0 %v1679
    %1730 = vmatpush.msra.mxu0 %v1678
    %1731 = vmatpush.msra.mxu0 %v1677
    %1732 = vmatpush.msra.mxu0 %v1676
    %1733 = vmatmul.f32.gmra.mxu0 %v43
    %v1734 = vpop.f32.mrf.mxu0
    %v1735 = vadd.f32 0.0, %v1734
    %1736 = vdwg.mxu0
    %1737 = vmatpush.msra.mxu0 %v1707
    %1738 = vmatpush.msra.mxu0 %v1706
    %1739 = vmatpush.msra.mxu0 %v1705
    %1740 = vmatpush.msra.mxu0 %v1704
    %1741 = vmatpush.msra.mxu0 %v1703
    %1742 = vmatpush.msra.mxu0 %v1702
    %1743 = vmatpush.msra.mxu0 %v1701
    %1744 = vmatpush.msra.mxu0 %v1700
    %1745 = vmatpush.msra.mxu0 %v1699
    %1746 = vmatpush.msra.mxu0 %v1698
    %1747 = vmatpush.msra.mxu0 %v1697
    %1748 = vmatpush.msra.mxu0 %v1696
    %1749 = vmatpush.msra.mxu0 %v1695
    %1750 = vmatpush.msra.mxu0 %v1694
    %1751 = vmatpush.msra.mxu0 %v1693
    %1752 = vmatpush.msra.mxu0 %v1692
    %1753 = vmatmul.f32.gmra.mxu0 %v44
    %v1754 = vpop.f32.mrf.mxu0
    %v1755 = vadd.f32 %v1735, %v1754
    %1756 = vdwg.mxu0
    %1757 = vmatpush.msra.mxu0 0.0
    %1758 = vmatpush.msra.mxu0 0.0
    %1759 = vmatpush.msra.mxu0 0.0
    %1760 = vmatpush.msra.mxu0 0.0
    %1761 = vmatpush.msra.mxu0 0.0
    %1762 = vmatpush.msra.mxu0 0.0
    %1763 = vmatpush.msra.mxu0 0.0
    %1764 = vmatpush.msra.mxu0 0.0
    %1765 = vmatpush.msra.mxu0 0.0
    %1766 = vmatpush.msra.mxu0 0.0
    %1767 = vmatpush.msra.mxu0 %v1715
    %1768 = vmatpush.msra.mxu0 %v1712
    %1769 = vmatpush.msra.mxu0 %v1711
    %1770 = vmatpush.msra.mxu0 %v1710
    %1771 = vmatpush.msra.mxu0 %v1709
    %1772 = vmatpush.msra.mxu0 %v1708
    %1773 = vmatmul.f32.gmra.mxu0 %v243
    %v1774 = vpop.f32.mrf.mxu0
    %v1775 = vadd.f32 %v1755, %v1774
    %1776 = vdwg.mxu0
    %1778 = vset.pattern.permute.xlu0 0
    %1779 = vperm.xlu0 %1778, %v1775
    %v1780 = vpop.permute.xlu0 %1779
    %1783 = vset.pattern.permute.xlu0 0
    %1784 = vperm.xlu0 %1783, %v1674
    %v1785 = vpop.permute.xlu0 %1784
    %v1786 = vlaneseq
    %v1787 = vand.u32 %v1786, 127
    %v1788 = vperm.slane %v1785, %v1787
    %vm1789 = vcmask 1042434
    %v1790 = vsel %vm1789, %v1788, %v1788
    %vm1791 = vcmask 1043459
    %v1792 = vsel %vm1791, %v1788, %v1790
    %vm1793 = vcmask 1044484
    %v1794 = vsel %vm1793, %v1788, %v1792
    %vm1795 = vcmask 1045509
    %v1796 = vsel %vm1795, %v1788, %v1794
    %vm1797 = vcmask 1046534
    %v1798 = vsel %vm1797, %v1788, %v1796
    %vm1799 = vcmask 1047559
    %v1800 = vsel %vm1799, %v1788, %v1798
    %v1802 = vadd.f32 %v1780, %v1800
    %1803 = vset.pattern.permute.xlu0 1
    %1804 = vperm.xlu0 %1803, %v1775
    %v1805 = vpop.permute.xlu0 %1804
    %1807 = vset.pattern.permute.xlu0 1
    %1808 = vperm.xlu0 %1807, %v1674
    %v1809 = vpop.permute.xlu0 %1808
    %v1810 = vperm.slane %v1809, %v1787
    %v1811 = vsel %vm1789, %v1810, %v1810
    %v1812 = vsel %vm1791, %v1810, %v1811
    %v1813 = vsel %vm1793, %v1810, %v1812
    %v1814 = vsel %vm1795, %v1810, %v1813
    %v1815 = vsel %vm1797, %v1810, %v1814
    %v1816 = vsel %vm1799, %v1810, %v1815
    %v1818 = vadd.f32 %v1805, %v1816
    %1819 = vset.pattern.permute.xlu0 2
    %1820 = vperm.xlu0 %1819, %v1775
    %v1821 = vpop.permute.xlu0 %1820
    %1823 = vset.pattern.permute.xlu0 2
    %1824 = vperm.xlu0 %1823, %v1674
    %v1825 = vpop.permute.xlu0 %1824
    %v1826 = vperm.slane %v1825, %v1787
    %v1827 = vsel %vm1789, %v1826, %v1826
    %v1828 = vsel %vm1791, %v1826, %v1827
    %v1829 = vsel %vm1793, %v1826, %v1828
    %v1830 = vsel %vm1795, %v1826, %v1829
    %v1831 = vsel %vm1797, %v1826, %v1830
    %v1832 = vsel %vm1799, %v1826, %v1831
    %v1834 = vadd.f32 %v1821, %v1832
    %1835 = vset.pattern.permute.xlu0 3
    %1836 = vperm.xlu0 %1835, %v1775
    %v1837 = vpop.permute.xlu0 %1836
    %1839 = vset.pattern.permute.xlu0 3
    %1840 = vperm.xlu0 %1839, %v1674
    %v1841 = vpop.permute.xlu0 %1840
    %v1842 = vperm.slane %v1841, %v1787
    %v1843 = vsel %vm1789, %v1842, %v1842
    %v1844 = vsel %vm1791, %v1842, %v1843
    %v1845 = vsel %vm1793, %v1842, %v1844
    %v1846 = vsel %vm1795, %v1842, %v1845
    %v1847 = vsel %vm1797, %v1842, %v1846
    %v1848 = vsel %vm1799, %v1842, %v1847
    %v1850 = vadd.f32 %v1837, %v1848
    %vm1851 = vcmp.gt.f32.partialorder %v49, 0.0
    %vm1852 = vcmp.gt.f32.partialorder %v1802, 0.0
    %vm1853 = vcmp.gt.f32.partialorder %v1818, 0.0
    %vm1854 = vcmp.gt.f32.partialorder %v1834, 0.0
    %vm1855 = vcmp.gt.f32.partialorder %v1850, 0.0
    %v1856 = vmul.f32 %v1802, 0.2
    %v1857 = vmul.f32 %v1818, 0.2
    %v1858 = vmul.f32 %v1834, 0.2
    %v1859 = vmul.f32 %v1850, 0.2
    %v1860 = vsel %vm1852, %v1802, %v1856
    %v1861 = vsel %vm1853, %v1818, %v1857
    %v1862 = vsel %vm1854, %v1834, %v1858
    %v1863 = vsel %vm1855, %v1850, %v1859
    %v1864 = vsel %vm1851, %v1860, -1e+30
    %v1865 = vsel %vm1851, %v1861, -1e+30
    %v1866 = vsel %vm1851, %v1862, -1e+30
    %v1867 = vsel %vm1851, %v1863, -1e+30
    %vm1868 = vcmask 64512
    %v1869 = vsel %vm1868, %v1864, -inf
    %1870 = vmax.xlane.f32.xlu0 %v1869
    %v1871 = vpop.xlane.xlu0 %1870
    %v1872 = vsel %vm1868, %v1865, -inf
    %1873 = vmax.xlane.f32.xlu0 %v1872
    %v1874 = vpop.xlane.xlu0 %1873
    %v1875 = vsel %vm1868, %v1866, -inf
    %1876 = vmax.xlane.f32.xlu0 %v1875
    %v1877 = vpop.xlane.xlu0 %1876
    %v1878 = vsel %vm1868, %v1867, -inf
    %1879 = vmax.xlane.f32.xlu0 %v1878
    %v1880 = vpop.xlane.xlu0 %1879
    %v1881 = vsub.f32 %v1864, %v1871
    %v1882 = vsub.f32 %v1865, %v1874
    %v1883 = vsub.f32 %v1866, %v1877
    %v1884 = vsub.f32 %v1867, %v1880
    %v1885 = vmul.f32 %v1881, 1.442695
    %v1886 = vpow.pop %v1885
    %v1887 = vmul.f32 %v1882, 1.442695
    %v1888 = vpow.pop %v1887
    %v1889 = vmul.f32 %v1883, 1.442695
    %v1890 = vpow.pop %v1889
    %v1891 = vmul.f32 %v1884, 1.442695
    %v1892 = vpow.pop %v1891
    %v1893 = vsel %vm1868, %v1886, 0.0
    %1894 = vadd.xlane.f32.xlu0 %v1893
    %v1895 = vpop.xlane.xlu0 %1894
    %v1896 = vsel %vm1868, %v1888, 0.0
    %1897 = vadd.xlane.f32.xlu0 %v1896
    %v1898 = vpop.xlane.xlu0 %1897
    %v1899 = vsel %vm1868, %v1890, 0.0
    %1900 = vadd.xlane.f32.xlu0 %v1899
    %v1901 = vpop.xlane.xlu0 %1900
    %v1902 = vsel %vm1868, %v1892, 0.0
    %1903 = vadd.xlane.f32.xlu0 %v1902
    %v1904 = vpop.xlane.xlu0 %1903
    %v1905 = vrcp.pop %v1895
    %v1906 = vmul.f32 %v1895, %v1905
    %v1907 = vsub.f32 1.0, %v1906
    %v1908 = vmul.f32 %v1905, %v1907
    %v1909 = vadd.f32 %v1905, %v1908
    %vm1910 = vweird.f32 %v1895
    %vm1911 = vweird.f32 %v1905
    %vm1912 = vmor %vm1910, %vm1911
    %v1913 = vsel %vm1912, %v1905, %v1909
    %v1914 = vand.u32 2147483647, %v1895
    %vm1915 = vcmp.eq.f32.partialorder %v1914, 8.507059e+37
    %v1916 = vand.u32 %v1895, 2147483648
    %v1917 = vor.u32 1.1754944e-38, %v1916
    %v1918 = vsel %vm1915, %v1917, %v1913
    %v1919 = vrcp.pop %v1898
    %v1920 = vmul.f32 %v1898, %v1919
    %v1921 = vsub.f32 1.0, %v1920
    %v1922 = vmul.f32 %v1919, %v1921
    %v1923 = vadd.f32 %v1919, %v1922
    %vm1924 = vweird.f32 %v1898
    %vm1925 = vweird.f32 %v1919
    %vm1926 = vmor %vm1924, %vm1925
    %v1927 = vsel %vm1926, %v1919, %v1923
    %v1928 = vand.u32 2147483647, %v1898
    %vm1929 = vcmp.eq.f32.partialorder %v1928, 8.507059e+37
    %v1930 = vand.u32 %v1898, 2147483648
    %v1931 = vor.u32 1.1754944e-38, %v1930
    %v1932 = vsel %vm1929, %v1931, %v1927
    %v1933 = vrcp.pop %v1901
    %v1934 = vmul.f32 %v1901, %v1933
    %v1935 = vsub.f32 1.0, %v1934
    %v1936 = vmul.f32 %v1933, %v1935
    %v1937 = vadd.f32 %v1933, %v1936
    %vm1938 = vweird.f32 %v1901
    %vm1939 = vweird.f32 %v1933
    %vm1940 = vmor %vm1938, %vm1939
    %v1941 = vsel %vm1940, %v1933, %v1937
    %v1942 = vand.u32 2147483647, %v1901
    %vm1943 = vcmp.eq.f32.partialorder %v1942, 8.507059e+37
    %v1944 = vand.u32 %v1901, 2147483648
    %v1945 = vor.u32 1.1754944e-38, %v1944
    %v1946 = vsel %vm1943, %v1945, %v1941
    %v1947 = vrcp.pop %v1904
    %v1948 = vmul.f32 %v1904, %v1947
    %v1949 = vsub.f32 1.0, %v1948
    %v1950 = vmul.f32 %v1947, %v1949
    %v1951 = vadd.f32 %v1947, %v1950
    %vm1952 = vweird.f32 %v1904
    %vm1953 = vweird.f32 %v1947
    %vm1954 = vmor %vm1952, %vm1953
    %v1955 = vsel %vm1954, %v1947, %v1951
    %v1956 = vand.u32 2147483647, %v1904
    %vm1957 = vcmp.eq.f32.partialorder %v1956, 8.507059e+37
    %v1958 = vand.u32 %v1904, 2147483648
    %v1959 = vor.u32 1.1754944e-38, %v1958
    %v1960 = vsel %vm1957, %v1959, %v1955
    %v1961 = vmul.f32 %v1886, %v1918
    %v1962 = vmul.f32 %v1888, %v1932
    %v1963 = vmul.f32 %v1890, %v1946
    %v1964 = vmul.f32 %v1892, %v1960
    %v1965 = vsel %vm1851, %v1961, 0.0
    %v1966 = vsel %vm1851, %v1962, 0.0
    %v1967 = vsel %vm1851, %v1963, 0.0
    %v1968 = vsel %vm1851, %v1964, 0.0
    %v1969 = vld [vmem:[%s7] sm:$0xff]
    %v1970 = vld [vmem:[%s7 + $0x8] sm:$0xf]
    %v1973 = vperm.slane %v1969, 0
    %v1974 = vperm.slane %v1969, 4
    %v1975 = vperm.slane %v1970, 0
    %v1979 = vperm.slane %v1973, 0
    %v1980 = vperm.slane %v1974, 0
    %v1981 = vperm.slane %v1975, 0
    %v1983 = vsel %vm1868, %v1965, 0
    %1985 = vmatpush.msra.mxu0 0.0
    %1986 = vmatpush.msra.mxu0 0.0
    %1987 = vmatpush.msra.mxu0 0.0
    %1988 = vmatpush.msra.mxu0 0.0
    %1989 = vmatpush.msra.mxu0 0.0
    %1990 = vmatpush.msra.mxu0 0.0
    %1991 = vmatpush.msra.mxu0 0.0
    %1992 = vmatpush.msra.mxu0 0.0
    %1993 = vmatpush.msra.mxu0 0.0
    %1994 = vmatpush.msra.mxu0 0.0
    %1995 = vmatpush.msra.mxu0 0.0
    %1996 = vmatpush.msra.mxu0 0.0
    %1997 = vmatpush.msra.mxu0 0.0
    %1998 = vmatpush.msra.mxu0 0.0
    %1999 = vmatpush.msra.mxu0 0.0
    %2000 = vmatpush.msra.mxu0 %v313
    %2001 = vmatmul.f32.gmra.mxu0 %v1983
    %v2002 = vpop.f32.mrf.mxu0
    %v2003 = vadd.f32 %v1979, %v2002
    %2004 = vdwg.mxu0
    %2005 = vmatpush.msra.mxu0 0.0
    %2006 = vmatpush.msra.mxu0 0.0
    %2007 = vmatpush.msra.mxu0 0.0
    %2008 = vmatpush.msra.mxu0 0.0
    %2009 = vmatpush.msra.mxu0 0.0
    %2010 = vmatpush.msra.mxu0 0.0
    %2011 = vmatpush.msra.mxu0 0.0
    %2012 = vmatpush.msra.mxu0 0.0
    %2013 = vmatpush.msra.mxu0 0.0
    %2014 = vmatpush.msra.mxu0 0.0
    %2015 = vmatpush.msra.mxu0 0.0
    %2016 = vmatpush.msra.mxu0 0.0
    %2017 = vmatpush.msra.mxu0 0.0
    %2018 = vmatpush.msra.mxu0 0.0
    %2019 = vmatpush.msra.mxu0 0.0
    %2020 = vmatpush.msra.mxu0 %v373
    %2021 = vmatmul.f32.gmra.mxu0 %v1983
    %v2022 = vpop.f32.mrf.mxu0
    %v2023 = vadd.f32 %v1980, %v2022
    %2024 = vdwg.mxu0
    %2025 = vmatpush.msra.mxu0 0.0
    %2026 = vmatpush.msra.mxu0 0.0
    %2027 = vmatpush.msra.mxu0 0.0
    %2028 = vmatpush.msra.mxu0 0.0
    %2029 = vmatpush.msra.mxu0 0.0
    %2030 = vmatpush.msra.mxu0 0.0
    %2031 = vmatpush.msra.mxu0 0.0
    %2032 = vmatpush.msra.mxu0 0.0
    %2033 = vmatpush.msra.mxu0 0.0
    %2034 = vmatpush.msra.mxu0 0.0
    %2035 = vmatpush.msra.mxu0 0.0
    %2036 = vmatpush.msra.mxu0 0.0
    %2037 = vmatpush.msra.mxu0 0.0
    %2038 = vmatpush.msra.mxu0 0.0
    %2039 = vmatpush.msra.mxu0 0.0
    %2040 = vmatpush.msra.mxu0 %v433
    %2041 = vmatmul.f32.gmra.mxu0 %v1983
    %v2042 = vpop.f32.mrf.mxu0
    %v2043 = vadd.f32 %v1981, %v2042
    %2044 = vdwg.mxu0
    %v2045 = vperm.slane %v1969, 1
    %v2046 = vperm.slane %v1969, 5
    %v2047 = vperm.slane %v1970, 1
    %v2051 = vperm.slane %v2045, 1
    %v2052 = vperm.slane %v2046, 1
    %v2053 = vperm.slane %v2047, 1
    %v2055 = vsel %vm1868, %v1966, 0
    %2057 = vmatpush.msra.mxu0 0.0
    %2058 = vmatpush.msra.mxu0 0.0
    %2059 = vmatpush.msra.mxu0 0.0
    %2060 = vmatpush.msra.mxu0 0.0
    %2061 = vmatpush.msra.mxu0 0.0
    %2062 = vmatpush.msra.mxu0 0.0
    %2063 = vmatpush.msra.mxu0 0.0
    %2064 = vmatpush.msra.mxu0 0.0
    %2065 = vmatpush.msra.mxu0 0.0
    %2066 = vmatpush.msra.mxu0 0.0
    %2067 = vmatpush.msra.mxu0 0.0
    %2068 = vmatpush.msra.mxu0 0.0
    %2069 = vmatpush.msra.mxu0 0.0
    %2070 = vmatpush.msra.mxu0 0.0
    %2071 = vmatpush.msra.mxu0 0.0
    %2072 = vmatpush.msra.mxu0 %v693
    %2073 = vmatmul.f32.gmra.mxu0 %v2055
    %v2074 = vpop.f32.mrf.mxu0
    %v2075 = vadd.f32 %v2051, %v2074
    %2076 = vdwg.mxu0
    %2077 = vmatpush.msra.mxu0 0.0
    %2078 = vmatpush.msra.mxu0 0.0
    %2079 = vmatpush.msra.mxu0 0.0
    %2080 = vmatpush.msra.mxu0 0.0
    %2081 = vmatpush.msra.mxu0 0.0
    %2082 = vmatpush.msra.mxu0 0.0
    %2083 = vmatpush.msra.mxu0 0.0
    %2084 = vmatpush.msra.mxu0 0.0
    %2085 = vmatpush.msra.mxu0 0.0
    %2086 = vmatpush.msra.mxu0 0.0
    %2087 = vmatpush.msra.mxu0 0.0
    %2088 = vmatpush.msra.mxu0 0.0
    %2089 = vmatpush.msra.mxu0 0.0
    %2090 = vmatpush.msra.mxu0 0.0
    %2091 = vmatpush.msra.mxu0 0.0
    %2092 = vmatpush.msra.mxu0 %v753
    %2093 = vmatmul.f32.gmra.mxu0 %v2055
    %v2094 = vpop.f32.mrf.mxu0
    %v2095 = vadd.f32 %v2052, %v2094
    %2096 = vdwg.mxu0
    %2097 = vmatpush.msra.mxu0 0.0
    %2098 = vmatpush.msra.mxu0 0.0
    %2099 = vmatpush.msra.mxu0 0.0
    %2100 = vmatpush.msra.mxu0 0.0
    %2101 = vmatpush.msra.mxu0 0.0
    %2102 = vmatpush.msra.mxu0 0.0
    %2103 = vmatpush.msra.mxu0 0.0
    %2104 = vmatpush.msra.mxu0 0.0
    %2105 = vmatpush.msra.mxu0 0.0
    %2106 = vmatpush.msra.mxu0 0.0
    %2107 = vmatpush.msra.mxu0 0.0
    %2108 = vmatpush.msra.mxu0 0.0
    %2109 = vmatpush.msra.mxu0 0.0
    %2110 = vmatpush.msra.mxu0 0.0
    %2111 = vmatpush.msra.mxu0 0.0
    %2112 = vmatpush.msra.mxu0 %v813
    %2113 = vmatmul.f32.gmra.mxu0 %v2055
    %v2114 = vpop.f32.mrf.mxu0
    %v2115 = vadd.f32 %v2053, %v2114
    %2116 = vdwg.mxu0
    %v2117 = vperm.slane %v1969, 2
    %v2118 = vperm.slane %v1969, 6
    %v2119 = vperm.slane %v1970, 2
    %v2123 = vperm.slane %v2117, 2
    %v2124 = vperm.slane %v2118, 2
    %v2125 = vperm.slane %v2119, 2
    %v2127 = vsel %vm1868, %v1967, 0
    %2129 = vmatpush.msra.mxu0 0.0
    %2130 = vmatpush.msra.mxu0 0.0
    %2131 = vmatpush.msra.mxu0 0.0
    %2132 = vmatpush.msra.mxu0 0.0
    %2133 = vmatpush.msra.mxu0 0.0
    %2134 = vmatpush.msra.mxu0 0.0
    %2135 = vmatpush.msra.mxu0 0.0
    %2136 = vmatpush.msra.mxu0 0.0
    %2137 = vmatpush.msra.mxu0 0.0
    %2138 = vmatpush.msra.mxu0 0.0
    %2139 = vmatpush.msra.mxu0 0.0
    %2140 = vmatpush.msra.mxu0 0.0
    %2141 = vmatpush.msra.mxu0 0.0
    %2142 = vmatpush.msra.mxu0 0.0
    %2143 = vmatpush.msra.mxu0 0.0
    %2144 = vmatpush.msra.mxu0 %v1073
    %2145 = vmatmul.f32.gmra.mxu0 %v2127
    %v2146 = vpop.f32.mrf.mxu0
    %v2147 = vadd.f32 %v2123, %v2146
    %2148 = vdwg.mxu0
    %2149 = vmatpush.msra.mxu0 0.0
    %2150 = vmatpush.msra.mxu0 0.0
    %2151 = vmatpush.msra.mxu0 0.0
    %2152 = vmatpush.msra.mxu0 0.0
    %2153 = vmatpush.msra.mxu0 0.0
    %2154 = vmatpush.msra.mxu0 0.0
    %2155 = vmatpush.msra.mxu0 0.0
    %2156 = vmatpush.msra.mxu0 0.0
    %2157 = vmatpush.msra.mxu0 0.0
    %2158 = vmatpush.msra.mxu0 0.0
    %2159 = vmatpush.msra.mxu0 0.0
    %2160 = vmatpush.msra.mxu0 0.0
    %2161 = vmatpush.msra.mxu0 0.0
    %2162 = vmatpush.msra.mxu0 0.0
    %2163 = vmatpush.msra.mxu0 0.0
    %2164 = vmatpush.msra.mxu0 %v1133
    %2165 = vmatmul.f32.gmra.mxu0 %v2127
    %v2166 = vpop.f32.mrf.mxu0
    %v2167 = vadd.f32 %v2124, %v2166
    %2168 = vdwg.mxu0
    %2169 = vmatpush.msra.mxu0 0.0
    %2170 = vmatpush.msra.mxu0 0.0
    %2171 = vmatpush.msra.mxu0 0.0
    %2172 = vmatpush.msra.mxu0 0.0
    %2173 = vmatpush.msra.mxu0 0.0
    %2174 = vmatpush.msra.mxu0 0.0
    %2175 = vmatpush.msra.mxu0 0.0
    %2176 = vmatpush.msra.mxu0 0.0
    %2177 = vmatpush.msra.mxu0 0.0
    %2178 = vmatpush.msra.mxu0 0.0
    %2179 = vmatpush.msra.mxu0 0.0
    %2180 = vmatpush.msra.mxu0 0.0
    %2181 = vmatpush.msra.mxu0 0.0
    %2182 = vmatpush.msra.mxu0 0.0
    %2183 = vmatpush.msra.mxu0 0.0
    %2184 = vmatpush.msra.mxu0 %v1193
    %2185 = vmatmul.f32.gmra.mxu0 %v2127
    %v2186 = vpop.f32.mrf.mxu0
    %v2187 = vadd.f32 %v2125, %v2186
    %2188 = vdwg.mxu0
    %v2189 = vperm.slane %v1969, 3
    %v2190 = vperm.slane %v1969, 7
    %v2191 = vperm.slane %v1970, 3
    %v2195 = vperm.slane %v2189, 3
    %v2196 = vperm.slane %v2190, 3
    %v2197 = vperm.slane %v2191, 3
    %v2199 = vsel %vm1868, %v1968, 0
    %2201 = vmatpush.msra.mxu0 0.0
    %2202 = vmatpush.msra.mxu0 0.0
    %2203 = vmatpush.msra.mxu0 0.0
    %2204 = vmatpush.msra.mxu0 0.0
    %2205 = vmatpush.msra.mxu0 0.0
    %2206 = vmatpush.msra.mxu0 0.0
    %2207 = vmatpush.msra.mxu0 0.0
    %2208 = vmatpush.msra.mxu0 0.0
    %2209 = vmatpush.msra.mxu0 0.0
    %2210 = vmatpush.msra.mxu0 0.0
    %2211 = vmatpush.msra.mxu0 0.0
    %2212 = vmatpush.msra.mxu0 0.0
    %2213 = vmatpush.msra.mxu0 0.0
    %2214 = vmatpush.msra.mxu0 0.0
    %2215 = vmatpush.msra.mxu0 0.0
    %2216 = vmatpush.msra.mxu0 %v1453
    %2217 = vmatmul.f32.gmra.mxu0 %v2199
    %v2218 = vpop.f32.mrf.mxu0
    %v2219 = vadd.f32 %v2195, %v2218
    %2220 = vdwg.mxu0
    %2221 = vmatpush.msra.mxu0 0.0
    %2222 = vmatpush.msra.mxu0 0.0
    %2223 = vmatpush.msra.mxu0 0.0
    %2224 = vmatpush.msra.mxu0 0.0
    %2225 = vmatpush.msra.mxu0 0.0
    %2226 = vmatpush.msra.mxu0 0.0
    %2227 = vmatpush.msra.mxu0 0.0
    %2228 = vmatpush.msra.mxu0 0.0
    %2229 = vmatpush.msra.mxu0 0.0
    %2230 = vmatpush.msra.mxu0 0.0
    %2231 = vmatpush.msra.mxu0 0.0
    %2232 = vmatpush.msra.mxu0 0.0
    %2233 = vmatpush.msra.mxu0 0.0
    %2234 = vmatpush.msra.mxu0 0.0
    %2235 = vmatpush.msra.mxu0 0.0
    %2236 = vmatpush.msra.mxu0 %v1513
    %2237 = vmatmul.f32.gmra.mxu0 %v2199
    %v2238 = vpop.f32.mrf.mxu0
    %v2239 = vadd.f32 %v2196, %v2238
    %2240 = vdwg.mxu0
    %2241 = vmatpush.msra.mxu0 0.0
    %2242 = vmatpush.msra.mxu0 0.0
    %2243 = vmatpush.msra.mxu0 0.0
    %2244 = vmatpush.msra.mxu0 0.0
    %2245 = vmatpush.msra.mxu0 0.0
    %2246 = vmatpush.msra.mxu0 0.0
    %2247 = vmatpush.msra.mxu0 0.0
    %2248 = vmatpush.msra.mxu0 0.0
    %2249 = vmatpush.msra.mxu0 0.0
    %2250 = vmatpush.msra.mxu0 0.0
    %2251 = vmatpush.msra.mxu0 0.0
    %2252 = vmatpush.msra.mxu0 0.0
    %2253 = vmatpush.msra.mxu0 0.0
    %2254 = vmatpush.msra.mxu0 0.0
    %2255 = vmatpush.msra.mxu0 0.0
    %2256 = vmatpush.msra.mxu0 %v1573
    %2257 = vmatmul.f32.gmra.mxu0 %v2199
    %v2258 = vpop.f32.mrf.mxu0
    %v2259 = vadd.f32 %v2197, %v2258
    %2260 = vdwg.mxu0
    %v2261 = vsel %vm1868, %v50, 0.0
    %2262 = vadd.xlane.f32.xlu0 %v2261
    %v2263 = vpop.xlane.xlu0 %2262
    %v2265 = vsel %vm1868, %v50, 0
    %2267 = vmatpush.msra.mxu0 0.0
    %2268 = vmatpush.msra.mxu0 0.0
    %2269 = vmatpush.msra.mxu0 0.0
    %2270 = vmatpush.msra.mxu0 0.0
    %2271 = vmatpush.msra.mxu0 0.0
    %2272 = vmatpush.msra.mxu0 0.0
    %2273 = vmatpush.msra.mxu0 0.0
    %2274 = vmatpush.msra.mxu0 0.0
    %2275 = vmatpush.msra.mxu0 0.0
    %2276 = vmatpush.msra.mxu0 0.0
    %2277 = vmatpush.msra.mxu0 0.0
    %2278 = vmatpush.msra.mxu0 0.0
    %2279 = vmatpush.msra.mxu0 0.0
    %2280 = vmatpush.msra.mxu0 0.0
    %2281 = vmatpush.msra.mxu0 0.0
    %2282 = vmatpush.msra.mxu0 %v46
    %2283 = vmatmul.f32.gmra.mxu0 %v2265
    %v2284 = vpop.f32.mrf.mxu0
    %v2285 = vadd.f32 %v46, %v2284
    %2286 = vdwg.mxu0
    %2287 = vmatpush.msra.mxu0 0.0
    %2288 = vmatpush.msra.mxu0 0.0
    %2289 = vmatpush.msra.mxu0 0.0
    %2290 = vmatpush.msra.mxu0 0.0
    %2291 = vmatpush.msra.mxu0 0.0
    %2292 = vmatpush.msra.mxu0 0.0
    %2293 = vmatpush.msra.mxu0 0.0
    %2294 = vmatpush.msra.mxu0 0.0
    %2295 = vmatpush.msra.mxu0 0.0
    %2296 = vmatpush.msra.mxu0 0.0
    %2297 = vmatpush.msra.mxu0 0.0
    %2298 = vmatpush.msra.mxu0 0.0
    %2299 = vmatpush.msra.mxu0 0.0
    %2300 = vmatpush.msra.mxu0 0.0
    %2301 = vmatpush.msra.mxu0 0.0
    %2302 = vmatpush.msra.mxu0 %v47
    %2303 = vmatmul.f32.gmra.mxu0 %v2265
    %v2304 = vpop.f32.mrf.mxu0
    %v2305 = vadd.f32 %v47, %v2304
    %2306 = vdwg.mxu0
    %2307 = vmatpush.msra.mxu0 0.0
    %2308 = vmatpush.msra.mxu0 0.0
    %2309 = vmatpush.msra.mxu0 0.0
    %2310 = vmatpush.msra.mxu0 0.0
    %2311 = vmatpush.msra.mxu0 0.0
    %2312 = vmatpush.msra.mxu0 0.0
    %2313 = vmatpush.msra.mxu0 0.0
    %2314 = vmatpush.msra.mxu0 0.0
    %2315 = vmatpush.msra.mxu0 0.0
    %2316 = vmatpush.msra.mxu0 0.0
    %2317 = vmatpush.msra.mxu0 0.0
    %2318 = vmatpush.msra.mxu0 0.0
    %2319 = vmatpush.msra.mxu0 0.0
    %2320 = vmatpush.msra.mxu0 0.0
    %2321 = vmatpush.msra.mxu0 0.0
    %2322 = vmatpush.msra.mxu0 %v48
    %2323 = vmatmul.f32.gmra.mxu0 %v2265
    %v2324 = vpop.f32.mrf.mxu0
    %v2325 = vadd.f32 %v48, %v2324
    %2326 = vdwg.mxu0
    %v2327 = vadd.f32 %v2263, 1.0
    %v2328 = vrcp.pop %v2327
    %v2329 = vmul.f32 %v2327, %v2328
    %v2330 = vsub.f32 1.0, %v2329
    %v2331 = vmul.f32 %v2328, %v2330
    %v2332 = vadd.f32 %v2328, %v2331
    %vm2333 = vweird.f32 %v2327
    %vm2334 = vweird.f32 %v2328
    %vm2335 = vmor %vm2333, %vm2334
    %v2336 = vsel %vm2335, %v2328, %v2332
    %v2337 = vand.u32 2147483647, %v2327
    %vm2338 = vcmp.eq.f32.partialorder %v2337, 8.507059e+37
    %v2339 = vand.u32 %v2327, 2147483648
    %v2340 = vor.u32 1.1754944e-38, %v2339
    %v2341 = vsel %vm2338, %v2340, %v2336
    %v2342 = vmul.f32 %v2285, %v2341
    %v2343 = vmul.f32 %v2305, %v2341
    %v2344 = vmul.f32 %v2325, %v2341
    %v2345 = vld [vmem:[%s8] sm:$0xff]
    %v2346 = vld [vmem:[%s8 + $0x8] sm:$0xf]
    %v2347 = vld [vmem:[%s8 + $0xc] sm:$0xff]
    %v2348 = vld [vmem:[%s8 + $0x14] sm:$0xf]
    %v2349 = vld [vmem:[%s8 + $0x18] sm:$0xff]
    %v2350 = vld [vmem:[%s8 + $0x20] sm:$0xf]
    %v2351 = vld [vmem:[%s8 + $0x24] sm:$0xff]
    %v2352 = vld [vmem:[%s8 + $0x2c] sm:$0xf]
    %v2353 = vld [vmem:[%s8 + $0x30] sm:$0xff]
    %v2354 = vld [vmem:[%s8 + $0x38] sm:$0xf]
    %v2355 = vld [vmem:[%s8 + $0x3c] sm:$0xff]
    %v2356 = vld [vmem:[%s8 + $0x44] sm:$0xf]
    %v2357 = vld [vmem:[%s8 + $0x48] sm:$0xff]
    %v2358 = vld [vmem:[%s8 + $0x50] sm:$0xf]
    %v2359 = vld [vmem:[%s8 + $0x54] sm:$0xff]
    %v2360 = vld [vmem:[%s8 + $0x5c] sm:$0xf]
    %v2361 = vld [vmem:[%s8 + $0x60] sm:$0xff]
    %v2362 = vld [vmem:[%s8 + $0x68] sm:$0xf]
    %v2363 = vld [vmem:[%s8 + $0x6c] sm:$0xff]
    %v2364 = vld [vmem:[%s8 + $0x74] sm:$0xf]
    %v2365 = vld [vmem:[%s8 + $0x78] sm:$0xff]
    %v2366 = vld [vmem:[%s8 + $0x80] sm:$0xf]
    %v2367 = vld [vmem:[%s8 + $0x84] sm:$0xff]
    %v2368 = vld [vmem:[%s8 + $0x8c] sm:$0xf]
    %v2369 = vld [vmem:[%s8 + $0x90] sm:$0xff]
    %v2370 = vld [vmem:[%s8 + $0x98] sm:$0xf]
    %v2371 = vld [vmem:[%s8 + $0x9c] sm:$0xff]
    %v2372 = vld [vmem:[%s8 + $0xa4] sm:$0xf]
    %v2373 = vld [vmem:[%s8 + $0xa8] sm:$0xff]
    %v2374 = vld [vmem:[%s8 + $0xb0] sm:$0xf]
    %v2375 = vld [vmem:[%s8 + $0xb4] sm:$0xff]
    %v2376 = vld [vmem:[%s8 + $0xbc] sm:$0xf]
    %v2377 = vld [vmem:[%s8 + $0xc0] sm:$0xff]
    %v2378 = vld [vmem:[%s8 + $0xc8] sm:$0xf]
    %v2379 = vld [vmem:[%s8 + $0xcc] sm:$0xff]
    %v2380 = vld [vmem:[%s8 + $0xd4] sm:$0xf]
    %v2381 = vld [vmem:[%s8 + $0xd8] sm:$0xff]
    %v2382 = vld [vmem:[%s8 + $0xe0] sm:$0xf]
    %v2383 = vld [vmem:[%s8 + $0xe4] sm:$0xff]
    %v2384 = vld [vmem:[%s8 + $0xec] sm:$0xf]
    %v2385 = vld [vmem:[%s8 + $0xf0] sm:$0xff]
    %v2386 = vld [vmem:[%s8 + $0xf8] sm:$0xf]
    %v2387 = vld [vmem:[%s8 + $0xfc] sm:$0xff]
    %v2388 = vld [vmem:[%s8 + $0x104] sm:$0xf]
    %v2389 = vld [vmem:[%s8 + $0x108] sm:$0xff]
    %v2390 = vld [vmem:[%s8 + $0x110] sm:$0xf]
    %v2391 = vld [vmem:[%s8 + $0x114] sm:$0xff]
    %v2392 = vld [vmem:[%s8 + $0x11c] sm:$0xf]
    %v2393 = vld [vmem:[%s8 + $0x120] sm:$0xff]
    %v2394 = vld [vmem:[%s8 + $0x128] sm:$0xf]
    %v2395 = vld [vmem:[%s8 + $0x12c] sm:$0xff]
    %v2396 = vld [vmem:[%s8 + $0x134] sm:$0xf]
    %v2397 = vld [vmem:[%s8 + $0x138] sm:$0xff]
    %v2398 = vld [vmem:[%s8 + $0x140] sm:$0xf]
    %v2399 = vld [vmem:[%s8 + $0x144] sm:$0xff]
    %v2400 = vld [vmem:[%s8 + $0x14c] sm:$0xf]
    %v2401 = vld [vmem:[%s8 + $0x150] sm:$0xff]
    %v2402 = vld [vmem:[%s8 + $0x158] sm:$0xf]
    %v2403 = vld [vmem:[%s8 + $0x15c] sm:$0xff]
    %v2404 = vld [vmem:[%s8 + $0x164] sm:$0xf]
    %v2405 = vld [vmem:[%s8 + $0x168] sm:$0xff]
    %v2406 = vld [vmem:[%s8 + $0x170] sm:$0xf]
    %v2407 = vld [vmem:[%s8 + $0x174] sm:$0xff]
    %v2408 = vld [vmem:[%s8 + $0x17c] sm:$0xf]
    %v2409 = vld [vmem:[%s8 + $0x180] sm:$0xff]
    %v2410 = vld [vmem:[%s8 + $0x188] sm:$0xf]
    %v2411 = vld [vmem:[%s8 + $0x18c] sm:$0xff]
    %v2412 = vld [vmem:[%s8 + $0x194] sm:$0xf]
    %v2413 = vld [vmem:[%s8 + $0x198] sm:$0xff]
    %v2414 = vld [vmem:[%s8 + $0x1a0] sm:$0xf]
    %v2415 = vld [vmem:[%s8 + $0x1a4] sm:$0xff]
    %v2416 = vld [vmem:[%s8 + $0x1ac] sm:$0xf]
    %v2417 = vld [vmem:[%s8 + $0x1b0] sm:$0xff]
    %v2418 = vld [vmem:[%s8 + $0x1b8] sm:$0xf]
    %v2419 = vld [vmem:[%s8 + $0x1bc] sm:$0x33]
    %v2420 = vld [vmem:[%s8 + $0x1c4] sm:$0x3]
    %v2421 = vunpack.c.l.bf16 %v2345
    %v2422 = vunpack.c.h.bf16 %v2345
    %v2423 = vunpack.c.l.bf16 %v2346
    %v2424 = vunpack.c.l.bf16 %v2347
    %v2425 = vunpack.c.h.bf16 %v2347
    %v2426 = vunpack.c.l.bf16 %v2348
    %v2427 = vunpack.c.l.bf16 %v2349
    %v2428 = vunpack.c.h.bf16 %v2349
    %v2429 = vunpack.c.l.bf16 %v2350
    %v2430 = vunpack.c.l.bf16 %v2351
    %v2431 = vunpack.c.h.bf16 %v2351
    %v2432 = vunpack.c.l.bf16 %v2352
    %v2433 = vunpack.c.l.bf16 %v2353
    %v2434 = vunpack.c.h.bf16 %v2353
    %v2435 = vunpack.c.l.bf16 %v2354
    %v2436 = vunpack.c.l.bf16 %v2355
    %v2437 = vunpack.c.h.bf16 %v2355
    %v2438 = vunpack.c.l.bf16 %v2356
    %v2439 = vunpack.c.l.bf16 %v2357
    %v2440 = vunpack.c.h.bf16 %v2357
    %v2441 = vunpack.c.l.bf16 %v2358
    %v2442 = vunpack.c.l.bf16 %v2359
    %v2443 = vunpack.c.h.bf16 %v2359
    %v2444 = vunpack.c.l.bf16 %v2360
    %v2445 = vunpack.c.l.bf16 %v2361
    %v2446 = vunpack.c.h.bf16 %v2361
    %v2447 = vunpack.c.l.bf16 %v2362
    %v2448 = vunpack.c.l.bf16 %v2363
    %v2449 = vunpack.c.h.bf16 %v2363
    %v2450 = vunpack.c.l.bf16 %v2364
    %v2451 = vunpack.c.l.bf16 %v2365
    %v2452 = vunpack.c.h.bf16 %v2365
    %v2453 = vunpack.c.l.bf16 %v2366
    %v2454 = vunpack.c.l.bf16 %v2367
    %v2455 = vunpack.c.h.bf16 %v2367
    %v2456 = vunpack.c.l.bf16 %v2368
    %v2457 = vunpack.c.l.bf16 %v2369
    %v2458 = vunpack.c.h.bf16 %v2369
    %v2459 = vunpack.c.l.bf16 %v2370
    %v2460 = vunpack.c.l.bf16 %v2371
    %v2461 = vunpack.c.h.bf16 %v2371
    %v2462 = vunpack.c.l.bf16 %v2372
    %v2463 = vunpack.c.l.bf16 %v2373
    %v2464 = vunpack.c.h.bf16 %v2373
    %v2465 = vunpack.c.l.bf16 %v2374
    %v2466 = vunpack.c.l.bf16 %v2375
    %v2467 = vunpack.c.h.bf16 %v2375
    %v2468 = vunpack.c.l.bf16 %v2376
    %v2469 = vunpack.c.l.bf16 %v2377
    %v2470 = vunpack.c.h.bf16 %v2377
    %v2471 = vunpack.c.l.bf16 %v2378
    %v2472 = vunpack.c.l.bf16 %v2379
    %v2473 = vunpack.c.h.bf16 %v2379
    %v2474 = vunpack.c.l.bf16 %v2380
    %v2475 = vunpack.c.l.bf16 %v2381
    %v2476 = vunpack.c.h.bf16 %v2381
    %v2477 = vunpack.c.l.bf16 %v2382
    %v2478 = vunpack.c.l.bf16 %v2383
    %v2479 = vunpack.c.h.bf16 %v2383
    %v2480 = vunpack.c.l.bf16 %v2384
    %v2481 = vunpack.c.l.bf16 %v2385
    %v2482 = vunpack.c.h.bf16 %v2385
    %v2483 = vunpack.c.l.bf16 %v2386
    %v2484 = vunpack.c.l.bf16 %v2387
    %v2485 = vunpack.c.h.bf16 %v2387
    %v2486 = vunpack.c.l.bf16 %v2388
    %v2487 = vunpack.c.l.bf16 %v2389
    %v2488 = vunpack.c.h.bf16 %v2389
    %v2489 = vunpack.c.l.bf16 %v2390
    %v2490 = vunpack.c.l.bf16 %v2391
    %v2491 = vunpack.c.h.bf16 %v2391
    %v2492 = vunpack.c.l.bf16 %v2392
    %v2493 = vunpack.c.l.bf16 %v2393
    %v2494 = vunpack.c.h.bf16 %v2393
    %v2495 = vunpack.c.l.bf16 %v2394
    %v2496 = vunpack.c.l.bf16 %v2395
    %v2497 = vunpack.c.h.bf16 %v2395
    %v2498 = vunpack.c.l.bf16 %v2396
    %v2499 = vunpack.c.l.bf16 %v2397
    %v2500 = vunpack.c.h.bf16 %v2397
    %v2501 = vunpack.c.l.bf16 %v2398
    %v2502 = vunpack.c.l.bf16 %v2399
    %v2503 = vunpack.c.h.bf16 %v2399
    %v2504 = vunpack.c.l.bf16 %v2400
    %v2505 = vunpack.c.l.bf16 %v2401
    %v2506 = vunpack.c.h.bf16 %v2401
    %v2507 = vunpack.c.l.bf16 %v2402
    %v2508 = vunpack.c.l.bf16 %v2403
    %v2509 = vunpack.c.h.bf16 %v2403
    %v2510 = vunpack.c.l.bf16 %v2404
    %v2511 = vunpack.c.l.bf16 %v2405
    %v2512 = vunpack.c.h.bf16 %v2405
    %v2513 = vunpack.c.l.bf16 %v2406
    %v2514 = vunpack.c.l.bf16 %v2407
    %v2515 = vunpack.c.h.bf16 %v2407
    %v2516 = vunpack.c.l.bf16 %v2408
    %v2517 = vunpack.c.l.bf16 %v2409
    %v2518 = vunpack.c.h.bf16 %v2409
    %v2519 = vunpack.c.l.bf16 %v2410
    %v2520 = vunpack.c.l.bf16 %v2411
    %v2521 = vunpack.c.h.bf16 %v2411
    %v2522 = vunpack.c.l.bf16 %v2412
    %v2523 = vunpack.c.l.bf16 %v2413
    %v2524 = vunpack.c.h.bf16 %v2413
    %v2525 = vunpack.c.l.bf16 %v2414
    %v2526 = vunpack.c.l.bf16 %v2415
    %v2527 = vunpack.c.h.bf16 %v2415
    %v2528 = vunpack.c.l.bf16 %v2416
    %v2529 = vunpack.c.l.bf16 %v2417
    %v2530 = vunpack.c.h.bf16 %v2417
    %v2531 = vunpack.c.l.bf16 %v2418
    %v2532 = vunpack.c.l.bf16 %v2419
    %v2533 = vunpack.c.h.bf16 %v2419
    %v2534 = vunpack.c.l.bf16 %v2420
    %v2535 = vld [vmem:[%s9] sm:$0x7]
    %v2537 = vperm.slane %v2535, 0
    %v2538 = vperm.slane %v2535, 1
    %v2539 = vperm.slane %v2535, 2
    %v2544 = vsel %vm241, %v2344, 0
    %v2547 = vsel %vm245, %v2532, 0
    %v2550 = vsel %vm245, %v2533, 0
    %v2553 = vsel %vm245, %v2534, 0
    %2555 = vmatpush.msra.mxu0 %v2466
    %2556 = vmatpush.msra.mxu0 %v2463
    %2557 = vmatpush.msra.mxu0 %v2460
    %2558 = vmatpush.msra.mxu0 %v2457
    %2559 = vmatpush.msra.mxu0 %v2454
    %2560 = vmatpush.msra.mxu0 %v2451
    %2561 = vmatpush.msra.mxu0 %v2448
    %2562 = vmatpush.msra.mxu0 %v2445
    %2563 = vmatpush.msra.mxu0 %v2442
    %2564 = vmatpush.msra.mxu0 %v2439
    %2565 = vmatpush.msra.mxu0 %v2436
    %2566 = vmatpush.msra.mxu0 %v2433
    %2567 = vmatpush.msra.mxu0 %v2430
    %2568 = vmatpush.msra.mxu0 %v2427
    %2569 = vmatpush.msra.mxu0 %v2424
    %2570 = vmatpush.msra.mxu0 %v2421
    %2571 = vmatmul.f32.gmra.mxu0 %v2342
    %v2572 = vpop.f32.mrf.mxu0
    %v2573 = vadd.f32 %v2537, %v2572
    %2574 = vdwg.mxu0
    %2575 = vmatpush.msra.mxu0 %v2514
    %2576 = vmatpush.msra.mxu0 %v2511
    %2577 = vmatpush.msra.mxu0 %v2508
    %2578 = vmatpush.msra.mxu0 %v2505
    %2579 = vmatpush.msra.mxu0 %v2502
    %2580 = vmatpush.msra.mxu0 %v2499
    %2581 = vmatpush.msra.mxu0 %v2496
    %2582 = vmatpush.msra.mxu0 %v2493
    %2583 = vmatpush.msra.mxu0 %v2490
    %2584 = vmatpush.msra.mxu0 %v2487
    %2585 = vmatpush.msra.mxu0 %v2484
    %2586 = vmatpush.msra.mxu0 %v2481
    %2587 = vmatpush.msra.mxu0 %v2478
    %2588 = vmatpush.msra.mxu0 %v2475
    %2589 = vmatpush.msra.mxu0 %v2472
    %2590 = vmatpush.msra.mxu0 %v2469
    %2591 = vmatmul.f32.gmra.mxu0 %v2343
    %v2592 = vpop.f32.mrf.mxu0
    %v2593 = vadd.f32 %v2573, %v2592
    %2594 = vdwg.mxu0
    %2595 = vmatpush.msra.mxu0 0.0
    %2596 = vmatpush.msra.mxu0 0.0
    %2597 = vmatpush.msra.mxu0 0.0
    %2598 = vmatpush.msra.mxu0 0.0
    %2599 = vmatpush.msra.mxu0 0.0
    %2600 = vmatpush.msra.mxu0 0.0
    %2601 = vmatpush.msra.mxu0 0.0
    %2602 = vmatpush.msra.mxu0 0.0
    %2603 = vmatpush.msra.mxu0 0.0
    %2604 = vmatpush.msra.mxu0 0.0
    %2605 = vmatpush.msra.mxu0 %v2547
    %2606 = vmatpush.msra.mxu0 %v2529
    %2607 = vmatpush.msra.mxu0 %v2526
    %2608 = vmatpush.msra.mxu0 %v2523
    %2609 = vmatpush.msra.mxu0 %v2520
    %2610 = vmatpush.msra.mxu0 %v2517
    %2611 = vmatmul.f32.gmra.mxu0 %v2544
    %v2612 = vpop.f32.mrf.mxu0
    %v2613 = vadd.f32 %v2593, %v2612
    %2614 = vdwg.mxu0
    %2615 = vmatpush.msra.mxu0 %v2467
    %2616 = vmatpush.msra.mxu0 %v2464
    %2617 = vmatpush.msra.mxu0 %v2461
    %2618 = vmatpush.msra.mxu0 %v2458
    %2619 = vmatpush.msra.mxu0 %v2455
    %2620 = vmatpush.msra.mxu0 %v2452
    %2621 = vmatpush.msra.mxu0 %v2449
    %2622 = vmatpush.msra.mxu0 %v2446
    %2623 = vmatpush.msra.mxu0 %v2443
    %2624 = vmatpush.msra.mxu0 %v2440
    %2625 = vmatpush.msra.mxu0 %v2437
    %2626 = vmatpush.msra.mxu0 %v2434
    %2627 = vmatpush.msra.mxu0 %v2431
    %2628 = vmatpush.msra.mxu0 %v2428
    %2629 = vmatpush.msra.mxu0 %v2425
    %2630 = vmatpush.msra.mxu0 %v2422
    %2631 = vmatmul.f32.gmra.mxu0 %v2342
    %v2632 = vpop.f32.mrf.mxu0
    %v2633 = vadd.f32 %v2538, %v2632
    %2634 = vdwg.mxu0
    %2635 = vmatpush.msra.mxu0 %v2515
    %2636 = vmatpush.msra.mxu0 %v2512
    %2637 = vmatpush.msra.mxu0 %v2509
    %2638 = vmatpush.msra.mxu0 %v2506
    %2639 = vmatpush.msra.mxu0 %v2503
    %2640 = vmatpush.msra.mxu0 %v2500
    %2641 = vmatpush.msra.mxu0 %v2497
    %2642 = vmatpush.msra.mxu0 %v2494
    %2643 = vmatpush.msra.mxu0 %v2491
    %2644 = vmatpush.msra.mxu0 %v2488
    %2645 = vmatpush.msra.mxu0 %v2485
    %2646 = vmatpush.msra.mxu0 %v2482
    %2647 = vmatpush.msra.mxu0 %v2479
    %2648 = vmatpush.msra.mxu0 %v2476
    %2649 = vmatpush.msra.mxu0 %v2473
    %2650 = vmatpush.msra.mxu0 %v2470
    %2651 = vmatmul.f32.gmra.mxu0 %v2343
    %v2652 = vpop.f32.mrf.mxu0
    %v2653 = vadd.f32 %v2633, %v2652
    %2654 = vdwg.mxu0
    %2655 = vmatpush.msra.mxu0 0.0
    %2656 = vmatpush.msra.mxu0 0.0
    %2657 = vmatpush.msra.mxu0 0.0
    %2658 = vmatpush.msra.mxu0 0.0
    %2659 = vmatpush.msra.mxu0 0.0
    %2660 = vmatpush.msra.mxu0 0.0
    %2661 = vmatpush.msra.mxu0 0.0
    %2662 = vmatpush.msra.mxu0 0.0
    %2663 = vmatpush.msra.mxu0 0.0
    %2664 = vmatpush.msra.mxu0 0.0
    %2665 = vmatpush.msra.mxu0 %v2550
    %2666 = vmatpush.msra.mxu0 %v2530
    %2667 = vmatpush.msra.mxu0 %v2527
    %2668 = vmatpush.msra.mxu0 %v2524
    %2669 = vmatpush.msra.mxu0 %v2521
    %2670 = vmatpush.msra.mxu0 %v2518
    %2671 = vmatmul.f32.gmra.mxu0 %v2544
    %v2672 = vpop.f32.mrf.mxu0
    %v2673 = vadd.f32 %v2653, %v2672
    %2674 = vdwg.mxu0
    %2675 = vmatpush.msra.mxu0 %v2468
    %2676 = vmatpush.msra.mxu0 %v2465
    %2677 = vmatpush.msra.mxu0 %v2462
    %2678 = vmatpush.msra.mxu0 %v2459
    %2679 = vmatpush.msra.mxu0 %v2456
    %2680 = vmatpush.msra.mxu0 %v2453
    %2681 = vmatpush.msra.mxu0 %v2450
    %2682 = vmatpush.msra.mxu0 %v2447
    %2683 = vmatpush.msra.mxu0 %v2444
    %2684 = vmatpush.msra.mxu0 %v2441
    %2685 = vmatpush.msra.mxu0 %v2438
    %2686 = vmatpush.msra.mxu0 %v2435
    %2687 = vmatpush.msra.mxu0 %v2432
    %2688 = vmatpush.msra.mxu0 %v2429
    %2689 = vmatpush.msra.mxu0 %v2426
    %2690 = vmatpush.msra.mxu0 %v2423
    %2691 = vmatmul.f32.gmra.mxu0 %v2342
    %v2692 = vpop.f32.mrf.mxu0
    %v2693 = vadd.f32 %v2539, %v2692
    %2694 = vdwg.mxu0
    %2695 = vmatpush.msra.mxu0 %v2516
    %2696 = vmatpush.msra.mxu0 %v2513
    %2697 = vmatpush.msra.mxu0 %v2510
    %2698 = vmatpush.msra.mxu0 %v2507
    %2699 = vmatpush.msra.mxu0 %v2504
    %2700 = vmatpush.msra.mxu0 %v2501
    %2701 = vmatpush.msra.mxu0 %v2498
    %2702 = vmatpush.msra.mxu0 %v2495
    %2703 = vmatpush.msra.mxu0 %v2492
    %2704 = vmatpush.msra.mxu0 %v2489
    %2705 = vmatpush.msra.mxu0 %v2486
    %2706 = vmatpush.msra.mxu0 %v2483
    %2707 = vmatpush.msra.mxu0 %v2480
    %2708 = vmatpush.msra.mxu0 %v2477
    %2709 = vmatpush.msra.mxu0 %v2474
    %2710 = vmatpush.msra.mxu0 %v2471
    %2711 = vmatmul.f32.gmra.mxu0 %v2343
    %v2712 = vpop.f32.mrf.mxu0
    %v2713 = vadd.f32 %v2693, %v2712
    %2714 = vdwg.mxu0
    %2715 = vmatpush.msra.mxu0 0.0
    %2716 = vmatpush.msra.mxu0 0.0
    %2717 = vmatpush.msra.mxu0 0.0
    %2718 = vmatpush.msra.mxu0 0.0
    %2719 = vmatpush.msra.mxu0 0.0
    %2720 = vmatpush.msra.mxu0 0.0
    %2721 = vmatpush.msra.mxu0 0.0
    %2722 = vmatpush.msra.mxu0 0.0
    %2723 = vmatpush.msra.mxu0 0.0
    %2724 = vmatpush.msra.mxu0 0.0
    %2725 = vmatpush.msra.mxu0 %v2553
    %2726 = vmatpush.msra.mxu0 %v2531
    %2727 = vmatpush.msra.mxu0 %v2528
    %2728 = vmatpush.msra.mxu0 %v2525
    %2729 = vmatpush.msra.mxu0 %v2522
    %2730 = vmatpush.msra.mxu0 %v2519
    %2731 = vmatmul.f32.gmra.mxu0 %v2544
    %v2732 = vpop.f32.mrf.mxu0
    %v2733 = vadd.f32 %v2713, %v2732
    %2734 = vdwg.mxu0
    %s2735 = sld [smem:[#allocation2]]
    %v2736 = vld [vmem:[%s10] sm:$0xff]
    %v2737 = vld [vmem:[%s10 + $0x8] sm:$0xff]
    %v2738 = vld [vmem:[%s10 + $0x10] sm:$0xff]
    %v2739 = vld [vmem:[%s10 + $0x18] sm:$0xff]
    %v2740 = vld [vmem:[%s10 + $0x20] sm:$0xff]
    %v2741 = vld [vmem:[%s10 + $0x28] sm:$0xff]
    %v2742 = vld [vmem:[%s10 + $0x30] sm:$0xff]
    %v2743 = vld [vmem:[%s10 + $0x38] sm:$0xff]
    %v2744 = vld [vmem:[%s10 + $0x40] sm:$0xff]
    %v2745 = vld [vmem:[%s10 + $0x48] sm:$0xff]
    %v2746 = vld [vmem:[%s10 + $0x50] sm:$0xff]
    %v2747 = vld [vmem:[%s10 + $0x58] sm:$0xff]
    %v2748 = vld [vmem:[%s10 + $0x60] sm:$0xff]
    %v2749 = vld [vmem:[%s10 + $0x68] sm:$0xff]
    %v2750 = vld [vmem:[%s10 + $0x70] sm:$0xff]
    %v2751 = vld [vmem:[%s10 + $0x78] sm:$0xff]
    %v2752 = vld [vmem:[%s10 + $0x80] sm:$0xff]
    %v2753 = vld [vmem:[%s10 + $0x88] sm:$0xff]
    %v2754 = vld [vmem:[%s10 + $0x90] sm:$0xff]
    %v2755 = vld [vmem:[%s10 + $0x98] sm:$0xff]
    %v2756 = vld [vmem:[%s10 + $0xa0] sm:$0xff]
    %v2757 = vld [vmem:[%s10 + $0xa8] sm:$0xff]
    %v2758 = vld [vmem:[%s10 + $0xb0] sm:$0xff]
    %v2759 = vld [vmem:[%s10 + $0xb8] sm:$0xff]
    %v2760 = vld [vmem:[%s10 + $0xc0] sm:$0xff]
    %v2761 = vld [vmem:[%s10 + $0xc8] sm:$0xff]
    %v2762 = vld [vmem:[%s10 + $0xd0] sm:$0xff]
    %v2763 = vld [vmem:[%s10 + $0xd8] sm:$0xff]
    %v2764 = vld [vmem:[%s10 + $0xe0] sm:$0xff]
    %v2765 = vld [vmem:[%s10 + $0xe8] sm:$0xff]
    %v2766 = vld [vmem:[%s10 + $0xf0] sm:$0xff]
    %v2767 = vld [vmem:[%s10 + $0xf8] sm:$0xff]
    %v2768 = vld [vmem:[%s10 + $0x100] sm:$0xff]
    %v2769 = vld [vmem:[%s10 + $0x108] sm:$0xff]
    %v2770 = vld [vmem:[%s10 + $0x110] sm:$0xff]
    %v2771 = vld [vmem:[%s10 + $0x118] sm:$0xff]
    %v2772 = vld [vmem:[%s10 + $0x120] sm:$0xff]
    %v2773 = vld [vmem:[%s10 + $0x128] sm:$0xf]
    %v2774 = vstv %s2735
    %v2776 = vsel %vm241, %v2043, 0
    %v2779 = vsel %vm241, %v2115, 0
    %v2782 = vsel %vm241, %v2187, 0
    %v2785 = vsel %vm241, %v2259, 0
    %v2788 = vsel %vm241, %v2733, 0
    %v2791 = vsel %vm245, %v2773, 0
    %2793 = vmatpush.msra.mxu0 %v2751
    %2794 = vmatpush.msra.mxu0 %v2750
    %2795 = vmatpush.msra.mxu0 %v2749
    %2796 = vmatpush.msra.mxu0 %v2748
    %2797 = vmatpush.msra.mxu0 %v2747
    %2798 = vmatpush.msra.mxu0 %v2746
    %2799 = vmatpush.msra.mxu0 %v2745
    %2800 = vmatpush.msra.mxu0 %v2744
    %2801 = vmatpush.msra.mxu0 %v2743
    %2802 = vmatpush.msra.mxu0 %v2742
    %2803 = vmatpush.msra.mxu0 %v2741
    %2804 = vmatpush.msra.mxu0 %v2740
    %2805 = vmatpush.msra.mxu0 %v2739
    %2806 = vmatpush.msra.mxu0 %v2738
    %2807 = vmatpush.msra.mxu0 %v2737
    %2808 = vmatpush.msra.mxu0 %v2736
    %2809 = vmatmul.f32.gmra.mxu0 %v2003
    %v2810 = vpop.f32.mrf.mxu0
    %v2811 = vadd.f32 %v2774, %v2810
    %2812 = vmatmul.f32.gmra.mxu0 %v2075
    %v2813 = vpop.f32.mrf.mxu0
    %v2814 = vadd.f32 %v2774, %v2813
    %2815 = vmatmul.f32.gmra.mxu0 %v2147
    %v2816 = vpop.f32.mrf.mxu0
    %v2817 = vadd.f32 %v2774, %v2816
    %2818 = vmatmul.f32.gmra.mxu0 %v2219
    %v2819 = vpop.f32.mrf.mxu0
    %v2820 = vadd.f32 %v2774, %v2819
    %2821 = vmatmul.f32.gmra.mxu0 %v2613
    %v2822 = vpop.f32.mrf.mxu0
    %v2823 = vadd.f32 %v2774, %v2822
    %2824 = vdwg.mxu0
    %2825 = vmatpush.msra.mxu0 %v2767
    %2826 = vmatpush.msra.mxu0 %v2766
    %2827 = vmatpush.msra.mxu0 %v2765
    %2828 = vmatpush.msra.mxu0 %v2764
    %2829 = vmatpush.msra.mxu0 %v2763
    %2830 = vmatpush.msra.mxu0 %v2762
    %2831 = vmatpush.msra.mxu0 %v2761
    %2832 = vmatpush.msra.mxu0 %v2760
    %2833 = vmatpush.msra.mxu0 %v2759
    %2834 = vmatpush.msra.mxu0 %v2758
    %2835 = vmatpush.msra.mxu0 %v2757
    %2836 = vmatpush.msra.mxu0 %v2756
    %2837 = vmatpush.msra.mxu0 %v2755
    %2838 = vmatpush.msra.mxu0 %v2754
    %2839 = vmatpush.msra.mxu0 %v2753
    %2840 = vmatpush.msra.mxu0 %v2752
    %2841 = vmatmul.f32.gmra.mxu0 %v2023
    %v2842 = vpop.f32.mrf.mxu0
    %v2843 = vadd.f32 %v2811, %v2842
    %2844 = vmatmul.f32.gmra.mxu0 %v2095
    %v2845 = vpop.f32.mrf.mxu0
    %v2846 = vadd.f32 %v2814, %v2845
    %2847 = vmatmul.f32.gmra.mxu0 %v2167
    %v2848 = vpop.f32.mrf.mxu0
    %v2849 = vadd.f32 %v2817, %v2848
    %2850 = vmatmul.f32.gmra.mxu0 %v2239
    %v2851 = vpop.f32.mrf.mxu0
    %v2852 = vadd.f32 %v2820, %v2851
    %2853 = vmatmul.f32.gmra.mxu0 %v2673
    %v2854 = vpop.f32.mrf.mxu0
    %v2855 = vadd.f32 %v2823, %v2854
    %2856 = vdwg.mxu0
    %2857 = vmatpush.msra.mxu0 0.0
    %2858 = vmatpush.msra.mxu0 0.0
    %2859 = vmatpush.msra.mxu0 0.0
    %2860 = vmatpush.msra.mxu0 0.0
    %2861 = vmatpush.msra.mxu0 0.0
    %2862 = vmatpush.msra.mxu0 0.0
    %2863 = vmatpush.msra.mxu0 0.0
    %2864 = vmatpush.msra.mxu0 0.0
    %2865 = vmatpush.msra.mxu0 0.0
    %2866 = vmatpush.msra.mxu0 0.0
    %2867 = vmatpush.msra.mxu0 %v2791
    %2868 = vmatpush.msra.mxu0 %v2772
    %2869 = vmatpush.msra.mxu0 %v2771
    %2870 = vmatpush.msra.mxu0 %v2770
    %2871 = vmatpush.msra.mxu0 %v2769
    %2872 = vmatpush.msra.mxu0 %v2768
    %2873 = vmatmul.f32.gmra.mxu0 %v2776
    %v2874 = vpop.f32.mrf.mxu0
    %v2875 = vadd.f32 %v2843, %v2874
    %2876 = vmatmul.f32.gmra.mxu0 %v2779
    %v2877 = vpop.f32.mrf.mxu0
    %v2878 = vadd.f32 %v2846, %v2877
    %2879 = vmatmul.f32.gmra.mxu0 %v2782
    %v2880 = vpop.f32.mrf.mxu0
    %v2881 = vadd.f32 %v2849, %v2880
    %2882 = vmatmul.f32.gmra.mxu0 %v2785
    %v2883 = vpop.f32.mrf.mxu0
    %v2884 = vadd.f32 %v2852, %v2883
    %2885 = vmatmul.f32.gmra.mxu0 %v2788
    %v2886 = vpop.f32.mrf.mxu0
    %v2887 = vadd.f32 %v2855, %v2886
    %2888 = vdwg.mxu0
    %v2889 = vxor.u32 %v2875, 2147483648
    %v2890 = vxor.u32 %v2878, 2147483648
    %v2891 = vxor.u32 %v2881, 2147483648
    %v2892 = vxor.u32 %v2884, 2147483648
    %v2893 = vxor.u32 %v2887, 2147483648
    %v2894 = vmul.f32 %v2889, 1.442695
    %v2895 = vpow.pop %v2894
    %v2896 = vmul.f32 %v2890, 1.442695
    %v2897 = vpow.pop %v2896
    %v2898 = vmul.f32 %v2891, 1.442695
    %v2899 = vpow.pop %v2898
    %v2900 = vmul.f32 %v2892, 1.442695
    %v2901 = vpow.pop %v2900
    %v2902 = vmul.f32 %v2893, 1.442695
    %v2903 = vpow.pop %v2902
    %v2904 = vadd.f32 %v2895, 1.0
    %v2905 = vadd.f32 %v2897, 1.0
    %v2906 = vadd.f32 %v2899, 1.0
    %v2907 = vadd.f32 %v2901, 1.0
    %v2908 = vadd.f32 %v2903, 1.0
    %v2909 = vrcp.pop %v2904
    %v2910 = vmul.f32 %v2904, %v2909
    %v2911 = vsub.f32 1.0, %v2910
    %v2912 = vmul.f32 %v2909, %v2911
    %v2913 = vadd.f32 %v2909, %v2912
    %vm2914 = vweird.f32 %v2904
    %vm2915 = vweird.f32 %v2909
    %vm2916 = vmor %vm2914, %vm2915
    %v2917 = vsel %vm2916, %v2909, %v2913
    %v2918 = vand.u32 2147483647, %v2904
    %vm2919 = vcmp.eq.f32.partialorder %v2918, 8.507059e+37
    %v2920 = vand.u32 %v2904, 2147483648
    %v2921 = vor.u32 1.1754944e-38, %v2920
    %v2922 = vsel %vm2919, %v2921, %v2917
    %v2923 = vmul.f32 1.0, %v2922
    %v2924 = vrcp.pop %v2905
    %v2925 = vmul.f32 %v2905, %v2924
    %v2926 = vsub.f32 1.0, %v2925
    %v2927 = vmul.f32 %v2924, %v2926
    %v2928 = vadd.f32 %v2924, %v2927
    %vm2929 = vweird.f32 %v2905
    %vm2930 = vweird.f32 %v2924
    %vm2931 = vmor %vm2929, %vm2930
    %v2932 = vsel %vm2931, %v2924, %v2928
    %v2933 = vand.u32 2147483647, %v2905
    %vm2934 = vcmp.eq.f32.partialorder %v2933, 8.507059e+37
    %v2935 = vand.u32 %v2905, 2147483648
    %v2936 = vor.u32 1.1754944e-38, %v2935
    %v2937 = vsel %vm2934, %v2936, %v2932
    %v2938 = vmul.f32 1.0, %v2937
    %v2939 = vrcp.pop %v2906
    %v2940 = vmul.f32 %v2906, %v2939
    %v2941 = vsub.f32 1.0, %v2940
    %v2942 = vmul.f32 %v2939, %v2941
    %v2943 = vadd.f32 %v2939, %v2942
    %vm2944 = vweird.f32 %v2906
    %vm2945 = vweird.f32 %v2939
    %vm2946 = vmor %vm2944, %vm2945
    %v2947 = vsel %vm2946, %v2939, %v2943
    %v2948 = vand.u32 2147483647, %v2906
    %vm2949 = vcmp.eq.f32.partialorder %v2948, 8.507059e+37
    %v2950 = vand.u32 %v2906, 2147483648
    %v2951 = vor.u32 1.1754944e-38, %v2950
    %v2952 = vsel %vm2949, %v2951, %v2947
    %v2953 = vmul.f32 1.0, %v2952
    %v2954 = vrcp.pop %v2907
    %v2955 = vmul.f32 %v2907, %v2954
    %v2956 = vsub.f32 1.0, %v2955
    %v2957 = vmul.f32 %v2954, %v2956
    %v2958 = vadd.f32 %v2954, %v2957
    %vm2959 = vweird.f32 %v2907
    %vm2960 = vweird.f32 %v2954
    %vm2961 = vmor %vm2959, %vm2960
    %v2962 = vsel %vm2961, %v2954, %v2958
    %v2963 = vand.u32 2147483647, %v2907
    %vm2964 = vcmp.eq.f32.partialorder %v2963, 8.507059e+37
    %v2965 = vand.u32 %v2907, 2147483648
    %v2966 = vor.u32 1.1754944e-38, %v2965
    %v2967 = vsel %vm2964, %v2966, %v2962
    %v2968 = vmul.f32 1.0, %v2967
    %v2969 = vrcp.pop %v2908
    %v2970 = vmul.f32 %v2908, %v2969
    %v2971 = vsub.f32 1.0, %v2970
    %v2972 = vmul.f32 %v2969, %v2971
    %v2973 = vadd.f32 %v2969, %v2972
    %vm2974 = vweird.f32 %v2908
    %vm2975 = vweird.f32 %v2969
    %vm2976 = vmor %vm2974, %vm2975
    %v2977 = vsel %vm2976, %v2969, %v2973
    %v2978 = vand.u32 2147483647, %v2908
    %vm2979 = vcmp.eq.f32.partialorder %v2978, 8.507059e+37
    %v2980 = vand.u32 %v2908, 2147483648
    %v2981 = vor.u32 1.1754944e-38, %v2980
    %v2982 = vsel %vm2979, %v2981, %v2977
    %v2983 = vmul.f32 1.0, %v2982
    %2985 = vset.pattern.permute.xlu0 0
    %2986 = vperm.xlu0 %2985, %v2923
    %v2987 = vpop.permute.xlu0 %2986
    %2990 = vset.pattern.permute.xlu0 0
    %2991 = vperm.xlu0 %2990, %v2938
    %v2992 = vpop.permute.xlu0 %2991
    %2995 = vset.pattern.permute.xlu0 0
    %2996 = vperm.xlu0 %2995, %v2953
    %v2997 = vpop.permute.xlu0 %2996
    %3000 = vset.pattern.permute.xlu0 0
    %3001 = vperm.xlu0 %3000, %v2968
    %v3002 = vpop.permute.xlu0 %3001
    %3005 = vset.pattern.permute.xlu0 0
    %3006 = vperm.xlu0 %3005, %v2983
    %v3007 = vpop.permute.xlu0 %3006
    %v3009 = vmul.f32 %v2003, %v2987
    %v3010 = vmul.f32 %v2023, %v2987
    %v3011 = vmul.f32 %v2043, %v2987
    %v3012 = vmul.f32 %v2075, %v2992
    %v3013 = vmul.f32 %v2095, %v2992
    %v3014 = vmul.f32 %v2115, %v2992
    %v3015 = vmul.f32 %v2147, %v2997
    %v3016 = vmul.f32 %v2167, %v2997
    %v3017 = vmul.f32 %v2187, %v2997
    %v3018 = vmul.f32 %v2219, %v3002
    %v3019 = vmul.f32 %v2239, %v3002
    %v3020 = vmul.f32 %v2259, %v3002
    %v3021 = vmul.f32 %v2613, %v3007
    %v3022 = vmul.f32 %v2673, %v3007
    %v3023 = vmul.f32 %v2733, %v3007
    %v3024 = vadd.f32 %v3009, %v3012
    %v3025 = vadd.f32 %v3010, %v3013
    %v3026 = vadd.f32 %v3011, %v3014
    %v3027 = vadd.f32 %v3024, %v3015
    %v3028 = vadd.f32 %v3025, %v3016
    %v3029 = vadd.f32 %v3026, %v3017
    %v3030 = vadd.f32 %v3027, %v3018
    %v3031 = vadd.f32 %v3028, %v3019
    %v3032 = vadd.f32 %v3029, %v3020
    %v3033 = vadd.f32 %v3030, %v3021
    %v3034 = vadd.f32 %v3031, %v3022
    %v3035 = vadd.f32 %v3032, %v3023
    %v3036 = vadd.f32 %v43, %v3033
    %v3037 = vadd.f32 %v44, %v3034
    %v3038 = vadd.f32 %v45, %v3035
    %3039 = vst [vmem:[#allocation3] sm:$0xff] %v3036
    %3040 = vst [vmem:[#allocation3 + $0x8] sm:$0xff] %v3037
    %3041 = vst.msk [vmem:[#allocation3 + $0x10] sm:$0xff] %vm241, %v3038
    // Predicated region
    $region50: #{tpu_custom_call.1} parent=1 // pred_check
      _
    $region51: #{tpu_custom_call.1} parent=1 // pred_check_branch
      %3043 = sbr.rel (0) target = $region53
    $region52: #{tpu_custom_call.1} parent=1 // pred_region
      %3045 = vsyncadd [#allocation4], 0
      %s3047 = sshll.u32 [#allocation3], 4
      %s3048 = int_to_ptr.vmem [resolvable:$true] %s3047
      %s3049 = sshll.u32 %s12, 4
      %s3050 = int_to_ptr.hbm [resolvable:$true] %s3049
      %3052 = dma.vmem_to_hbm [thread:$0]  %s3048, 384, %s3050, [#allocation4]
    $region53: #{tpu_custom_call.1} parent=1 // pred_fallthru
      _
    // Predicated region
    $region54: #{tpu_custom_call.1} parent=1 // pred_check
      _
    $region55: #{tpu_custom_call.1} parent=1 // pred_check_branch
      %3054 = sbr.rel (0) target = $region57
    $region56: #{tpu_custom_call.1} parent=1 // pred_region
      %3056 = dma.done [#allocation4], 384
    $region57: #{tpu_custom_call.1} parent=1 // pred_fallthru
      _
    %3057 = vsyncpa [#allocation4], 1

</llo_original>
